<compile_context>
chip_gen: v6e
topology: v6e:2x2x1
jax: 0.10.0
libtpu: 0.0.40
codegen_flags: <defaults>
</compile_context>

<pallas_src>
import jax
import jax.numpy as jnp
from jax import lax
from jax.experimental import pallas as pl
from jax.experimental.pallas import tpu as pltpu

NEG_SLOPE = 0.01   # torch.nn.LeakyReLU default negative_slope
BN_EPS = 1e-5      # torch.nn.BatchNorm2d default eps


def resblock_kernel(x_ref, xt_ref, xb_ref, w1_ref, w2_ref, bn_ref, o_ref, pad_ref):
    """One (batch, row-block) tile of the fused ResBlock.

    x_ref : (1, TH, W, C)  f32    current row-block of x
    xt_ref: (1, 2,  W, C)  f32    2 rows above the block (index clamped at h == 0)
    xb_ref: (1, 2,  W, C)  f32    2 rows below the block (index clamped at h == last)
    w*_ref: (3, 3*C, C)    bf16   conv weights: one (kx, cin)-flattened slab per ky
    bn_ref: (4, C)         f32    rows = [scale1, bias1, scale2, bias2] (folded BN)
    o_ref : (1, TH, W, C)  f32    output row-block
    pad_ref: (TH+4, Wp, C) bf16   zero-padded scratch, reused for both convs
    """
    _, TH, W, C = x_ref.shape
    cdt = pad_ref.dtype
    h = pl.program_id(1)
    n_h = pl.num_programs(1)

    def conv3x3(rows, w_ref):
        # 3 accumulated MXU matmuls (K = 3*C), one per ky row offset; only the
        # 3 kx shifts are lane-concatenated (3x less copy traffic than 9-way
        # im2col, and the operands are bf16 so copies are half-width).
        acc = None
        for dy in range(3):
            cols = [pad_ref[dy:dy + rows, dx:dx + W, :].reshape(rows * W, C)
                    for dx in range(3)]
            patch = jnp.concatenate(cols, axis=-1)                 # (rows*W, 3C)
            part = jnp.dot(patch, w_ref[dy],
                           preferred_element_type=jnp.float32)    # f32 accumulate
            acc = part if acc is None else acc + part
        return acc

    def bn_lrelu(v, scale, bias):
        v = v * scale + bias
        return jnp.where(v >= 0, v, NEG_SLOPE * v)

    # ---- assemble the zero-padded x tile (2-row halo for the stacked convs) ----
    zero_col = jnp.zeros((TH + 4, 1, C), cdt)
    pad_ref[:, 0:1, :] = zero_col              # left zero column (ring only)
    pad_ref[:, W + 1:W + 2, :] = zero_col      # right zero column
    pad_ref[2:TH + 2, 1:W + 1, :] = x_ref[0].astype(cdt)

    # Halo rows: interior blocks copy 2 rows; edge blocks zero them (pl.when,
    # so interior steps pay no masking work at all).
    @pl.when(h == 0)
    def _():
        pad_ref[0:2, 1:W + 1, :] = jnp.zeros((2, W, C), cdt)

    @pl.when(h != 0)
    def _():
        pad_ref[0:2, 1:W + 1, :] = xt_ref[0].astype(cdt)

    @pl.when(h == n_h - 1)
    def _():
        pad_ref[TH + 2:TH + 4, 1:W + 1, :] = jnp.zeros((2, W, C), cdt)

    @pl.when(h != n_h - 1)
    def _():
        pad_ref[TH + 2:TH + 4, 1:W + 1, :] = xb_ref[0].astype(cdt)

    # ---- conv1 + BN1 + LeakyReLU: TH+2 rows of y (1-row halo for conv2) ----
    y = bn_lrelu(conv3x3(TH + 2, w1_ref), bn_ref[0], bn_ref[1])
    # Reuse the same padded scratch as conv2's input (zero ring stays intact;
    # conv2 never reads the stale rows TH+2..TH+3).
    pad_ref[0:TH + 2, 1:W + 1, :] = y.reshape(TH + 2, W, C).astype(cdt)

    # y rows falling outside the image must act as conv2's zero padding; only
    # the first / last grid block has such a row.
    @pl.when(h == 0)
    def _():
        pad_ref[0:1, 1:W + 1, :] = jnp.zeros((1, W, C), cdt)

    @pl.when(h == n_h - 1)
    def _():
        pad_ref[TH + 1:TH + 2, 1:W + 1, :] = jnp.zeros((1, W, C), cdt)

    # ---- conv2 + BN2 + LeakyReLU + residual add (f32 epilogue) ----
    z = bn_lrelu(conv3x3(TH, w2_ref), bn_ref[2], bn_ref[3]).reshape(TH, W, C)
    o_ref[0] = (x_ref[0] + z).astype(o_ref.dtype)


def fold_bn(gamma, beta, mean, var, eps=BN_EPS):
    scale = gamma / jnp.sqrt(var + eps)
    bias = beta - mean * scale
    return scale.astype(jnp.float32), bias.astype(jnp.float32)


def _pick_row_block(H, block_h):
    """Largest even divisor of H that is <= block_h; avoid tiny-block cliffs."""
    best = None
    for t in range(min(block_h, H), 1, -1):
        if H % t == 0 and t % 2 == 0:
            best = t
            break
    if best is None or best < 4:
        if H % 2 == 0 and H <= 4 * block_h:
            best = H            # single full-height block beats a 2-row block
        else:
            raise ValueError(f"unsupported image height H={H} for this kernel")
    return best


def _vmem_limit_bytes():
    """~7/8 of reported VMEM, capped at 112 MiB (fallback 48 MiB)."""
    cap = None
    try:
        info = pltpu.get_tpu_info()
        cap = int(getattr(info, "vmem_capacity_bytes", 0) or 0)
    except Exception:
        cap = None
    if not cap:
        return 48 * 1024 * 1024
    return int(min(max(cap * 7 // 8, 32 * 1024 * 1024), 112 * 1024 * 1024))


def resblock_forward(x_nchw, w1_oihw, w2_oihw, bn1, bn2, *, block_h=64,
                     mxu_dtype=jnp.bfloat16):
    """Fused Pallas ResBlock. x_nchw: (N,Cin,H,W); weights OIHW; bn* = (gamma,beta,mean,var)."""
    N, Cin, H, W = x_nchw.shape
    Cout = w1_oihw.shape[0]
    assert Cin == Cout, "ResBlock residual add requires in_channels == out_channels"
    C = Cout

    th = _pick_row_block(H, block_h)
    n_h = H // th
    half = th // 2        # halo BlockSpecs tile H in 2-row blocks
    hb = H // 2 - 1       # clamp bound (in 2-row blocks)

    # ---- boundary layout conversion / one-time weight prepack (bf16) ----
    x = jnp.transpose(x_nchw, (0, 2, 3, 1)).astype(jnp.float32)                          # NHWC
    w1 = jnp.transpose(w1_oihw, (2, 3, 1, 0)).reshape(3, 3 * C, C).astype(mxu_dtype)     # (ky, kx*cin, cout)
    w2 = jnp.transpose(w2_oihw, (2, 3, 1, 0)).reshape(3, 3 * C, C).astype(mxu_dtype)
    s1, b1 = fold_bn(*bn1)
    s2, b2 = fold_bn(*bn2)
    bn = jnp.stack([s1, b1, s2, b2], axis=0)                                              # (4, C) f32

    # padded-scratch sublane width rounded up so kx-shifted slices stay tile friendly
    wp = -(-(W + 2) // 16) * 16

    w_bytes = 2 * 9 * C * C * jnp.dtype(mxu_dtype).itemsize
    flops = 2 * (2 * 9 * N * H * W * C * C)                    # two 3x3 convs
    bytes_accessed = 4 * 2 * N * H * W * C + w_bytes + 4 * 4 * C

    out_nhwc = pl.pallas_call(
        resblock_kernel,
        out_shape=jax.ShapeDtypeStruct((N, H, W, C), jnp.float32),
        grid=(N, n_h),
        in_specs=[
            pl.BlockSpec((1, th, W, C), lambda n, h: (n, h, 0, 0)),
            pl.BlockSpec((1, 2, W, C),
                         lambda n, h: (n, jnp.maximum(h * half - 1, 0), 0, 0)),
            pl.BlockSpec((1, 2, W, C),
                         lambda n, h: (n, jnp.minimum((h + 1) * half, hb), 0, 0)),
            pl.BlockSpec((3, 3 * C, C), lambda n, h: (0, 0, 0)),   # resident (constant map)
            pl.BlockSpec((3, 3 * C, C), lambda n, h: (0, 0, 0)),
            pl.BlockSpec((4, C), lambda n, h: (0, 0)),
        ],
        out_specs=pl.BlockSpec((1, th, W, C), lambda n, h: (n, h, 0, 0)),
        scratch_shapes=[pltpu.VMEM((th + 4, wp, C), mxu_dtype)],
        compiler_params=pltpu.CompilerParams(
            dimension_semantics=("parallel", "parallel"),
            vmem_limit_bytes=_vmem_limit_bytes()),
        cost_estimate=pl.CostEstimate(flops=flops, transcendentals=0,
                                      bytes_accessed=bytes_accessed),
    )(x, x, x, w1, w2, bn)

    return jnp.transpose(out_nhwc, (0, 3, 1, 2))   # back to NCHW


def resblock_reference(x, w1, w2, bn1, bn2):
    """Pure-JAX reference (NCHW), matching torch eval-mode semantics."""
    def conv(v, w):
        return lax.conv_general_dilated(
            v, w, window_strides=(1, 1), padding=((1, 1), (1, 1)),
            dimension_numbers=('NCHW', 'OIHW', 'NCHW'),
            precision=lax.Precision.HIGHEST)

    def bn(v, params):
        g, b, m, s2 = (p[None, :, None, None] for p in params)
        return (v - m) / jnp.sqrt(s2 + BN_EPS) * g + b

    def lrelu(v):
        return jnp.where(v >= 0, v, NEG_SLOPE * v)

    y = lrelu(bn(conv(x, w1), bn1))
    y = lrelu(bn(conv(y, w2), bn2))
    return x + y


if __name__ == "__main__":
    key = jax.random.PRNGKey(0)
    keys = jax.random.split(key, 10)

    N, C, H, W = 2, 4, 16, 16   # residual add requires in_channels == out_channels

    x = jax.random.normal(keys[0], (N, C, H, W), jnp.float32)
    w1 = jax.random.normal(keys[1], (C, C, 3, 3), jnp.float32) * 0.2
    w2 = jax.random.normal(keys[2], (C, C, 3, 3), jnp.float32) * 0.2

    bn1 = (jax.random.uniform(keys[3], (C,), minval=0.5, maxval=1.5),   # gamma
           jax.random.normal(keys[4], (C,)) * 0.1,                      # beta
           jax.random.normal(keys[5], (C,)) * 0.1,                      # running_mean
           jax.random.uniform(keys[6], (C,), minval=0.5, maxval=1.5))   # running_var
    bn2 = (jax.random.uniform(keys[7], (C,), minval=0.5, maxval=1.5),
           jax.random.normal(keys[8], (C,)) * 0.1,
           jax.random.normal(keys[9], (C,)) * 0.1,
           jax.random.uniform(keys[0], (C,), minval=0.5, maxval=1.5))

    ref = resblock_reference(x, w1, w2, bn1, bn2)

    # Default bf16-MXU path, forced multi-row-block grid (exercises halo logic).
    out = resblock_forward(x, w1, w2, bn1, bn2, block_h=8)   # H=16, TH=8 -> 2 row-blocks
    out = jax.block_until_ready(out)
    assert out.shape == ref.shape == (N, C, H, W)
    # bf16 MXU operands (f32 accumulate) loosen tolerance vs torch fp32.
    assert jnp.allclose(out, ref, atol=5e-2, rtol=5e-2), "bf16 path mismatch vs reference"

    # Exact-f32 MXU path, single full-height row block.
    out32 = resblock_forward(x, w1, w2, bn1, bn2, mxu_dtype=jnp.float32)
    out32 = jax.block_until_ready(out32)
    assert jnp.allclose(out32, ref, atol=1e-4, rtol=1e-4), "f32 path mismatch vs reference"

    print("KERNEL_OK")
</pallas_src>

<mosaic_0001>
module attributes {stable_mosaic.version = 11 : i64} {
  func.func @resblock_kernel(%arg0: i32, %arg1: i32, %arg2: memref<1x8x16x4xf32, #tpu.memory_space<vmem>>, %arg3: memref<1x2x16x4xf32, #tpu.memory_space<vmem>>, %arg4: memref<1x2x16x4xf32, #tpu.memory_space<vmem>>, %arg5: memref<3x12x4xbf16, #tpu.memory_space<vmem>>, %arg6: memref<3x12x4xbf16, #tpu.memory_space<vmem>>, %arg7: memref<4x4xf32, #tpu.memory_space<vmem>>, %arg8: memref<1x8x16x4xf32, #tpu.memory_space<vmem>>, %arg9: memref<12x32x4xbf16, #tpu.memory_space<vmem>>) attributes {dimension_semantics = [#tpu.dimension_semantics<parallel>, #tpu.dimension_semantics<parallel>], iteration_bounds = array<i64: 2, 2>, scalar_prefetch = 0 : i64, scratch_operands = 1 : i64, tpu.core_type = #tpu.core_type<tc>, window_params = [{transform_indices = @transform_0, window_bounds = array<i64: 1, 8, 16, 4>}, {transform_indices = @transform_1, window_bounds = array<i64: 1, 2, 16, 4>}, {transform_indices = @transform_2, window_bounds = array<i64: 1, 2, 16, 4>}, {pipeline_mode = #tpu.pipeline_mode<synchronous>, transform_indices = @transform_3, window_bounds = array<i64: 3, 12, 4>}, {pipeline_mode = #tpu.pipeline_mode<synchronous>, transform_indices = @transform_4, window_bounds = array<i64: 3, 12, 4>}, {pipeline_mode = #tpu.pipeline_mode<synchronous>, transform_indices = @transform_5, window_bounds = array<i64: 4, 4>}, {transform_indices = @transform_6, window_bounds = array<i64: 1, 8, 16, 4>}]} {
    %cst = arith.constant 0.000000e+00 : bf16
    %0 = vector.broadcast %cst : bf16 to vector<12x1x4xbf16>
    %c0 = arith.constant 0 : index
    %c0_0 = arith.constant 0 : index
    %c0_1 = arith.constant 0 : index
    %1 = vector.load %arg9[%c0, %c0_0, %c0_1] : memref<12x32x4xbf16, #tpu.memory_space<vmem>>, vector<12x1x4xbf16>
    tpu.vector_store %arg9[%c0, %c0_0, %c0_1], %0 {strides = array<i32>} : memref<12x32x4xbf16, #tpu.memory_space<vmem>>, vector<12x1x4xbf16>,
    %c0_2 = arith.constant 0 : index
    %c17 = arith.constant 17 : index
    %c0_3 = arith.constant 0 : index
    %2 = vector.load %arg9[%c0_2, %c17, %c0_3] : memref<12x32x4xbf16, #tpu.memory_space<vmem>>, vector<12x1x4xbf16>
    tpu.vector_store %arg9[%c0_2, %c17, %c0_3], %0 {strides = array<i32>} : memref<12x32x4xbf16, #tpu.memory_space<vmem>>, vector<12x1x4xbf16>,
    %c0_4 = arith.constant 0 : index
    %c0_5 = arith.constant 0 : index
    %c0_6 = arith.constant 0 : index
    %c0_7 = arith.constant 0 : index
    %3 = vector.load %arg2[%c0_4, %c0_5, %c0_6, %c0_7] : memref<1x8x16x4xf32, #tpu.memory_space<vmem>>, vector<1x8x16x4xf32>
    %4 = vector.shape_cast %3 : vector<1x8x16x4xf32> to vector<8x16x4xf32>
    %5 = arith.truncf %4 : vector<8x16x4xf32> to vector<8x16x4xbf16>
    %c2 = arith.constant 2 : index
    %c1 = arith.constant 1 : index
    %c0_8 = arith.constant 0 : index
    %6 = vector.load %arg9[%c2, %c1, %c0_8] : memref<12x32x4xbf16, #tpu.memory_space<vmem>>, vector<8x16x4xbf16>
    tpu.vector_store %arg9[%c2, %c1, %c0_8], %5 {strides = array<i32>} : memref<12x32x4xbf16, #tpu.memory_space<vmem>>, vector<8x16x4xbf16>,
    %c0_i32 = arith.constant 0 : i32
    %7 = arith.cmpi eq, %arg1, %c0_i32 : i32
    %8 = arith.extui %7 : i1 to i32
    %c0_i32_9 = arith.constant 0 : i32
    %9 = arith.cmpi ne, %8, %c0_i32_9 : i32
    scf.if %9 {
      %cst_119 = arith.constant 0.000000e+00 : bf16
      %129 = vector.broadcast %cst_119 : bf16 to vector<2x16x4xbf16>
      %c0_120 = arith.constant 0 : index
      %c1_121 = arith.constant 1 : index
      %c0_122 = arith.constant 0 : index
      %130 = vector.load %arg9[%c0_120, %c1_121, %c0_122] : memref<12x32x4xbf16, #tpu.memory_space<vmem>>, vector<2x16x4xbf16>
      tpu.vector_store %arg9[%c0_120, %c1_121, %c0_122], %129 {strides = array<i32>} : memref<12x32x4xbf16, #tpu.memory_space<vmem>>, vector<2x16x4xbf16>,
    } else {
    }
    %c0_i32_10 = arith.constant 0 : i32
    %10 = arith.cmpi ne, %arg1, %c0_i32_10 : i32
    %11 = arith.extui %10 : i1 to i32
    %c0_i32_11 = arith.constant 0 : i32
    %12 = arith.cmpi ne, %11, %c0_i32_11 : i32
    scf.if %12 {
      %c0_119 = arith.constant 0 : index
      %c0_120 = arith.constant 0 : index
      %c0_121 = arith.constant 0 : index
      %c0_122 = arith.constant 0 : index
      %129 = vector.load %arg3[%c0_119, %c0_120, %c0_121, %c0_122] : memref<1x2x16x4xf32, #tpu.memory_space<vmem>>, vector<1x2x16x4xf32>
      %130 = vector.shape_cast %129 : vector<1x2x16x4xf32> to vector<2x16x4xf32>
      %131 = arith.truncf %130 : vector<2x16x4xf32> to vector<2x16x4xbf16>
      %c0_123 = arith.constant 0 : index
      %c1_124 = arith.constant 1 : index
      %c0_125 = arith.constant 0 : index
      %132 = vector.load %arg9[%c0_123, %c1_124, %c0_125] : memref<12x32x4xbf16, #tpu.memory_space<vmem>>, vector<2x16x4xbf16>
      tpu.vector_store %arg9[%c0_123, %c1_124, %c0_125], %131 {strides = array<i32>} : memref<12x32x4xbf16, #tpu.memory_space<vmem>>, vector<2x16x4xbf16>,
    } else {
    }
    %c1_i32 = arith.constant 1 : i32
    %13 = arith.cmpi eq, %arg1, %c1_i32 : i32
    %14 = arith.extui %13 : i1 to i32
    %c0_i32_12 = arith.constant 0 : i32
    %15 = arith.cmpi ne, %14, %c0_i32_12 : i32
    scf.if %15 {
      %cst_119 = arith.constant 0.000000e+00 : bf16
      %129 = vector.broadcast %cst_119 : bf16 to vector<2x16x4xbf16>
      %c10 = arith.constant 10 : index
      %c1_120 = arith.constant 1 : index
      %c0_121 = arith.constant 0 : index
      %130 = vector.load %arg9[%c10, %c1_120, %c0_121] : memref<12x32x4xbf16, #tpu.memory_space<vmem>>, vector<2x16x4xbf16>
      tpu.vector_store %arg9[%c10, %c1_120, %c0_121], %129 {strides = array<i32>} : memref<12x32x4xbf16, #tpu.memory_space<vmem>>, vector<2x16x4xbf16>,
    } else {
    }
    %c1_i32_13 = arith.constant 1 : i32
    %16 = arith.cmpi ne, %arg1, %c1_i32_13 : i32
    %17 = arith.extui %16 : i1 to i32
    %c0_i32_14 = arith.constant 0 : i32
    %18 = arith.cmpi ne, %17, %c0_i32_14 : i32
    scf.if %18 {
      %c0_119 = arith.constant 0 : index
      %c0_120 = arith.constant 0 : index
      %c0_121 = arith.constant 0 : index
      %c0_122 = arith.constant 0 : index
      %129 = vector.load %arg4[%c0_119, %c0_120, %c0_121, %c0_122] : memref<1x2x16x4xf32, #tpu.memory_space<vmem>>, vector<1x2x16x4xf32>
      %130 = vector.shape_cast %129 : vector<1x2x16x4xf32> to vector<2x16x4xf32>
      %131 = arith.truncf %130 : vector<2x16x4xf32> to vector<2x16x4xbf16>
      %c10 = arith.constant 10 : index
      %c1_123 = arith.constant 1 : index
      %c0_124 = arith.constant 0 : index
      %132 = vector.load %arg9[%c10, %c1_123, %c0_124] : memref<12x32x4xbf16, #tpu.memory_space<vmem>>, vector<2x16x4xbf16>
      tpu.vector_store %arg9[%c10, %c1_123, %c0_124], %131 {strides = array<i32>} : memref<12x32x4xbf16, #tpu.memory_space<vmem>>, vector<2x16x4xbf16>,
    } else {
    }
    %c0_15 = arith.constant 0 : index
    %c0_16 = arith.constant 0 : index
    %c0_17 = arith.constant 0 : index
    %19 = vector.load %arg9[%c0_15, %c0_16, %c0_17] : memref<12x32x4xbf16, #tpu.memory_space<vmem>>, vector<10x16x4xbf16>
    %20 = vector.shape_cast %19 : vector<10x16x4xbf16> to vector<160x4xbf16>
    %c0_18 = arith.constant 0 : index
    %c1_19 = arith.constant 1 : index
    %c0_20 = arith.constant 0 : index
    %21 = vector.load %arg9[%c0_18, %c1_19, %c0_20] : memref<12x32x4xbf16, #tpu.memory_space<vmem>>, vector<10x16x4xbf16>
    %22 = vector.shape_cast %21 : vector<10x16x4xbf16> to vector<160x4xbf16>
    %c0_21 = arith.constant 0 : index
    %c2_22 = arith.constant 2 : index
    %c0_23 = arith.constant 0 : index
    %23 = vector.load %arg9[%c0_21, %c2_22, %c0_23] : memref<12x32x4xbf16, #tpu.memory_space<vmem>>, vector<10x16x4xbf16>
    %24 = vector.shape_cast %23 : vector<10x16x4xbf16> to vector<160x4xbf16>
    %25 = tpu.concatenate %20, %22, %24 in 1 : vector<160x4xbf16>, vector<160x4xbf16>, vector<160x4xbf16> -> vector<160x12xbf16>
    %c0_24 = arith.constant 0 : index
    %c0_25 = arith.constant 0 : index
    %c0_26 = arith.constant 0 : index
    %26 = vector.load %arg5[%c0_24, %c0_25, %c0_26] : memref<3x12x4xbf16, #tpu.memory_space<vmem>>, vector<1x12x4xbf16>
    %27 = vector.shape_cast %26 : vector<1x12x4xbf16> to vector<12x4xbf16>
    %cst_27 = arith.constant dense<0.000000e+00> : vector<160x4xf32>
    %28 = tpu.matmul %25, %27, %cst_27 {dimension_numbers = #tpu.dot_dimension_numbers<[1], [0], [0], [1], [0, 0, 1, 1], [], []>} : vector<160x12xbf16>, vector<12x4xbf16>, vector<160x4xf32> -> vector<160x4xf32>
    %c1_28 = arith.constant 1 : index
    %c0_29 = arith.constant 0 : index
    %c0_30 = arith.constant 0 : index
    %29 = vector.load %arg9[%c1_28, %c0_29, %c0_30] : memref<12x32x4xbf16, #tpu.memory_space<vmem>>, vector<10x16x4xbf16>
    %30 = vector.shape_cast %29 : vector<10x16x4xbf16> to vector<160x4xbf16>
    %c1_31 = arith.constant 1 : index
    %c1_32 = arith.constant 1 : index
    %c0_33 = arith.constant 0 : index
    %31 = vector.load %arg9[%c1_31, %c1_32, %c0_33] : memref<12x32x4xbf16, #tpu.memory_space<vmem>>, vector<10x16x4xbf16>
    %32 = vector.shape_cast %31 : vector<10x16x4xbf16> to vector<160x4xbf16>
    %c1_34 = arith.constant 1 : index
    %c2_35 = arith.constant 2 : index
    %c0_36 = arith.constant 0 : index
    %33 = vector.load %arg9[%c1_34, %c2_35, %c0_36] : memref<12x32x4xbf16, #tpu.memory_space<vmem>>, vector<10x16x4xbf16>
    %34 = vector.shape_cast %33 : vector<10x16x4xbf16> to vector<160x4xbf16>
    %35 = tpu.concatenate %30, %32, %34 in 1 : vector<160x4xbf16>, vector<160x4xbf16>, vector<160x4xbf16> -> vector<160x12xbf16>
    %c1_37 = arith.constant 1 : index
    %c0_38 = arith.constant 0 : index
    %c0_39 = arith.constant 0 : index
    %36 = vector.load %arg5[%c1_37, %c0_38, %c0_39] : memref<3x12x4xbf16, #tpu.memory_space<vmem>>, vector<1x12x4xbf16>
    %37 = vector.shape_cast %36 : vector<1x12x4xbf16> to vector<12x4xbf16>
    %cst_40 = arith.constant dense<0.000000e+00> : vector<160x4xf32>
    %38 = tpu.matmul %35, %37, %cst_40 {dimension_numbers = #tpu.dot_dimension_numbers<[1], [0], [0], [1], [0, 0, 1, 1], [], []>} : vector<160x12xbf16>, vector<12x4xbf16>, vector<160x4xf32> -> vector<160x4xf32>
    %39 = arith.addf %28, %38 : vector<160x4xf32>
    %c2_41 = arith.constant 2 : index
    %c0_42 = arith.constant 0 : index
    %c0_43 = arith.constant 0 : index
    %40 = vector.load %arg9[%c2_41, %c0_42, %c0_43] : memref<12x32x4xbf16, #tpu.memory_space<vmem>>, vector<10x16x4xbf16>
    %41 = vector.shape_cast %40 : vector<10x16x4xbf16> to vector<160x4xbf16>
    %c2_44 = arith.constant 2 : index
    %c1_45 = arith.constant 1 : index
    %c0_46 = arith.constant 0 : index
    %42 = vector.load %arg9[%c2_44, %c1_45, %c0_46] : memref<12x32x4xbf16, #tpu.memory_space<vmem>>, vector<10x16x4xbf16>
    %43 = vector.shape_cast %42 : vector<10x16x4xbf16> to vector<160x4xbf16>
    %c2_47 = arith.constant 2 : index
    %c2_48 = arith.constant 2 : index
    %c0_49 = arith.constant 0 : index
    %44 = vector.load %arg9[%c2_47, %c2_48, %c0_49] : memref<12x32x4xbf16, #tpu.memory_space<vmem>>, vector<10x16x4xbf16>
    %45 = vector.shape_cast %44 : vector<10x16x4xbf16> to vector<160x4xbf16>
    %46 = tpu.concatenate %41, %43, %45 in 1 : vector<160x4xbf16>, vector<160x4xbf16>, vector<160x4xbf16> -> vector<160x12xbf16>
    %c2_50 = arith.constant 2 : index
    %c0_51 = arith.constant 0 : index
    %c0_52 = arith.constant 0 : index
    %47 = vector.load %arg5[%c2_50, %c0_51, %c0_52] : memref<3x12x4xbf16, #tpu.memory_space<vmem>>, vector<1x12x4xbf16>
    %48 = vector.shape_cast %47 : vector<1x12x4xbf16> to vector<12x4xbf16>
    %cst_53 = arith.constant dense<0.000000e+00> : vector<160x4xf32>
    %49 = tpu.matmul %46, %48, %cst_53 {dimension_numbers = #tpu.dot_dimension_numbers<[1], [0], [0], [1], [0, 0, 1, 1], [], []>} : vector<160x12xbf16>, vector<12x4xbf16>, vector<160x4xf32> -> vector<160x4xf32>
    %50 = arith.addf %39, %49 : vector<160x4xf32>
    %c0_54 = arith.constant 0 : index
    %c0_55 = arith.constant 0 : index
    %51 = vector.load %arg7[%c0_54, %c0_55] : memref<4x4xf32, #tpu.memory_space<vmem>>, vector<1x4xf32>
    %52 = vector.shape_cast %51 : vector<1x4xf32> to vector<4xf32>
    %c1_56 = arith.constant 1 : index
    %c0_57 = arith.constant 0 : index
    %53 = vector.load %arg7[%c1_56, %c0_57] : memref<4x4xf32, #tpu.memory_space<vmem>>, vector<1x4xf32>
    %54 = vector.shape_cast %53 : vector<1x4xf32> to vector<4xf32>
    %55 = vector.shape_cast %52 : vector<4xf32> to vector<1x4xf32>
    %56 = vector.broadcast %55 : vector<1x4xf32> to vector<160x4xf32>
    %57 = arith.mulf %50, %56 : vector<160x4xf32>
    %58 = vector.shape_cast %54 : vector<4xf32> to vector<1x4xf32>
    %59 = vector.broadcast %58 : vector<1x4xf32> to vector<160x4xf32>
    %60 = arith.addf %57, %59 : vector<160x4xf32>
    %cst_58 = arith.constant 0.000000e+00 : f32
    %61 = vector.broadcast %cst_58 : f32 to vector<160x4xf32>
    %62 = arith.cmpf oge, %60, %61 : vector<160x4xf32>
    %cst_59 = arith.constant 0.00999999977 : f32
    %63 = vector.broadcast %cst_59 : f32 to vector<160x4xf32>
    %64 = arith.mulf %63, %60 : vector<160x4xf32>
    %65 = arith.select %62, %60, %64 : vector<160x4xi1>, vector<160x4xf32>
    %66 = vector.shape_cast %65 : vector<160x4xf32> to vector<10x16x4xf32>
    %67 = arith.truncf %66 : vector<10x16x4xf32> to vector<10x16x4xbf16>
    %c0_60 = arith.constant 0 : index
    %c1_61 = arith.constant 1 : index
    %c0_62 = arith.constant 0 : index
    %68 = vector.load %arg9[%c0_60, %c1_61, %c0_62] : memref<12x32x4xbf16, #tpu.memory_space<vmem>>, vector<10x16x4xbf16>
    tpu.vector_store %arg9[%c0_60, %c1_61, %c0_62], %67 {strides = array<i32>} : memref<12x32x4xbf16, #tpu.memory_space<vmem>>, vector<10x16x4xbf16>,
    %c0_i32_63 = arith.constant 0 : i32
    %69 = arith.cmpi eq, %arg1, %c0_i32_63 : i32
    %70 = arith.extui %69 : i1 to i32
    %c0_i32_64 = arith.constant 0 : i32
    %71 = arith.cmpi ne, %70, %c0_i32_64 : i32
    scf.if %71 {
      %cst_119 = arith.constant 0.000000e+00 : bf16
      %129 = vector.broadcast %cst_119 : bf16 to vector<1x16x4xbf16>
      %c0_120 = arith.constant 0 : index
      %c1_121 = arith.constant 1 : index
      %c0_122 = arith.constant 0 : index
      %130 = vector.load %arg9[%c0_120, %c1_121, %c0_122] : memref<12x32x4xbf16, #tpu.memory_space<vmem>>, vector<1x16x4xbf16>
      tpu.vector_store %arg9[%c0_120, %c1_121, %c0_122], %129 {strides = array<i32>} : memref<12x32x4xbf16, #tpu.memory_space<vmem>>, vector<1x16x4xbf16>,
    } else {
    }
    %c1_i32_65 = arith.constant 1 : i32
    %72 = arith.cmpi eq, %arg1, %c1_i32_65 : i32
    %73 = arith.extui %72 : i1 to i32
    %c0_i32_66 = arith.constant 0 : i32
    %74 = arith.cmpi ne, %73, %c0_i32_66 : i32
    scf.if %74 {
      %cst_119 = arith.constant 0.000000e+00 : bf16
      %129 = vector.broadcast %cst_119 : bf16 to vector<1x16x4xbf16>
      %c9 = arith.constant 9 : index
      %c1_120 = arith.constant 1 : index
      %c0_121 = arith.constant 0 : index
      %130 = vector.load %arg9[%c9, %c1_120, %c0_121] : memref<12x32x4xbf16, #tpu.memory_space<vmem>>, vector<1x16x4xbf16>
      tpu.vector_store %arg9[%c9, %c1_120, %c0_121], %129 {strides = array<i32>} : memref<12x32x4xbf16, #tpu.memory_space<vmem>>, vector<1x16x4xbf16>,
    } else {
    }
    %c0_67 = arith.constant 0 : index
    %c0_68 = arith.constant 0 : index
    %c0_69 = arith.constant 0 : index
    %75 = vector.load %arg9[%c0_67, %c0_68, %c0_69] : memref<12x32x4xbf16, #tpu.memory_space<vmem>>, vector<8x16x4xbf16>
    %76 = vector.shape_cast %75 : vector<8x16x4xbf16> to vector<128x4xbf16>
    %c0_70 = arith.constant 0 : index
    %c1_71 = arith.constant 1 : index
    %c0_72 = arith.constant 0 : index
    %77 = vector.load %arg9[%c0_70, %c1_71, %c0_72] : memref<12x32x4xbf16, #tpu.memory_space<vmem>>, vector<8x16x4xbf16>
    %78 = vector.shape_cast %77 : vector<8x16x4xbf16> to vector<128x4xbf16>
    %c0_73 = arith.constant 0 : index
    %c2_74 = arith.constant 2 : index
    %c0_75 = arith.constant 0 : index
    %79 = vector.load %arg9[%c0_73, %c2_74, %c0_75] : memref<12x32x4xbf16, #tpu.memory_space<vmem>>, vector<8x16x4xbf16>
    %80 = vector.shape_cast %79 : vector<8x16x4xbf16> to vector<128x4xbf16>
    %81 = tpu.concatenate %76, %78, %80 in 1 : vector<128x4xbf16>, vector<128x4xbf16>, vector<128x4xbf16> -> vector<128x12xbf16>
    %c0_76 = arith.constant 0 : index
    %c0_77 = arith.constant 0 : index
    %c0_78 = arith.constant 0 : index
    %82 = vector.load %arg6[%c0_76, %c0_77, %c0_78] : memref<3x12x4xbf16, #tpu.memory_space<vmem>>, vector<1x12x4xbf16>
    %83 = vector.shape_cast %82 : vector<1x12x4xbf16> to vector<12x4xbf16>
    %cst_79 = arith.constant dense<0.000000e+00> : vector<128x4xf32>
    %84 = tpu.matmul %81, %83, %cst_79 {dimension_numbers = #tpu.dot_dimension_numbers<[1], [0], [0], [1], [0, 0, 1, 1], [], []>} : vector<128x12xbf16>, vector<12x4xbf16>, vector<128x4xf32> -> vector<128x4xf32>
    %c1_80 = arith.constant 1 : index
    %c0_81 = arith.constant 0 : index
    %c0_82 = arith.constant 0 : index
    %85 = vector.load %arg9[%c1_80, %c0_81, %c0_82] : memref<12x32x4xbf16, #tpu.memory_space<vmem>>, vector<8x16x4xbf16>
    %86 = vector.shape_cast %85 : vector<8x16x4xbf16> to vector<128x4xbf16>
    %c1_83 = arith.constant 1 : index
    %c1_84 = arith.constant 1 : index
    %c0_85 = arith.constant 0 : index
    %87 = vector.load %arg9[%c1_83, %c1_84, %c0_85] : memref<12x32x4xbf16, #tpu.memory_space<vmem>>, vector<8x16x4xbf16>
    %88 = vector.shape_cast %87 : vector<8x16x4xbf16> to vector<128x4xbf16>
    %c1_86 = arith.constant 1 : index
    %c2_87 = arith.constant 2 : index
    %c0_88 = arith.constant 0 : index
    %89 = vector.load %arg9[%c1_86, %c2_87, %c0_88] : memref<12x32x4xbf16, #tpu.memory_space<vmem>>, vector<8x16x4xbf16>
    %90 = vector.shape_cast %89 : vector<8x16x4xbf16> to vector<128x4xbf16>
    %91 = tpu.concatenate %86, %88, %90 in 1 : vector<128x4xbf16>, vector<128x4xbf16>, vector<128x4xbf16> -> vector<128x12xbf16>
    %c1_89 = arith.constant 1 : index
    %c0_90 = arith.constant 0 : index
    %c0_91 = arith.constant 0 : index
    %92 = vector.load %arg6[%c1_89, %c0_90, %c0_91] : memref<3x12x4xbf16, #tpu.memory_space<vmem>>, vector<1x12x4xbf16>
    %93 = vector.shape_cast %92 : vector<1x12x4xbf16> to vector<12x4xbf16>
    %cst_92 = arith.constant dense<0.000000e+00> : vector<128x4xf32>
    %94 = tpu.matmul %91, %93, %cst_92 {dimension_numbers = #tpu.dot_dimension_numbers<[1], [0], [0], [1], [0, 0, 1, 1], [], []>} : vector<128x12xbf16>, vector<12x4xbf16>, vector<128x4xf32> -> vector<128x4xf32>
    %95 = arith.addf %84, %94 : vector<128x4xf32>
    %c2_93 = arith.constant 2 : index
    %c0_94 = arith.constant 0 : index
    %c0_95 = arith.constant 0 : index
    %96 = vector.load %arg9[%c2_93, %c0_94, %c0_95] : memref<12x32x4xbf16, #tpu.memory_space<vmem>>, vector<8x16x4xbf16>
    %97 = vector.shape_cast %96 : vector<8x16x4xbf16> to vector<128x4xbf16>
    %c2_96 = arith.constant 2 : index
    %c1_97 = arith.constant 1 : index
    %c0_98 = arith.constant 0 : index
    %98 = vector.load %arg9[%c2_96, %c1_97, %c0_98] : memref<12x32x4xbf16, #tpu.memory_space<vmem>>, vector<8x16x4xbf16>
    %99 = vector.shape_cast %98 : vector<8x16x4xbf16> to vector<128x4xbf16>
    %c2_99 = arith.constant 2 : index
    %c2_100 = arith.constant 2 : index
    %c0_101 = arith.constant 0 : index
    %100 = vector.load %arg9[%c2_99, %c2_100, %c0_101] : memref<12x32x4xbf16, #tpu.memory_space<vmem>>, vector<8x16x4xbf16>
    %101 = vector.shape_cast %100 : vector<8x16x4xbf16> to vector<128x4xbf16>
    %102 = tpu.concatenate %97, %99, %101 in 1 : vector<128x4xbf16>, vector<128x4xbf16>, vector<128x4xbf16> -> vector<128x12xbf16>
    %c2_102 = arith.constant 2 : index
    %c0_103 = arith.constant 0 : index
    %c0_104 = arith.constant 0 : index
    %103 = vector.load %arg6[%c2_102, %c0_103, %c0_104] : memref<3x12x4xbf16, #tpu.memory_space<vmem>>, vector<1x12x4xbf16>
    %104 = vector.shape_cast %103 : vector<1x12x4xbf16> to vector<12x4xbf16>
    %cst_105 = arith.constant dense<0.000000e+00> : vector<128x4xf32>
    %105 = tpu.matmul %102, %104, %cst_105 {dimension_numbers = #tpu.dot_dimension_numbers<[1], [0], [0], [1], [0, 0, 1, 1], [], []>} : vector<128x12xbf16>, vector<12x4xbf16>, vector<128x4xf32> -> vector<128x4xf32>
    %106 = arith.addf %95, %105 : vector<128x4xf32>
    %c2_106 = arith.constant 2 : index
    %c0_107 = arith.constant 0 : index
    %107 = vector.load %arg7[%c2_106, %c0_107] : memref<4x4xf32, #tpu.memory_space<vmem>>, vector<1x4xf32>
    %108 = vector.shape_cast %107 : vector<1x4xf32> to vector<4xf32>
    %c3 = arith.constant 3 : index
    %c0_108 = arith.constant 0 : index
    %109 = vector.load %arg7[%c3, %c0_108] : memref<4x4xf32, #tpu.memory_space<vmem>>, vector<1x4xf32>
    %110 = vector.shape_cast %109 : vector<1x4xf32> to vector<4xf32>
    %111 = vector.shape_cast %108 : vector<4xf32> to vector<1x4xf32>
    %112 = vector.broadcast %111 : vector<1x4xf32> to vector<128x4xf32>
    %113 = arith.mulf %106, %112 : vector<128x4xf32>
    %114 = vector.shape_cast %110 : vector<4xf32> to vector<1x4xf32>
    %115 = vector.broadcast %114 : vector<1x4xf32> to vector<128x4xf32>
    %116 = arith.addf %113, %115 : vector<128x4xf32>
    %cst_109 = arith.constant 0.000000e+00 : f32
    %117 = vector.broadcast %cst_109 : f32 to vector<128x4xf32>
    %118 = arith.cmpf oge, %116, %117 : vector<128x4xf32>
    %cst_110 = arith.constant 0.00999999977 : f32
    %119 = vector.broadcast %cst_110 : f32 to vector<128x4xf32>
    %120 = arith.mulf %119, %116 : vector<128x4xf32>
    %121 = arith.select %118, %116, %120 : vector<128x4xi1>, vector<128x4xf32>
    %122 = vector.shape_cast %121 : vector<128x4xf32> to vector<8x16x4xf32>
    %c0_111 = arith.constant 0 : index
    %c0_112 = arith.constant 0 : index
    %c0_113 = arith.constant 0 : index
    %c0_114 = arith.constant 0 : index
    %123 = vector.load %arg2[%c0_111, %c0_112, %c0_113, %c0_114] : memref<1x8x16x4xf32, #tpu.memory_space<vmem>>, vector<1x8x16x4xf32>
    %124 = vector.shape_cast %123 : vector<1x8x16x4xf32> to vector<8x16x4xf32>
    %125 = arith.addf %124, %122 : vector<8x16x4xf32>
    %c0_115 = arith.constant 0 : index
    %c0_116 = arith.constant 0 : index
    %c0_117 = arith.constant 0 : index
    %c0_118 = arith.constant 0 : index
    %126 = vector.load %arg8[%c0_115, %c0_116, %c0_117, %c0_118] : memref<1x8x16x4xf32, #tpu.memory_space<vmem>>, vector<1x8x16x4xf32>
    %127 = vector.shape_cast %126 : vector<1x8x16x4xf32> to vector<8x16x4xf32>
    %128 = vector.shape_cast %125 : vector<8x16x4xf32> to vector<1x8x16x4xf32>
    tpu.vector_store %arg8[%c0_115, %c0_116, %c0_117, %c0_118], %128 {strides = array<i32>} : memref<1x8x16x4xf32, #tpu.memory_space<vmem>>, vector<1x8x16x4xf32>,
    return
  }
  func.func @transform_0(%arg0: i32, %arg1: i32) -> (i32, i32, i32, i32) {
    %c0_i32 = arith.constant 0 : i32
    %c0_i32_0 = arith.constant 0 : i32
    %c0_i32_1 = arith.constant 0 : i32
    return %arg0, %arg1, %c0_i32, %c0_i32_0 : i32, i32, i32, i32
  }
  func.func @transform_1(%arg0: i32, %arg1: i32) -> (i32, i32, i32, i32) {
    %c4_i32 = arith.constant 4 : i32
    %0 = arith.muli %arg1, %c4_i32 : i32
    %c1_i32 = arith.constant 1 : i32
    %1 = arith.subi %0, %c1_i32 : i32
    %c0_i32 = arith.constant 0 : i32
    %2 = arith.maxsi %1, %c0_i32 : i32
    %c0_i32_0 = arith.constant 0 : i32
    %c0_i32_1 = arith.constant 0 : i32
    %c0_i32_2 = arith.constant 0 : i32
    return %arg0, %2, %c0_i32_0, %c0_i32_1 : i32, i32, i32, i32
  }
  func.func @transform_2(%arg0: i32, %arg1: i32) -> (i32, i32, i32, i32) {
    %c1_i32 = arith.constant 1 : i32
    %0 = arith.addi %arg1, %c1_i32 : i32
    %c4_i32 = arith.constant 4 : i32
    %1 = arith.muli %0, %c4_i32 : i32
    %c7_i32 = arith.constant 7 : i32
    %2 = arith.minsi %1, %c7_i32 : i32
    %c0_i32 = arith.constant 0 : i32
    %c0_i32_0 = arith.constant 0 : i32
    %c0_i32_1 = arith.constant 0 : i32
    return %arg0, %2, %c0_i32, %c0_i32_0 : i32, i32, i32, i32
  }
  func.func @transform_3(%arg0: i32, %arg1: i32) -> (i32, i32, i32) {
    %c0_i32 = arith.constant 0 : i32
    %c0_i32_0 = arith.constant 0 : i32
    %c0_i32_1 = arith.constant 0 : i32
    %c0_i32_2 = arith.constant 0 : i32
    return %c0_i32, %c0_i32_0, %c0_i32_1 : i32, i32, i32
  }
  func.func @transform_4(%arg0: i32, %arg1: i32) -> (i32, i32, i32) {
    %c0_i32 = arith.constant 0 : i32
    %c0_i32_0 = arith.constant 0 : i32
    %c0_i32_1 = arith.constant 0 : i32
    %c0_i32_2 = arith.constant 0 : i32
    return %c0_i32, %c0_i32_0, %c0_i32_1 : i32, i32, i32
  }
  func.func @transform_5(%arg0: i32, %arg1: i32) -> (i32, i32) {
    %c0_i32 = arith.constant 0 : i32
    %c0_i32_0 = arith.constant 0 : i32
    %c0_i32_1 = arith.constant 0 : i32
    return %c0_i32, %c0_i32_0 : i32, i32
  }
  func.func @transform_6(%arg0: i32, %arg1: i32) -> (i32, i32, i32, i32) {
    %c0_i32 = arith.constant 0 : i32
    %c0_i32_0 = arith.constant 0 : i32
    %c0_i32_1 = arith.constant 0 : i32
    return %arg0, %arg1, %c0_i32, %c0_i32_0 : i32, i32, i32, i32
  }
}

</mosaic_0001>

<llo_original>
// kernel: tpu_custom_call.1
$region0: #{tpu_custom_call.1}
  #allocation0 [shape = 'u32[]', space=smem, size = 0x4, offset = 0x4, fixed_abs, tag = 'smem constant byte address 0x4 - core index']
  #allocation1 [shape = 'u32[144,128]{1,0:T(1,128)}', space=vmem, size = 0x12000, scoped, tag = 'internal scratch']
  #allocation2 [shape = 'bf16[12,32,4]{2,1,0:T(8,128)(2,1)}', space=vmem, size = 0x18000, scoped, tag = 'scratch operand']
  %s0 = inlined_call_operand.vmem [shape: f32[2,16,16,4], index: 0, kind: input, shape index: {}]
  %s1 = inlined_call_operand.vmem [shape: f32[2,16,16,4], index: 1, kind: input, shape index: {}]
  %s2 = inlined_call_operand.vmem [shape: f32[2,16,16,4], index: 2, kind: input, shape index: {}]
  %s3 = inlined_call_operand.vmem [shape: bf16[3,12,4], index: 3, kind: input, shape index: {}]
  %s4 = inlined_call_operand.vmem [shape: bf16[3,12,4], index: 4, kind: input, shape index: {}]
  %s5 = inlined_call_operand.vmem [shape: f32[4,4], index: 5, kind: input, shape index: {}]
  %s6 = inlined_call_operand.vmem [shape: f32[2,16,16,4], index: 6, kind: output, shape index: {}]
  %s7 = sld [smem:[#allocation0]]
  $region81: #{tpu_custom_call.1} parent=0
    _
  %s9 = ssub.s32 1, %s7
  %s10 = scalar_select 0, %s9, %s7
  loop: start=0, step=1, limit=6
  $region2: #{tpu_custom_call.1} parent=0 // loop_pre_header
    _
  $region3: #{tpu_custom_call.1} parent=0 // loop_header
    %s12 = sphi 0, %s16
    %p13 = scmp.ge.s32.totalorder %s12, 6
    %s19 = sphi 0, %s31
    %s20 = sphi 0, %s27
    %s21 = sphi 0, %s19
    %s22 = sphi 0, %s20
    %s23 = sphi 0, %s21
    %s24 = sphi 0, %s22
    %s36 = sphi 0, %s38
    %s39 = sphi 0, %s36
    %s40 = sphi 0, %s39
    %s56 = sphi 0, %s40
    %s72 = sphi 0, %s74
    %s75 = sphi 0, %s72
    %s76 = sphi 0, %s75
    %s92 = sphi 0, %s76
    %s108 = sphi 0, %s110
    %s111 = sphi 0, %s108
    %s112 = sphi 0, %s111
    %s128 = sphi 0, %s112
    %s132 = sphi 0, %s132
    %s134 = sphi 0, %s132
    %s135 = sphi 0, %s134
    %s149 = sphi 0, %s135
    %s153 = sphi 0, %s153
    %s155 = sphi 0, %s153
    %s156 = sphi 0, %s155
    %s170 = sphi 0, %s156
    %s174 = sphi 0, %s174
    %s176 = sphi 0, %s174
    %s177 = sphi 0, %s176
    %s191 = sphi 0, %s177
    %s199 = sphi 0, %s201
    %s202 = sphi 0, %s199
    %s203 = sphi 0, %s202
    %s219 = sphi 0, %s203
  $region4: #{tpu_custom_call.1} parent=0 // loop_header_branch
    %15 = sbr.rel (%p13) target = $region8
  $region5: #{tpu_custom_call.1} parent=0 // loop_body
    %s17 = ssub.s32 %s12, 1
    %s18 = ssub.s32 %s12, 2
    %s25 = sadd.s32 1, %s20
    %p26 = scmp.ge.s32.totalorder %s25, 2
    %s27 = scalar_select %p26, 0, %s25
    %s28 = sadd.s32 1, %s19
    %s29 = scalar_select %p26, %s28, %s19
    %p30 = scmp.ge.s32.totalorder %s29, 2
    %s31 = scalar_select %p30, 0, %s29
    %s32 = ssub.s32 %s19, %s31
    %s33 = ssub.s32 %s20, %s27
    %s34 = sor.u32 %s32, %s33
    %p35 = scmp.eq.s32.totalorder %s34, 0
    %s37 = sadd.s32 %s36, 1
    %s38 = scalar_select %p35, %s36, %s37
    %p41 = pneg %p35
    %p42 = scmp.eq.s32.totalorder %s12, 3
    %p43 = por %p41, %p42
    %p44 = scmp.ne.s32.totalorder %s36, %s39
    %p45 = scmp.eq.s32.totalorder %s12, 0
    %p46 = por %p44, %p45
    %p47 = scmp.ne.s32.totalorder %s36, %s39
    %p48 = scmp.eq.s32.totalorder %s17, 3
    %p49 = por %p47, %p48
    %p50 = scmp.ne.s32.totalorder %s39, %s40
    %p51 = scmp.eq.s32.totalorder %s17, 0
    %p52 = por %p50, %p51
    %p53 = scmp.ne.s32.totalorder %s39, %s40
    %p54 = scmp.eq.s32.totalorder %s18, 3
    %p55 = por %p53, %p54
    %p57 = scmp.ne.s32.totalorder %s40, %s56
    %p58 = scmp.eq.s32.totalorder %s18, 0
    %p59 = por %p57, %p58
    %s60 = smul.u32 %s20, 4
    %s61 = ssub.s32 %s60, 1
    %p62 = scmp.gt.s32.totalorder %s61, 0
    %s63 = scalar_select %p62, %s61, 0
    %s64 = smul.u32 %s27, 4
    %s65 = ssub.s32 %s64, 1
    %p66 = scmp.gt.s32.totalorder %s65, 0
    %s67 = scalar_select %p66, %s65, 0
    %s68 = ssub.s32 %s19, %s31
    %s69 = ssub.s32 %s63, %s67
    %s70 = sor.u32 %s68, %s69
    %p71 = scmp.eq.s32.totalorder %s70, 0
    %s73 = sadd.s32 %s72, 1
    %s74 = scalar_select %p71, %s72, %s73
    %p77 = pneg %p71
    %p78 = scmp.eq.s32.totalorder %s12, 3
    %p79 = por %p77, %p78
    %p80 = scmp.ne.s32.totalorder %s72, %s75
    %p81 = scmp.eq.s32.totalorder %s12, 0
    %p82 = por %p80, %p81
    %p83 = scmp.ne.s32.totalorder %s72, %s75
    %p84 = scmp.eq.s32.totalorder %s17, 3
    %p85 = por %p83, %p84
    %p86 = scmp.ne.s32.totalorder %s75, %s76
    %p87 = scmp.eq.s32.totalorder %s17, 0
    %p88 = por %p86, %p87
    %p89 = scmp.ne.s32.totalorder %s75, %s76
    %p90 = scmp.eq.s32.totalorder %s18, 3
    %p91 = por %p89, %p90
    %p93 = scmp.ne.s32.totalorder %s76, %s92
    %p94 = scmp.eq.s32.totalorder %s18, 0
    %p95 = por %p93, %p94
    %s96 = sadd.s32 %s20, 1
    %s97 = smul.u32 %s96, 4
    %p98 = scmp.lt.s32.totalorder %s97, 7
    %s99 = scalar_select %p98, %s97, 7
    %s100 = sadd.s32 %s27, 1
    %s101 = smul.u32 %s100, 4
    %p102 = scmp.lt.s32.totalorder %s101, 7
    %s103 = scalar_select %p102, %s101, 7
    %s104 = ssub.s32 %s19, %s31
    %s105 = ssub.s32 %s99, %s103
    %s106 = sor.u32 %s104, %s105
    %p107 = scmp.eq.s32.totalorder %s106, 0
    %s109 = sadd.s32 %s108, 1
    %s110 = scalar_select %p107, %s108, %s109
    %p113 = pneg %p107
    %p114 = scmp.eq.s32.totalorder %s12, 3
    %p115 = por %p113, %p114
    %p116 = scmp.ne.s32.totalorder %s108, %s111
    %p117 = scmp.eq.s32.totalorder %s12, 0
    %p118 = por %p116, %p117
    %p119 = scmp.ne.s32.totalorder %s108, %s111
    %p120 = scmp.eq.s32.totalorder %s17, 3
    %p121 = por %p119, %p120
    %p122 = scmp.ne.s32.totalorder %s111, %s112
    %p123 = scmp.eq.s32.totalorder %s17, 0
    %p124 = por %p122, %p123
    %p125 = scmp.ne.s32.totalorder %s111, %s112
    %p126 = scmp.eq.s32.totalorder %s18, 3
    %p127 = por %p125, %p126
    %p129 = scmp.ne.s32.totalorder %s112, %s128
    %p130 = scmp.eq.s32.totalorder %s18, 0
    %p131 = por %p129, %p130
    %s133 = sadd.s32 %s132, 1
    %p136 = scmp.eq.s32.totalorder %s12, 3
    %p137 = scmp.ne.s32.totalorder %s132, %s134
    %p138 = scmp.eq.s32.totalorder %s12, 0
    %p139 = por %p137, %p138
    %p140 = scmp.ne.s32.totalorder %s132, %s134
    %p141 = scmp.eq.s32.totalorder %s17, 3
    %p142 = por %p140, %p141
    %p143 = scmp.ne.s32.totalorder %s134, %s135
    %p144 = scmp.eq.s32.totalorder %s17, 0
    %p145 = por %p143, %p144
    %p146 = scmp.ne.s32.totalorder %s134, %s135
    %p147 = scmp.eq.s32.totalorder %s18, 3
    %p148 = por %p146, %p147
    %p150 = scmp.ne.s32.totalorder %s135, %s149
    %p151 = scmp.eq.s32.totalorder %s18, 0
    %p152 = por %p150, %p151
    %s154 = sadd.s32 %s153, 1
    %p157 = scmp.eq.s32.totalorder %s12, 3
    %p158 = scmp.ne.s32.totalorder %s153, %s155
    %p159 = scmp.eq.s32.totalorder %s12, 0
    %p160 = por %p158, %p159
    %p161 = scmp.ne.s32.totalorder %s153, %s155
    %p162 = scmp.eq.s32.totalorder %s17, 3
    %p163 = por %p161, %p162
    %p164 = scmp.ne.s32.totalorder %s155, %s156
    %p165 = scmp.eq.s32.totalorder %s17, 0
    %p166 = por %p164, %p165
    %p167 = scmp.ne.s32.totalorder %s155, %s156
    %p168 = scmp.eq.s32.totalorder %s18, 3
    %p169 = por %p167, %p168
    %p171 = scmp.ne.s32.totalorder %s156, %s170
    %p172 = scmp.eq.s32.totalorder %s18, 0
    %p173 = por %p171, %p172
    %s175 = sadd.s32 %s174, 1
    %p178 = scmp.eq.s32.totalorder %s12, 3
    %p179 = scmp.ne.s32.totalorder %s174, %s176
    %p180 = scmp.eq.s32.totalorder %s12, 0
    %p181 = por %p179, %p180
    %p182 = scmp.ne.s32.totalorder %s174, %s176
    %p183 = scmp.eq.s32.totalorder %s17, 3
    %p184 = por %p182, %p183
    %p185 = scmp.ne.s32.totalorder %s176, %s177
    %p186 = scmp.eq.s32.totalorder %s17, 0
    %p187 = por %p185, %p186
    %p188 = scmp.ne.s32.totalorder %s176, %s177
    %p189 = scmp.eq.s32.totalorder %s18, 3
    %p190 = por %p188, %p189
    %p192 = scmp.ne.s32.totalorder %s177, %s191
    %p193 = scmp.eq.s32.totalorder %s18, 0
    %p194 = por %p192, %p193
    %s195 = ssub.s32 %s19, %s31
    %s196 = ssub.s32 %s20, %s27
    %s197 = sor.u32 %s195, %s196
    %p198 = scmp.eq.s32.totalorder %s197, 0
    %s200 = sadd.s32 %s199, 1
    %s201 = scalar_select %p198, %s199, %s200
    %p204 = pneg %p198
    %p205 = scmp.eq.s32.totalorder %s12, 3
    %p206 = por %p204, %p205
    %p207 = scmp.ne.s32.totalorder %s199, %s202
    %p208 = scmp.eq.s32.totalorder %s12, 0
    %p209 = por %p207, %p208
    %p210 = scmp.ne.s32.totalorder %s199, %s202
    %p211 = scmp.eq.s32.totalorder %s17, 3
    %p212 = por %p210, %p211
    %p213 = scmp.ne.s32.totalorder %s202, %s203
    %p214 = scmp.eq.s32.totalorder %s17, 0
    %p215 = por %p213, %p214
    %p216 = scmp.ne.s32.totalorder %s202, %s203
    %p217 = scmp.eq.s32.totalorder %s18, 3
    %p218 = por %p216, %p217
    %p220 = scmp.ne.s32.totalorder %s203, %s219
    %p221 = scmp.eq.s32.totalorder %s18, 0
    %p222 = por %p220, %p221
    %p223 = scmp.le.s32.totalorder 1, %s12
    %p224 = scmp.lt.s32.totalorder %s12, 5
    %p225 = pnand %p223, %p224
    %p226 = pneg %p225
    // Predicated region
    $region9: #{tpu_custom_call.1} parent=5 // pred_check
      _
    $region10: #{tpu_custom_call.1} parent=5 // pred_check_branch
      %228 = sbr.rel (%p225) target = $region12
    $region11: #{tpu_custom_call.1} parent=5 // pred_region
      %s229 = ssub.s32 %s12, 1
      // Predicated region
      $region13: #{tpu_custom_call.1} parent=11 // pred_check
        %p230 = pneg %p145
      $region14: #{tpu_custom_call.1} parent=11 // pred_check_branch
        %232 = sbr.rel (%p230) target = $region16
      $region15: #{tpu_custom_call.1} parent=11 // pred_region
        _
      $region16: #{tpu_custom_call.1} parent=11 // pred_fallthru
        _
      // Predicated region
      $region17: #{tpu_custom_call.1} parent=11 // pred_check
        %p233 = pneg %p166
      $region18: #{tpu_custom_call.1} parent=11 // pred_check_branch
        %235 = sbr.rel (%p233) target = $region20
      $region19: #{tpu_custom_call.1} parent=11 // pred_region
        _
      $region20: #{tpu_custom_call.1} parent=11 // pred_fallthru
        _
      // Predicated region
      $region21: #{tpu_custom_call.1} parent=11 // pred_check
        %p236 = pneg %p187
      $region22: #{tpu_custom_call.1} parent=11 // pred_check_branch
        %238 = sbr.rel (%p236) target = $region24
      $region23: #{tpu_custom_call.1} parent=11 // pred_region
        _
      $region24: #{tpu_custom_call.1} parent=11 // pred_fallthru
        _
    $region12: #{tpu_custom_call.1} parent=5 // pred_fallthru
      _
    %p239 = scmp.lt.s32.totalorder %s12, 4
    // Predicated region
    $region25: #{tpu_custom_call.1} parent=5 // pred_check
      %p240 = pneg %p239
    $region26: #{tpu_custom_call.1} parent=5 // pred_check_branch
      %242 = sbr.rel (%p240) target = $region28
    $region27: #{tpu_custom_call.1} parent=5 // pred_region
      // Predicated region
      $region29: #{tpu_custom_call.1} parent=27 // pred_check
        %p243 = pneg %p46
      $region30: #{tpu_custom_call.1} parent=27 // pred_check_branch
        %245 = sbr.rel (%p243) target = $region32
      $region31: #{tpu_custom_call.1} parent=27 // pred_region
        %s246 = smul.u32 8, %s20
        %p247 = scmp.lt.s32.totalorder %s19, 1
        %s248 = scalar_select %p247, %s19, 1
        %p249 = scmp.lt.s32.totalorder %s246, 15
        %s250 = scalar_select %p249, %s246, 15
        %s251 = smul.addr %s250, 2
        %s252 = smul.addr %s248, 32
        %s253 = sadd.s32 %s251, %s252
        %s254 = smul.addr %s253, 8
        %s255 = scalar_lea.vmem %s0, %s254
        %s256 = smul.u32 8, %s20
      $region32: #{tpu_custom_call.1} parent=27 // pred_fallthru
        _
      // Predicated region
      $region33: #{tpu_custom_call.1} parent=27 // pred_check
        %p257 = pneg %p82
      $region34: #{tpu_custom_call.1} parent=27 // pred_check_branch
        %259 = sbr.rel (%p257) target = $region36
      $region35: #{tpu_custom_call.1} parent=27 // pred_region
        %s260 = smul.u32 %s20, 4
        %s261 = ssub.s32 %s260, 1
        %p262 = scmp.gt.s32.totalorder %s261, 0
        %s263 = scalar_select %p262, %s261, 0
        %s264 = smul.u32 2, %s263
        %p265 = scmp.lt.s32.totalorder %s19, 1
        %s266 = scalar_select %p265, %s19, 1
        %p267 = scmp.lt.s32.totalorder %s264, 15
        %s268 = scalar_select %p267, %s264, 15
        %s269 = smul.addr %s268, 2
        %s270 = smul.addr %s266, 32
        %s271 = sadd.s32 %s269, %s270
        %s272 = smul.addr %s271, 8
        %s273 = scalar_lea.vmem %s1, %s272
        %s274 = smul.u32 %s20, 4
        %s275 = ssub.s32 %s274, 1
        %p276 = scmp.gt.s32.totalorder %s275, 0
        %s277 = scalar_select %p276, %s275, 0
        %s278 = smul.u32 2, %s277
      $region36: #{tpu_custom_call.1} parent=27 // pred_fallthru
        _
      // Predicated region
      $region37: #{tpu_custom_call.1} parent=27 // pred_check
        %p279 = pneg %p118
      $region38: #{tpu_custom_call.1} parent=27 // pred_check_branch
        %281 = sbr.rel (%p279) target = $region40
      $region39: #{tpu_custom_call.1} parent=27 // pred_region
        %s282 = sadd.s32 %s20, 1
        %s283 = smul.u32 %s282, 4
        %p284 = scmp.lt.s32.totalorder %s283, 7
        %s285 = scalar_select %p284, %s283, 7
        %s286 = smul.u32 2, %s285
        %p287 = scmp.lt.s32.totalorder %s19, 1
        %s288 = scalar_select %p287, %s19, 1
        %p289 = scmp.lt.s32.totalorder %s286, 15
        %s290 = scalar_select %p289, %s286, 15
        %s291 = smul.addr %s290, 2
        %s292 = smul.addr %s288, 32
        %s293 = sadd.s32 %s291, %s292
        %s294 = smul.addr %s293, 8
        %s295 = scalar_lea.vmem %s2, %s294
        %s296 = sadd.s32 %s20, 1
        %s297 = smul.u32 %s296, 4
        %p298 = scmp.lt.s32.totalorder %s297, 7
        %s299 = scalar_select %p298, %s297, 7
        %s300 = smul.u32 2, %s299
      $region40: #{tpu_custom_call.1} parent=27 // pred_fallthru
        _
    $region28: #{tpu_custom_call.1} parent=5 // pred_fallthru
      _
    %p301 = scmp.le.s32.totalorder 1, %s12
    %p302 = scmp.lt.s32.totalorder %s12, 5
    %p303 = pnand %p301, %p302
    %p304 = pneg %p303
    // Predicated region
    $region41: #{tpu_custom_call.1} parent=5 // pred_check
      _
    $region42: #{tpu_custom_call.1} parent=5 // pred_check_branch
      %306 = sbr.rel (%p303) target = $region44
    $region43: #{tpu_custom_call.1} parent=5 // pred_region
      %s307 = ssub.s32 %s12, 1
      %s308 = smul.u32 8, %s22
      %p309 = scmp.lt.s32.totalorder %s21, 1
      %s310 = scalar_select %p309, %s21, 1
      %p311 = scmp.lt.s32.totalorder %s308, 15
      %s312 = scalar_select %p311, %s308, 15
      %s313 = smul.addr %s312, 2
      %s314 = smul.addr %s310, 32
      %s315 = sadd.s32 %s313, %s314
      %s316 = smul.addr %s315, 8
      %s317 = scalar_lea.vmem %s0, %s316
      %p318 = pneg %p52
      %p319 = pneg %p49
      %s320 = smul.u32 %s22, 4
      %s321 = ssub.s32 %s320, 1
      %p322 = scmp.gt.s32.totalorder %s321, 0
      %s323 = scalar_select %p322, %s321, 0
      %s324 = smul.u32 2, %s323
      %p325 = scmp.lt.s32.totalorder %s21, 1
      %s326 = scalar_select %p325, %s21, 1
      %p327 = scmp.lt.s32.totalorder %s324, 15
      %s328 = scalar_select %p327, %s324, 15
      %s329 = smul.addr %s328, 2
      %s330 = smul.addr %s326, 32
      %s331 = sadd.s32 %s329, %s330
      %s332 = smul.addr %s331, 8
      %s333 = scalar_lea.vmem %s1, %s332
      %p334 = pneg %p88
      %p335 = pneg %p85
      %s336 = sadd.s32 %s22, 1
      %s337 = smul.u32 %s336, 4
      %p338 = scmp.lt.s32.totalorder %s337, 7
      %s339 = scalar_select %p338, %s337, 7
      %s340 = smul.u32 2, %s339
      %p341 = scmp.lt.s32.totalorder %s21, 1
      %s342 = scalar_select %p341, %s21, 1
      %p343 = scmp.lt.s32.totalorder %s340, 15
      %s344 = scalar_select %p343, %s340, 15
      %s345 = smul.addr %s344, 2
      %s346 = smul.addr %s342, 32
      %s347 = sadd.s32 %s345, %s346
      %s348 = smul.addr %s347, 8
      %s349 = scalar_lea.vmem %s2, %s348
      %p350 = pneg %p124
      %p351 = pneg %p121
      %p352 = pneg %p145
      %p353 = pneg %p142
      %p354 = pneg %p166
      %p355 = pneg %p163
      %p356 = pneg %p187
      %p357 = pneg %p184
      %p358 = pneg %p215
      %p359 = pneg %p212
      %s360 = smul.u32 8, %s22
      %p361 = scmp.lt.s32.totalorder %s21, 1
      %s362 = scalar_select %p361, %s21, 1
      %p363 = scmp.lt.s32.totalorder %s360, 15
      %s364 = scalar_select %p363, %s360, 15
      %s365 = smul.addr %s364, 2
      %s366 = smul.addr %s362, 32
      %s367 = sadd.s32 %s365, %s366
      %s368 = smul.addr %s367, 8
      %s369 = scalar_lea.vmem %s6, %s368
      %s370 = smul.u32 8, %s22
      %p371 = scmp.lt.s32.totalorder %s21, 1
      %s372 = scalar_select %p371, %s21, 1
      %p373 = scmp.lt.s32.totalorder %s370, 15
      %s374 = scalar_select %p373, %s370, 15
      %s375 = smul.addr %s374, 2
      %s376 = smul.addr %s372, 32
      %s377 = sadd.s32 %s375, %s376
      %s378 = smul.addr %s377, 8
      %s379 = scalar_lea.vmem %s0, %s378
      %s380 = smul.u32 8, %s22
      %s381 = smul.u32 %s22, 4
      %s382 = ssub.s32 %s381, 1
      %p383 = scmp.gt.s32.totalorder %s382, 0
      %s384 = scalar_select %p383, %s382, 0
      %s385 = smul.u32 2, %s384
      %p386 = scmp.lt.s32.totalorder %s21, 1
      %s387 = scalar_select %p386, %s21, 1
      %p388 = scmp.lt.s32.totalorder %s385, 15
      %s389 = scalar_select %p388, %s385, 15
      %s390 = smul.addr %s389, 2
      %s391 = smul.addr %s387, 32
      %s392 = sadd.s32 %s390, %s391
      %s393 = smul.addr %s392, 8
      %s394 = scalar_lea.vmem %s1, %s393
      %s395 = smul.u32 %s22, 4
      %s396 = ssub.s32 %s395, 1
      %p397 = scmp.gt.s32.totalorder %s396, 0
      %s398 = scalar_select %p397, %s396, 0
      %s399 = smul.u32 2, %s398
      %s400 = sadd.s32 %s22, 1
      %s401 = smul.u32 %s400, 4
      %p402 = scmp.lt.s32.totalorder %s401, 7
      %s403 = scalar_select %p402, %s401, 7
      %s404 = smul.u32 2, %s403
      %p405 = scmp.lt.s32.totalorder %s21, 1
      %s406 = scalar_select %p405, %s21, 1
      %p407 = scmp.lt.s32.totalorder %s404, 15
      %s408 = scalar_select %p407, %s404, 15
      %s409 = smul.addr %s408, 2
      %s410 = smul.addr %s406, 32
      %s411 = sadd.s32 %s409, %s410
      %s412 = smul.addr %s411, 8
      %s413 = scalar_lea.vmem %s2, %s412
      %s414 = sadd.s32 %s22, 1
      %s415 = smul.u32 %s414, 4
      %p416 = scmp.lt.s32.totalorder %s415, 7
      %s417 = scalar_select %p416, %s415, 7
      %s418 = smul.u32 2, %s417
      %s419 = smul.u32 8, %s22
      %p420 = scmp.lt.s32.totalorder %s21, 1
      %s421 = scalar_select %p420, %s21, 1
      %p422 = scmp.lt.s32.totalorder %s419, 15
      %s423 = scalar_select %p422, %s419, 15
      %s424 = smul.addr %s423, 2
      %s425 = smul.addr %s421, 32
      %s426 = sadd.s32 %s424, %s425
      %s427 = smul.addr %s426, 8
      %s428 = scalar_lea.vmem %s6, %s427
      %s429 = smul.u32 8, %s22
      %vm431 = vcmask 24576
      %vm432 = vsmask.f32 256
      %vm433 = vmand %vm431, %vm432
      %v434 = vld [vmem:[#allocation2] sm:$0x1]
      %v435 = vsel %vm433, 0, %v434
      %436 = vst [vmem:[#allocation2] sm:$0x1] %v435
      %v437 = vld [vmem:[#allocation2 + $0x10] sm:$0x1]
      %v438 = vsel %vm433, 0, %v437
      %439 = vst [vmem:[#allocation2 + $0x10] sm:$0x1] %v438
      %v440 = vld [vmem:[#allocation2 + $0x20] sm:$0x1]
      %v441 = vsel %vm433, 0, %v440
      %442 = vst [vmem:[#allocation2 + $0x20] sm:$0x1] %v441
      %v443 = vld [vmem:[#allocation2 + $0x30] sm:$0x1]
      %v444 = vsel %vm433, 0, %v443
      %445 = vst [vmem:[#allocation2 + $0x30] sm:$0x1] %v444
      %v446 = vld [vmem:[#allocation2 + $0x40] sm:$0x1]
      %v447 = vsel %vm433, 0, %v446
      %448 = vst [vmem:[#allocation2 + $0x40] sm:$0x1] %v447
      %v449 = vld [vmem:[#allocation2 + $0x50] sm:$0x1]
      %v450 = vsel %vm433, 0, %v449
      %451 = vst [vmem:[#allocation2 + $0x50] sm:$0x1] %v450
      %v452 = vld [vmem:[#allocation2 + $0x60] sm:$0x1]
      %v453 = vsel %vm433, 0, %v452
      %454 = vst [vmem:[#allocation2 + $0x60] sm:$0x1] %v453
      %v455 = vld [vmem:[#allocation2 + $0x70] sm:$0x1]
      %v456 = vsel %vm433, 0, %v455
      %457 = vst [vmem:[#allocation2 + $0x70] sm:$0x1] %v456
      %v458 = vld [vmem:[#allocation2 + $0x80] sm:$0x1]
      %v459 = vsel %vm433, 0, %v458
      %460 = vst [vmem:[#allocation2 + $0x80] sm:$0x1] %v459
      %v461 = vld [vmem:[#allocation2 + $0x90] sm:$0x1]
      %v462 = vsel %vm433, 0, %v461
      %463 = vst [vmem:[#allocation2 + $0x90] sm:$0x1] %v462
      %v464 = vld [vmem:[#allocation2 + $0xa0] sm:$0x1]
      %v465 = vsel %vm433, 0, %v464
      %466 = vst [vmem:[#allocation2 + $0xa0] sm:$0x1] %v465
      %v467 = vld [vmem:[#allocation2 + $0xb0] sm:$0x1]
      %v468 = vsel %vm433, 0, %v467
      %469 = vst [vmem:[#allocation2 + $0xb0] sm:$0x1] %v468
      %vm470 = vsmask.f32 7938
      %vm471 = vmand %vm431, %vm470
      %v472 = vld [vmem:[#allocation2 + $0x8] sm:$0x1]
      %v473 = vsel %vm471, 0, %v472
      %474 = vst [vmem:[#allocation2 + $0x8] sm:$0x1] %v473
      %v475 = vld [vmem:[#allocation2 + $0x18] sm:$0x1]
      %v476 = vsel %vm471, 0, %v475
      %477 = vst [vmem:[#allocation2 + $0x18] sm:$0x1] %v476
      %v478 = vld [vmem:[#allocation2 + $0x28] sm:$0x1]
      %v479 = vsel %vm471, 0, %v478
      %480 = vst [vmem:[#allocation2 + $0x28] sm:$0x1] %v479
      %v481 = vld [vmem:[#allocation2 + $0x38] sm:$0x1]
      %v482 = vsel %vm471, 0, %v481
      %483 = vst [vmem:[#allocation2 + $0x38] sm:$0x1] %v482
      %v484 = vld [vmem:[#allocation2 + $0x48] sm:$0x1]
      %v485 = vsel %vm471, 0, %v484
      %486 = vst [vmem:[#allocation2 + $0x48] sm:$0x1] %v485
      %v487 = vld [vmem:[#allocation2 + $0x58] sm:$0x1]
      %v488 = vsel %vm471, 0, %v487
      %489 = vst [vmem:[#allocation2 + $0x58] sm:$0x1] %v488
      %v490 = vld [vmem:[#allocation2 + $0x68] sm:$0x1]
      %v491 = vsel %vm471, 0, %v490
      %492 = vst [vmem:[#allocation2 + $0x68] sm:$0x1] %v491
      %v493 = vld [vmem:[#allocation2 + $0x78] sm:$0x1]
      %v494 = vsel %vm471, 0, %v493
      %495 = vst [vmem:[#allocation2 + $0x78] sm:$0x1] %v494
      %v496 = vld [vmem:[#allocation2 + $0x88] sm:$0x1]
      %v497 = vsel %vm471, 0, %v496
      %498 = vst [vmem:[#allocation2 + $0x88] sm:$0x1] %v497
      %v499 = vld [vmem:[#allocation2 + $0x98] sm:$0x1]
      %v500 = vsel %vm471, 0, %v499
      %501 = vst [vmem:[#allocation2 + $0x98] sm:$0x1] %v500
      %v502 = vld [vmem:[#allocation2 + $0xa8] sm:$0x1]
      %v503 = vsel %vm471, 0, %v502
      %504 = vst [vmem:[#allocation2 + $0xa8] sm:$0x1] %v503
      %v505 = vld [vmem:[#allocation2 + $0xb8] sm:$0x1]
      %v506 = vsel %vm471, 0, %v505
      %507 = vst [vmem:[#allocation2 + $0xb8] sm:$0x1] %v506
      %v508 = vld [vmem:[%s379] sm:$0xff]
      %v509 = vld [vmem:[%s379 + $0x8] sm:$0xff]
      %v510 = vld [vmem:[%s379 + $0x10] sm:$0xff]
      %v511 = vld [vmem:[%s379 + $0x18] sm:$0xff]
      %v512 = vld [vmem:[%s379 + $0x20] sm:$0xff]
      %v513 = vld [vmem:[%s379 + $0x28] sm:$0xff]
      %v514 = vld [vmem:[%s379 + $0x30] sm:$0xff]
      %v515 = vld [vmem:[%s379 + $0x38] sm:$0xff]
      %v516 = vld [vmem:[%s379 + $0x40] sm:$0xff]
      %v517 = vld [vmem:[%s379 + $0x48] sm:$0xff]
      %v518 = vld [vmem:[%s379 + $0x50] sm:$0xff]
      %v519 = vld [vmem:[%s379 + $0x58] sm:$0xff]
      %v520 = vld [vmem:[%s379 + $0x60] sm:$0xff]
      %v521 = vld [vmem:[%s379 + $0x68] sm:$0xff]
      %v522 = vld [vmem:[%s379 + $0x70] sm:$0xff]
      %v523 = vld [vmem:[%s379 + $0x78] sm:$0xff]
      %v524 = vpack.c.bf16 %v509, %v508
      %v525 = vpack.c.bf16 %v511, %v510
      %v526 = vpack.c.bf16 %v513, %v512
      %v527 = vpack.c.bf16 %v515, %v514
      %v528 = vpack.c.bf16 %v517, %v516
      %v529 = vpack.c.bf16 %v519, %v518
      %v530 = vpack.c.bf16 %v521, %v520
      %v531 = vpack.c.bf16 %v523, %v522
      %v540 = vunpack.c.l.b16 %v524
      %v541 = vunpack.c.h.b16 %v524
      %v542 = vunpack.c.l.b16 %v525
      %v543 = vunpack.c.h.b16 %v525
      %v544 = vunpack.c.l.b16 %v526
      %v545 = vunpack.c.h.b16 %v526
      %v546 = vunpack.c.l.b16 %v527
      %v547 = vunpack.c.h.b16 %v527
      %v548 = vunpack.c.l.b16 %v528
      %v549 = vunpack.c.h.b16 %v528
      %v550 = vunpack.c.l.b16 %v529
      %v551 = vunpack.c.h.b16 %v529
      %v552 = vunpack.c.l.b16 %v530
      %v553 = vunpack.c.h.b16 %v530
      %v554 = vunpack.c.l.b16 %v531
      %v555 = vunpack.c.h.b16 %v531
      %v556 = vpack.c.b16 %v540, %v540
      %v557 = vpack.c.b16 %v541, %v541
      %v558 = vpack.c.b16 %v542, %v542
      %v559 = vpack.c.b16 %v543, %v543
      %v560 = vpack.c.b16 %v544, %v544
      %v561 = vpack.c.b16 %v545, %v545
      %v562 = vpack.c.b16 %v546, %v546
      %v563 = vpack.c.b16 %v547, %v547
      %v564 = vpack.c.b16 %v548, %v548
      %v565 = vpack.c.b16 %v549, %v549
      %v566 = vpack.c.b16 %v550, %v550
      %v567 = vpack.c.b16 %v551, %v551
      %v568 = vpack.c.b16 %v552, %v552
      %v569 = vpack.c.b16 %v553, %v553
      %v570 = vpack.c.b16 %v554, %v554
      %v571 = vpack.c.b16 %v555, %v555
      %vm572 = vsmask.f32 4368
      %vm573 = vmor %vm432, %vm572
      %v575 = vshrl.u32 %v556, 16
      %v577 = vrot.slane %v575, 7
      %v578 = vshll.u32 %v556, 16
      %v580 = vor.u32 %v577, %v578
      %v581 = vrot.slane %v577, 4
      %v583 = vshrl.u32 %v557, 16
      %v585 = vrot.slane %v583, 7
      %v586 = vshll.u32 %v557, 16
      %v588 = vor.u32 %v585, %v586
      %v589 = vsel %vm573, %v581, %v588
      %v590 = vrot.slane %v585, 4
      %v592 = vshrl.u32 %v558, 16
      %v594 = vrot.slane %v592, 7
      %v595 = vshll.u32 %v558, 16
      %v597 = vor.u32 %v594, %v595
      %v598 = vrot.slane %v594, 4
      %v600 = vshrl.u32 %v559, 16
      %v602 = vrot.slane %v600, 7
      %v603 = vshll.u32 %v559, 16
      %v605 = vor.u32 %v602, %v603
      %v606 = vsel %vm573, %v598, %v605
      %v607 = vrot.slane %v602, 4
      %v609 = vshrl.u32 %v560, 16
      %v611 = vrot.slane %v609, 7
      %v612 = vshll.u32 %v560, 16
      %v614 = vor.u32 %v611, %v612
      %v615 = vrot.slane %v611, 4
      %v617 = vshrl.u32 %v561, 16
      %v619 = vrot.slane %v617, 7
      %v620 = vshll.u32 %v561, 16
      %v622 = vor.u32 %v619, %v620
      %v623 = vsel %vm573, %v615, %v622
      %v624 = vrot.slane %v619, 4
      %v626 = vshrl.u32 %v562, 16
      %v628 = vrot.slane %v626, 7
      %v629 = vshll.u32 %v562, 16
      %v631 = vor.u32 %v628, %v629
      %v632 = vrot.slane %v628, 4
      %v634 = vshrl.u32 %v563, 16
      %v636 = vrot.slane %v634, 7
      %v637 = vshll.u32 %v563, 16
      %v639 = vor.u32 %v636, %v637
      %v640 = vsel %vm573, %v632, %v639
      %v641 = vrot.slane %v636, 4
      %v643 = vshrl.u32 %v564, 16
      %v645 = vrot.slane %v643, 7
      %v646 = vshll.u32 %v564, 16
      %v648 = vor.u32 %v645, %v646
      %v649 = vrot.slane %v645, 4
      %v651 = vshrl.u32 %v565, 16
      %v653 = vrot.slane %v651, 7
      %v654 = vshll.u32 %v565, 16
      %v656 = vor.u32 %v653, %v654
      %v657 = vsel %vm573, %v649, %v656
      %v658 = vrot.slane %v653, 4
      %v660 = vshrl.u32 %v566, 16
      %v662 = vrot.slane %v660, 7
      %v663 = vshll.u32 %v566, 16
      %v665 = vor.u32 %v662, %v663
      %v666 = vrot.slane %v662, 4
      %v668 = vshrl.u32 %v567, 16
      %v670 = vrot.slane %v668, 7
      %v671 = vshll.u32 %v567, 16
      %v673 = vor.u32 %v670, %v671
      %v674 = vsel %vm573, %v666, %v673
      %v675 = vrot.slane %v670, 4
      %v677 = vshrl.u32 %v568, 16
      %v679 = vrot.slane %v677, 7
      %v680 = vshll.u32 %v568, 16
      %v682 = vor.u32 %v679, %v680
      %v683 = vrot.slane %v679, 4
      %v685 = vshrl.u32 %v569, 16
      %v687 = vrot.slane %v685, 7
      %v688 = vshll.u32 %v569, 16
      %v690 = vor.u32 %v687, %v688
      %v691 = vsel %vm573, %v683, %v690
      %v692 = vrot.slane %v687, 4
      %v694 = vshrl.u32 %v570, 16
      %v696 = vrot.slane %v694, 7
      %v697 = vshll.u32 %v570, 16
      %v699 = vor.u32 %v696, %v697
      %v700 = vrot.slane %v696, 4
      %v702 = vshrl.u32 %v571, 16
      %v704 = vrot.slane %v702, 7
      %v705 = vshll.u32 %v571, 16
      %v707 = vor.u32 %v704, %v705
      %v708 = vsel %vm573, %v700, %v707
      %v709 = vrot.slane %v704, 4
      %s734 = scalar_lea.vmem [#allocation2], 32
      %vm735 = vcmask 27648
      %vm736 = vmand %vm735, %vm470
      %v737 = vld [vmem:[%s734] sm:$0xf]
      %v738 = vsel %vm736, %v580, %v737
      %739 = vst [vmem:[%s734] sm:$0xf] %v738
      %vm740 = vcmask 27648
      %741 = vst.msk [vmem:[%s734 + $0x4] sm:$0xf] %vm740, %v589
      %v742 = vld [vmem:[%s734 + $0x8] sm:$0x1]
      %v743 = vsel %vm433, %v590, %v742
      %744 = vst [vmem:[%s734 + $0x8] sm:$0x1] %v743
      %v745 = vld [vmem:[%s734 + $0x10] sm:$0xf]
      %v746 = vsel %vm736, %v597, %v745
      %747 = vst [vmem:[%s734 + $0x10] sm:$0xf] %v746
      %748 = vst.msk [vmem:[%s734 + $0x14] sm:$0xf] %vm740, %v606
      %v749 = vld [vmem:[%s734 + $0x18] sm:$0x1]
      %v750 = vsel %vm433, %v607, %v749
      %751 = vst [vmem:[%s734 + $0x18] sm:$0x1] %v750
      %v752 = vld [vmem:[%s734 + $0x20] sm:$0xf]
      %v753 = vsel %vm736, %v614, %v752
      %754 = vst [vmem:[%s734 + $0x20] sm:$0xf] %v753
      %755 = vst.msk [vmem:[%s734 + $0x24] sm:$0xf] %vm740, %v623
      %v756 = vld [vmem:[%s734 + $0x28] sm:$0x1]
      %v757 = vsel %vm433, %v624, %v756
      %758 = vst [vmem:[%s734 + $0x28] sm:$0x1] %v757
      %v759 = vld [vmem:[%s734 + $0x30] sm:$0xf]
      %v760 = vsel %vm736, %v631, %v759
      %761 = vst [vmem:[%s734 + $0x30] sm:$0xf] %v760
      %762 = vst.msk [vmem:[%s734 + $0x34] sm:$0xf] %vm740, %v640
      %v763 = vld [vmem:[%s734 + $0x38] sm:$0x1]
      %v764 = vsel %vm433, %v641, %v763
      %765 = vst [vmem:[%s734 + $0x38] sm:$0x1] %v764
      %v766 = vld [vmem:[%s734 + $0x40] sm:$0xf]
      %v767 = vsel %vm736, %v648, %v766
      %768 = vst [vmem:[%s734 + $0x40] sm:$0xf] %v767
      %769 = vst.msk [vmem:[%s734 + $0x44] sm:$0xf] %vm740, %v657
      %v770 = vld [vmem:[%s734 + $0x48] sm:$0x1]
      %v771 = vsel %vm433, %v658, %v770
      %772 = vst [vmem:[%s734 + $0x48] sm:$0x1] %v771
      %v773 = vld [vmem:[%s734 + $0x50] sm:$0xf]
      %v774 = vsel %vm736, %v665, %v773
      %775 = vst [vmem:[%s734 + $0x50] sm:$0xf] %v774
      %776 = vst.msk [vmem:[%s734 + $0x54] sm:$0xf] %vm740, %v674
      %v777 = vld [vmem:[%s734 + $0x58] sm:$0x1]
      %v778 = vsel %vm433, %v675, %v777
      %779 = vst [vmem:[%s734 + $0x58] sm:$0x1] %v778
      %v780 = vld [vmem:[%s734 + $0x60] sm:$0xf]
      %v781 = vsel %vm736, %v682, %v780
      %782 = vst [vmem:[%s734 + $0x60] sm:$0xf] %v781
      %783 = vst.msk [vmem:[%s734 + $0x64] sm:$0xf] %vm740, %v691
      %v784 = vld [vmem:[%s734 + $0x68] sm:$0x1]
      %v785 = vsel %vm433, %v692, %v784
      %786 = vst [vmem:[%s734 + $0x68] sm:$0x1] %v785
      %v787 = vld [vmem:[%s734 + $0x70] sm:$0xf]
      %v788 = vsel %vm736, %v699, %v787
      %789 = vst [vmem:[%s734 + $0x70] sm:$0xf] %v788
      %790 = vst.msk [vmem:[%s734 + $0x74] sm:$0xf] %vm740, %v708
      %v791 = vld [vmem:[%s734 + $0x78] sm:$0x1]
      %v792 = vsel %vm433, %v709, %v791
      %793 = vst [vmem:[%s734 + $0x78] sm:$0x1] %v792
      %p794 = scmp.eq.s32.totalorder %s22, 0
      // Predicated region
      $region45: #{tpu_custom_call.1} parent=43 // pred_check
        %p795 = pneg %p794
      $region46: #{tpu_custom_call.1} parent=43 // pred_check_branch
        %797 = sbr.rel (%p795) target = $region48
      $region47: #{tpu_custom_call.1} parent=43 // pred_region
        %v798 = vld [vmem:[#allocation2] sm:$0xf]
        %v799 = vsel %vm736, 0, %v798
        %800 = vst [vmem:[#allocation2] sm:$0xf] %v799
        %801 = vst.msk [vmem:[#allocation2 + $0x4] sm:$0xf] %vm740, 0
        %v802 = vld [vmem:[#allocation2 + $0x8] sm:$0x1]
        %v803 = vsel %vm433, 0, %v802
        %804 = vst [vmem:[#allocation2 + $0x8] sm:$0x1] %v803
        %v805 = vld [vmem:[#allocation2 + $0x10] sm:$0xf]
        %v806 = vsel %vm736, 0, %v805
        %807 = vst [vmem:[#allocation2 + $0x10] sm:$0xf] %v806
        %808 = vst.msk [vmem:[#allocation2 + $0x14] sm:$0xf] %vm740, 0
        %v809 = vld [vmem:[#allocation2 + $0x18] sm:$0x1]
        %v810 = vsel %vm433, 0, %v809
        %811 = vst [vmem:[#allocation2 + $0x18] sm:$0x1] %v810
      $region48: #{tpu_custom_call.1} parent=43 // pred_fallthru
        _
      %p812 = scmp.ne.s32.totalorder %s22, 0
      // Predicated region
      $region49: #{tpu_custom_call.1} parent=43 // pred_check
        %p813 = pneg %p812
      $region50: #{tpu_custom_call.1} parent=43 // pred_check_branch
        %815 = sbr.rel (%p813) target = $region52
      $region51: #{tpu_custom_call.1} parent=43 // pred_region
        %v816 = vld [vmem:[%s394] sm:$0xff]
        %v817 = vld [vmem:[%s394 + $0x8] sm:$0xff]
        %v818 = vld [vmem:[%s394 + $0x10] sm:$0xff]
        %v819 = vld [vmem:[%s394 + $0x18] sm:$0xff]
        %v820 = vpack.c.bf16 %v817, %v816
        %v821 = vpack.c.bf16 %v819, %v818
        %v824 = vunpack.c.l.b16 %v820
        %v825 = vunpack.c.h.b16 %v820
        %v826 = vunpack.c.l.b16 %v821
        %v827 = vunpack.c.h.b16 %v821
        %v828 = vpack.c.b16 %v824, %v824
        %v829 = vpack.c.b16 %v825, %v825
        %v830 = vpack.c.b16 %v826, %v826
        %v831 = vpack.c.b16 %v827, %v827
        %v833 = vshrl.u32 %v828, 16
        %v835 = vrot.slane %v833, 7
        %v836 = vshll.u32 %v828, 16
        %v838 = vor.u32 %v835, %v836
        %v839 = vrot.slane %v835, 4
        %v841 = vshrl.u32 %v829, 16
        %v843 = vrot.slane %v841, 7
        %v844 = vshll.u32 %v829, 16
        %v846 = vor.u32 %v843, %v844
        %v847 = vsel %vm573, %v839, %v846
        %v848 = vrot.slane %v843, 4
        %v850 = vshrl.u32 %v830, 16
        %v852 = vrot.slane %v850, 7
        %v853 = vshll.u32 %v830, 16
        %v855 = vor.u32 %v852, %v853
        %v856 = vrot.slane %v852, 4
        %v858 = vshrl.u32 %v831, 16
        %v860 = vrot.slane %v858, 7
        %v861 = vshll.u32 %v831, 16
        %v863 = vor.u32 %v860, %v861
        %v864 = vsel %vm573, %v856, %v863
        %v865 = vrot.slane %v860, 4
        %v872 = vld [vmem:[#allocation2] sm:$0xf]
        %v873 = vsel %vm736, %v838, %v872
        %874 = vst [vmem:[#allocation2] sm:$0xf] %v873
        %875 = vst.msk [vmem:[#allocation2 + $0x4] sm:$0xf] %vm740, %v847
        %v876 = vld [vmem:[#allocation2 + $0x8] sm:$0x1]
        %v877 = vsel %vm433, %v848, %v876
        %878 = vst [vmem:[#allocation2 + $0x8] sm:$0x1] %v877
        %v879 = vld [vmem:[#allocation2 + $0x10] sm:$0xf]
        %v880 = vsel %vm736, %v855, %v879
        %881 = vst [vmem:[#allocation2 + $0x10] sm:$0xf] %v880
        %882 = vst.msk [vmem:[#allocation2 + $0x14] sm:$0xf] %vm740, %v864
        %v883 = vld [vmem:[#allocation2 + $0x18] sm:$0x1]
        %v884 = vsel %vm433, %v865, %v883
        %885 = vst [vmem:[#allocation2 + $0x18] sm:$0x1] %v884
      $region52: #{tpu_custom_call.1} parent=43 // pred_fallthru
        _
      %p886 = scmp.eq.s32.totalorder %s22, 1
      // Predicated region
      $region53: #{tpu_custom_call.1} parent=43 // pred_check
        %p887 = pneg %p886
      $region54: #{tpu_custom_call.1} parent=43 // pred_check_branch
        %889 = sbr.rel (%p887) target = $region56
      $region55: #{tpu_custom_call.1} parent=43 // pred_region
        %s890 = scalar_lea.vmem [#allocation2], 160
        %v891 = vld [vmem:[%s890] sm:$0xf]
        %v892 = vsel %vm736, 0, %v891
        %893 = vst [vmem:[%s890] sm:$0xf] %v892
        %894 = vst.msk [vmem:[%s890 + $0x4] sm:$0xf] %vm740, 0
        %v895 = vld [vmem:[%s890 + $0x8] sm:$0x1]
        %v896 = vsel %vm433, 0, %v895
        %897 = vst [vmem:[%s890 + $0x8] sm:$0x1] %v896
        %v898 = vld [vmem:[%s890 + $0x10] sm:$0xf]
        %v899 = vsel %vm736, 0, %v898
        %900 = vst [vmem:[%s890 + $0x10] sm:$0xf] %v899
        %901 = vst.msk [vmem:[%s890 + $0x14] sm:$0xf] %vm740, 0
        %v902 = vld [vmem:[%s890 + $0x18] sm:$0x1]
        %v903 = vsel %vm433, 0, %v902
        %904 = vst [vmem:[%s890 + $0x18] sm:$0x1] %v903
      $region56: #{tpu_custom_call.1} parent=43 // pred_fallthru
        _
      %p905 = scmp.ne.s32.totalorder %s22, 1
      // Predicated region
      $region57: #{tpu_custom_call.1} parent=43 // pred_check
        %p906 = pneg %p905
      $region58: #{tpu_custom_call.1} parent=43 // pred_check_branch
        %908 = sbr.rel (%p906) target = $region60
      $region59: #{tpu_custom_call.1} parent=43 // pred_region
        %v909 = vld [vmem:[%s413] sm:$0xff]
        %v910 = vld [vmem:[%s413 + $0x8] sm:$0xff]
        %v911 = vld [vmem:[%s413 + $0x10] sm:$0xff]
        %v912 = vld [vmem:[%s413 + $0x18] sm:$0xff]
        %v913 = vpack.c.bf16 %v910, %v909
        %v914 = vpack.c.bf16 %v912, %v911
        %v917 = vunpack.c.l.b16 %v913
        %v918 = vunpack.c.h.b16 %v913
        %v919 = vunpack.c.l.b16 %v914
        %v920 = vunpack.c.h.b16 %v914
        %v921 = vpack.c.b16 %v917, %v917
        %v922 = vpack.c.b16 %v918, %v918
        %v923 = vpack.c.b16 %v919, %v919
        %v924 = vpack.c.b16 %v920, %v920
        %v926 = vshrl.u32 %v921, 16
        %v928 = vrot.slane %v926, 7
        %v929 = vshll.u32 %v921, 16
        %v931 = vor.u32 %v928, %v929
        %v932 = vrot.slane %v928, 4
        %v934 = vshrl.u32 %v922, 16
        %v936 = vrot.slane %v934, 7
        %v937 = vshll.u32 %v922, 16
        %v939 = vor.u32 %v936, %v937
        %v940 = vsel %vm573, %v932, %v939
        %v941 = vrot.slane %v936, 4
        %v943 = vshrl.u32 %v923, 16
        %v945 = vrot.slane %v943, 7
        %v946 = vshll.u32 %v923, 16
        %v948 = vor.u32 %v945, %v946
        %v949 = vrot.slane %v945, 4
        %v951 = vshrl.u32 %v924, 16
        %v953 = vrot.slane %v951, 7
        %v954 = vshll.u32 %v924, 16
        %v956 = vor.u32 %v953, %v954
        %v957 = vsel %vm573, %v949, %v956
        %v958 = vrot.slane %v953, 4
        %s965 = scalar_lea.vmem [#allocation2], 160
        %v966 = vld [vmem:[%s965] sm:$0xf]
        %v967 = vsel %vm736, %v931, %v966
        %968 = vst [vmem:[%s965] sm:$0xf] %v967
        %969 = vst.msk [vmem:[%s965 + $0x4] sm:$0xf] %vm740, %v940
        %v970 = vld [vmem:[%s965 + $0x8] sm:$0x1]
        %v971 = vsel %vm433, %v941, %v970
        %972 = vst [vmem:[%s965 + $0x8] sm:$0x1] %v971
        %v973 = vld [vmem:[%s965 + $0x10] sm:$0xf]
        %v974 = vsel %vm736, %v948, %v973
        %975 = vst [vmem:[%s965 + $0x10] sm:$0xf] %v974
        %976 = vst.msk [vmem:[%s965 + $0x14] sm:$0xf] %vm740, %v957
        %v977 = vld [vmem:[%s965 + $0x18] sm:$0x1]
        %v978 = vsel %vm433, %v958, %v977
        %979 = vst [vmem:[%s965 + $0x18] sm:$0x1] %v978
      $region60: #{tpu_custom_call.1} parent=43 // pred_fallthru
        _
      %v980 = vld [vmem:[#allocation2] sm:$0xf]
      %v981 = vld [vmem:[#allocation2 + $0x4] sm:$0xf]
      %v982 = vld [vmem:[#allocation2 + $0x10] sm:$0xf]
      %v983 = vld [vmem:[#allocation2 + $0x14] sm:$0xf]
      %v984 = vld [vmem:[#allocation2 + $0x20] sm:$0xf]
      %v985 = vld [vmem:[#allocation2 + $0x24] sm:$0xf]
      %v986 = vld [vmem:[#allocation2 + $0x30] sm:$0xf]
      %v987 = vld [vmem:[#allocation2 + $0x34] sm:$0xf]
      %v988 = vld [vmem:[#allocation2 + $0x40] sm:$0xf]
      %v989 = vld [vmem:[#allocation2 + $0x44] sm:$0xf]
      %v990 = vld [vmem:[#allocation2 + $0x50] sm:$0xf]
      %v991 = vld [vmem:[#allocation2 + $0x54] sm:$0xf]
      %v992 = vld [vmem:[#allocation2 + $0x60] sm:$0xf]
      %v993 = vld [vmem:[#allocation2 + $0x64] sm:$0xf]
      %v994 = vld [vmem:[#allocation2 + $0x70] sm:$0xf]
      %v995 = vld [vmem:[#allocation2 + $0x74] sm:$0xf]
      %v996 = vld [vmem:[#allocation2 + $0x80] sm:$0xf]
      %v997 = vld [vmem:[#allocation2 + $0x84] sm:$0xf]
      %v998 = vld [vmem:[#allocation2 + $0x90] sm:$0xf]
      %v999 = vld [vmem:[#allocation2 + $0x94] sm:$0xf]
      %v1000 = vld [vmem:[#allocation2 + $0x8] sm:$0x1]
      %v1001 = vld [vmem:[#allocation2 + $0x18] sm:$0x1]
      %v1002 = vld [vmem:[#allocation2 + $0x28] sm:$0x1]
      %v1003 = vld [vmem:[#allocation2 + $0x38] sm:$0x1]
      %v1004 = vld [vmem:[#allocation2 + $0x48] sm:$0x1]
      %v1005 = vld [vmem:[#allocation2 + $0x58] sm:$0x1]
      %v1006 = vld [vmem:[#allocation2 + $0x68] sm:$0x1]
      %v1007 = vld [vmem:[#allocation2 + $0x78] sm:$0x1]
      %v1008 = vld [vmem:[#allocation2 + $0x88] sm:$0x1]
      %v1009 = vld [vmem:[#allocation2 + $0x98] sm:$0x1]
      %vm1010 = vsmask.f32 3328
      %vm1011 = vsmask.f32 7440
      %vm1012 = vmor %vm1010, %vm1011
      %v1014 = vshrl.u32 %v980, 16
      %v1016 = vrot.slane %v1014, 4
      %v1017 = vshll.u32 %v980, 16
      %v1019 = vrot.slane %v1017, 5
      %v1020 = vor.u32 %v1016, %v1019
      %v1021 = vrot.slane %v1020, 4
      %v1023 = vshll.u32 %v981, 16
      %v1025 = vrot.slane %v1023, 5
      %v1026 = vsel %vm1012, %v1021, %v1025
      %v1027 = vshrl.u32 %v981, 16
      %v1029 = vrot.slane %v1027, 4
      %v1030 = vor.u32 %v1029, %v1025
      %v1031 = vrot.slane %v1030, 4
      %v1033 = vshll.u32 %v1000, 16
      %v1035 = vrot.slane %v1033, 5
      %v1036 = vsel %vm1012, %v1031, %v1035
      %v1038 = vshrl.u32 %v982, 16
      %v1040 = vrot.slane %v1038, 4
      %v1041 = vshll.u32 %v982, 16
      %v1043 = vrot.slane %v1041, 5
      %v1044 = vor.u32 %v1040, %v1043
      %v1045 = vrot.slane %v1044, 4
      %v1047 = vshll.u32 %v983, 16
      %v1049 = vrot.slane %v1047, 5
      %v1050 = vsel %vm1012, %v1045, %v1049
      %v1051 = vshrl.u32 %v983, 16
      %v1053 = vrot.slane %v1051, 4
      %v1054 = vor.u32 %v1053, %v1049
      %v1055 = vrot.slane %v1054, 4
      %v1057 = vshll.u32 %v1001, 16
      %v1059 = vrot.slane %v1057, 5
      %v1060 = vsel %vm1012, %v1055, %v1059
      %v1062 = vshrl.u32 %v984, 16
      %v1064 = vrot.slane %v1062, 4
      %v1065 = vshll.u32 %v984, 16
      %v1067 = vrot.slane %v1065, 5
      %v1068 = vor.u32 %v1064, %v1067
      %v1069 = vrot.slane %v1068, 4
      %v1071 = vshll.u32 %v985, 16
      %v1073 = vrot.slane %v1071, 5
      %v1074 = vsel %vm1012, %v1069, %v1073
      %v1075 = vshrl.u32 %v985, 16
      %v1077 = vrot.slane %v1075, 4
      %v1078 = vor.u32 %v1077, %v1073
      %v1079 = vrot.slane %v1078, 4
      %v1081 = vshll.u32 %v1002, 16
      %v1083 = vrot.slane %v1081, 5
      %v1084 = vsel %vm1012, %v1079, %v1083
      %v1086 = vshrl.u32 %v986, 16
      %v1088 = vrot.slane %v1086, 4
      %v1089 = vshll.u32 %v986, 16
      %v1091 = vrot.slane %v1089, 5
      %v1092 = vor.u32 %v1088, %v1091
      %v1093 = vrot.slane %v1092, 4
      %v1095 = vshll.u32 %v987, 16
      %v1097 = vrot.slane %v1095, 5
      %v1098 = vsel %vm1012, %v1093, %v1097
      %v1099 = vshrl.u32 %v987, 16
      %v1101 = vrot.slane %v1099, 4
      %v1102 = vor.u32 %v1101, %v1097
      %v1103 = vrot.slane %v1102, 4
      %v1105 = vshll.u32 %v1003, 16
      %v1107 = vrot.slane %v1105, 5
      %v1108 = vsel %vm1012, %v1103, %v1107
      %v1110 = vshrl.u32 %v988, 16
      %v1112 = vrot.slane %v1110, 4
      %v1113 = vshll.u32 %v988, 16
      %v1115 = vrot.slane %v1113, 5
      %v1116 = vor.u32 %v1112, %v1115
      %v1117 = vrot.slane %v1116, 4
      %v1119 = vshll.u32 %v989, 16
      %v1121 = vrot.slane %v1119, 5
      %v1122 = vsel %vm1012, %v1117, %v1121
      %v1123 = vshrl.u32 %v989, 16
      %v1125 = vrot.slane %v1123, 4
      %v1126 = vor.u32 %v1125, %v1121
      %v1127 = vrot.slane %v1126, 4
      %v1129 = vshll.u32 %v1004, 16
      %v1131 = vrot.slane %v1129, 5
      %v1132 = vsel %vm1012, %v1127, %v1131
      %v1134 = vshrl.u32 %v990, 16
      %v1136 = vrot.slane %v1134, 4
      %v1137 = vshll.u32 %v990, 16
      %v1139 = vrot.slane %v1137, 5
      %v1140 = vor.u32 %v1136, %v1139
      %v1141 = vrot.slane %v1140, 4
      %v1143 = vshll.u32 %v991, 16
      %v1145 = vrot.slane %v1143, 5
      %v1146 = vsel %vm1012, %v1141, %v1145
      %v1147 = vshrl.u32 %v991, 16
      %v1149 = vrot.slane %v1147, 4
      %v1150 = vor.u32 %v1149, %v1145
      %v1151 = vrot.slane %v1150, 4
      %v1153 = vshll.u32 %v1005, 16
      %v1155 = vrot.slane %v1153, 5
      %v1156 = vsel %vm1012, %v1151, %v1155
      %v1158 = vshrl.u32 %v992, 16
      %v1160 = vrot.slane %v1158, 4
      %v1161 = vshll.u32 %v992, 16
      %v1163 = vrot.slane %v1161, 5
      %v1164 = vor.u32 %v1160, %v1163
      %v1165 = vrot.slane %v1164, 4
      %v1167 = vshll.u32 %v993, 16
      %v1169 = vrot.slane %v1167, 5
      %v1170 = vsel %vm1012, %v1165, %v1169
      %v1171 = vshrl.u32 %v993, 16
      %v1173 = vrot.slane %v1171, 4
      %v1174 = vor.u32 %v1173, %v1169
      %v1175 = vrot.slane %v1174, 4
      %v1177 = vshll.u32 %v1006, 16
      %v1179 = vrot.slane %v1177, 5
      %v1180 = vsel %vm1012, %v1175, %v1179
      %v1182 = vshrl.u32 %v994, 16
      %v1184 = vrot.slane %v1182, 4
      %v1185 = vshll.u32 %v994, 16
      %v1187 = vrot.slane %v1185, 5
      %v1188 = vor.u32 %v1184, %v1187
      %v1189 = vrot.slane %v1188, 4
      %v1191 = vshll.u32 %v995, 16
      %v1193 = vrot.slane %v1191, 5
      %v1194 = vsel %vm1012, %v1189, %v1193
      %v1195 = vshrl.u32 %v995, 16
      %v1197 = vrot.slane %v1195, 4
      %v1198 = vor.u32 %v1197, %v1193
      %v1199 = vrot.slane %v1198, 4
      %v1201 = vshll.u32 %v1007, 16
      %v1203 = vrot.slane %v1201, 5
      %v1204 = vsel %vm1012, %v1199, %v1203
      %v1206 = vshrl.u32 %v996, 16
      %v1208 = vrot.slane %v1206, 4
      %v1209 = vshll.u32 %v996, 16
      %v1211 = vrot.slane %v1209, 5
      %v1212 = vor.u32 %v1208, %v1211
      %v1213 = vrot.slane %v1212, 4
      %v1215 = vshll.u32 %v997, 16
      %v1217 = vrot.slane %v1215, 5
      %v1218 = vsel %vm1012, %v1213, %v1217
      %v1219 = vshrl.u32 %v997, 16
      %v1221 = vrot.slane %v1219, 4
      %v1222 = vor.u32 %v1221, %v1217
      %v1223 = vrot.slane %v1222, 4
      %v1225 = vshll.u32 %v1008, 16
      %v1227 = vrot.slane %v1225, 5
      %v1228 = vsel %vm1012, %v1223, %v1227
      %v1230 = vshrl.u32 %v998, 16
      %v1232 = vrot.slane %v1230, 4
      %v1233 = vshll.u32 %v998, 16
      %v1235 = vrot.slane %v1233, 5
      %v1236 = vor.u32 %v1232, %v1235
      %v1237 = vrot.slane %v1236, 4
      %v1239 = vshll.u32 %v999, 16
      %v1241 = vrot.slane %v1239, 5
      %v1242 = vsel %vm1012, %v1237, %v1241
      %v1243 = vshrl.u32 %v999, 16
      %v1245 = vrot.slane %v1243, 4
      %v1246 = vor.u32 %v1245, %v1241
      %v1247 = vrot.slane %v1246, 4
      %v1249 = vshll.u32 %v1009, 16
      %v1251 = vrot.slane %v1249, 5
      %v1252 = vsel %vm1012, %v1247, %v1251
      %v1253 = vld [vmem:[#allocation2] sm:$0xe]
      %v1254 = vld [vmem:[#allocation2 + $0x10] sm:$0xe]
      %v1255 = vld [vmem:[#allocation2 + $0x20] sm:$0xe]
      %v1256 = vld [vmem:[#allocation2 + $0x30] sm:$0xe]
      %v1257 = vld [vmem:[#allocation2 + $0x40] sm:$0xe]
      %v1258 = vld [vmem:[#allocation2 + $0x50] sm:$0xe]
      %v1259 = vld [vmem:[#allocation2 + $0x60] sm:$0xe]
      %v1260 = vld [vmem:[#allocation2 + $0x70] sm:$0xe]
      %v1261 = vld [vmem:[#allocation2 + $0x80] sm:$0xe]
      %v1262 = vld [vmem:[#allocation2 + $0x90] sm:$0xe]
      %vm1293 = vcmask 1042432
      %vm1294 = vcmask 1046532
      %vm1295 = vmor %vm1293, %vm1294
      %v1296 = vrot.slane %v1253, 5
      %v1297 = vrot.slane %v1296, 4
      %v1298 = vrot.slane %v981, 5
      %v1299 = vsel %vm1295, %v1297, %v1298
      %v1300 = vrot.slane %v1298, 4
      %v1301 = vrot.slane %v1000, 5
      %v1302 = vsel %vm1295, %v1300, %v1301
      %v1303 = vrot.slane %v1254, 5
      %v1304 = vrot.slane %v1303, 4
      %v1305 = vrot.slane %v983, 5
      %v1306 = vsel %vm1295, %v1304, %v1305
      %v1307 = vrot.slane %v1305, 4
      %v1308 = vrot.slane %v1001, 5
      %v1309 = vsel %vm1295, %v1307, %v1308
      %v1310 = vrot.slane %v1255, 5
      %v1311 = vrot.slane %v1310, 4
      %v1312 = vrot.slane %v985, 5
      %v1313 = vsel %vm1295, %v1311, %v1312
      %v1314 = vrot.slane %v1312, 4
      %v1315 = vrot.slane %v1002, 5
      %v1316 = vsel %vm1295, %v1314, %v1315
      %v1317 = vrot.slane %v1256, 5
      %v1318 = vrot.slane %v1317, 4
      %v1319 = vrot.slane %v987, 5
      %v1320 = vsel %vm1295, %v1318, %v1319
      %v1321 = vrot.slane %v1319, 4
      %v1322 = vrot.slane %v1003, 5
      %v1323 = vsel %vm1295, %v1321, %v1322
      %v1324 = vrot.slane %v1257, 5
      %v1325 = vrot.slane %v1324, 4
      %v1326 = vrot.slane %v989, 5
      %v1327 = vsel %vm1295, %v1325, %v1326
      %v1328 = vrot.slane %v1326, 4
      %v1329 = vrot.slane %v1004, 5
      %v1330 = vsel %vm1295, %v1328, %v1329
      %v1331 = vrot.slane %v1258, 5
      %v1332 = vrot.slane %v1331, 4
      %v1333 = vrot.slane %v991, 5
      %v1334 = vsel %vm1295, %v1332, %v1333
      %v1335 = vrot.slane %v1333, 4
      %v1336 = vrot.slane %v1005, 5
      %v1337 = vsel %vm1295, %v1335, %v1336
      %v1338 = vrot.slane %v1259, 5
      %v1339 = vrot.slane %v1338, 4
      %v1340 = vrot.slane %v993, 5
      %v1341 = vsel %vm1295, %v1339, %v1340
      %v1342 = vrot.slane %v1340, 4
      %v1343 = vrot.slane %v1006, 5
      %v1344 = vsel %vm1295, %v1342, %v1343
      %v1345 = vrot.slane %v1260, 5
      %v1346 = vrot.slane %v1345, 4
      %v1347 = vrot.slane %v995, 5
      %v1348 = vsel %vm1295, %v1346, %v1347
      %v1349 = vrot.slane %v1347, 4
      %v1350 = vrot.slane %v1007, 5
      %v1351 = vsel %vm1295, %v1349, %v1350
      %v1352 = vrot.slane %v1261, 5
      %v1353 = vrot.slane %v1352, 4
      %v1354 = vrot.slane %v997, 5
      %v1355 = vsel %vm1295, %v1353, %v1354
      %v1356 = vrot.slane %v1354, 4
      %v1357 = vrot.slane %v1008, 5
      %v1358 = vsel %vm1295, %v1356, %v1357
      %v1359 = vrot.slane %v1262, 5
      %v1360 = vrot.slane %v1359, 4
      %v1361 = vrot.slane %v999, 5
      %v1362 = vsel %vm1295, %v1360, %v1361
      %v1363 = vrot.slane %v1361, 4
      %v1364 = vrot.slane %v1009, 5
      %v1365 = vsel %vm1295, %v1363, %v1364
      %v1376 = vunpack.c.l.b16 %v980
      %v1377 = vunpack.c.l.b16 %v981
      %v1378 = vunpack.c.l.b16 %v982
      %v1379 = vunpack.c.l.b16 %v983
      %v1380 = vunpack.c.l.b16 %v984
      %v1381 = vunpack.c.l.b16 %v985
      %v1382 = vunpack.c.l.b16 %v986
      %v1383 = vunpack.c.l.b16 %v987
      %v1384 = vunpack.c.l.b16 %v988
      %v1385 = vunpack.c.l.b16 %v989
      %v1386 = vunpack.c.l.b16 %v990
      %v1387 = vunpack.c.l.b16 %v991
      %v1388 = vunpack.c.l.b16 %v992
      %v1389 = vunpack.c.l.b16 %v993
      %v1390 = vunpack.c.l.b16 %v994
      %v1391 = vunpack.c.l.b16 %v995
      %v1392 = vunpack.c.l.b16 %v996
      %v1393 = vunpack.c.l.b16 %v997
      %v1394 = vunpack.c.l.b16 %v998
      %v1395 = vunpack.c.l.b16 %v999
      %v1396 = vpack.c.b16 %v1377, %v1376
      %v1397 = vpack.c.b16 %v1379, %v1378
      %v1398 = vpack.c.b16 %v1381, %v1380
      %v1399 = vpack.c.b16 %v1383, %v1382
      %v1400 = vpack.c.b16 %v1385, %v1384
      %v1401 = vpack.c.b16 %v1387, %v1386
      %v1402 = vpack.c.b16 %v1389, %v1388
      %v1403 = vpack.c.b16 %v1391, %v1390
      %v1404 = vpack.c.b16 %v1393, %v1392
      %v1405 = vpack.c.b16 %v1395, %v1394
      %v1406 = vunpack.c.l.b16 %v1026
      %v1407 = vunpack.c.l.b16 %v1036
      %v1408 = vunpack.c.l.b16 %v1050
      %v1409 = vunpack.c.l.b16 %v1060
      %v1410 = vunpack.c.l.b16 %v1074
      %v1411 = vunpack.c.l.b16 %v1084
      %v1412 = vunpack.c.l.b16 %v1098
      %v1413 = vunpack.c.l.b16 %v1108
      %v1414 = vunpack.c.l.b16 %v1122
      %v1415 = vunpack.c.l.b16 %v1132
      %v1416 = vunpack.c.l.b16 %v1146
      %v1417 = vunpack.c.l.b16 %v1156
      %v1418 = vunpack.c.l.b16 %v1170
      %v1419 = vunpack.c.l.b16 %v1180
      %v1420 = vunpack.c.l.b16 %v1194
      %v1421 = vunpack.c.l.b16 %v1204
      %v1422 = vunpack.c.l.b16 %v1218
      %v1423 = vunpack.c.l.b16 %v1228
      %v1424 = vunpack.c.l.b16 %v1242
      %v1425 = vunpack.c.l.b16 %v1252
      %v1426 = vpack.c.b16 %v1407, %v1406
      %v1427 = vpack.c.b16 %v1409, %v1408
      %v1428 = vpack.c.b16 %v1411, %v1410
      %v1429 = vpack.c.b16 %v1413, %v1412
      %v1430 = vpack.c.b16 %v1415, %v1414
      %v1431 = vpack.c.b16 %v1417, %v1416
      %v1432 = vpack.c.b16 %v1419, %v1418
      %v1433 = vpack.c.b16 %v1421, %v1420
      %v1434 = vpack.c.b16 %v1423, %v1422
      %v1435 = vpack.c.b16 %v1425, %v1424
      %1436 = vrot.lane.b32.xlu0 %v1426, 4
      %v1437 = vpop.permute.xlu0 %1436
      %1438 = vrot.lane.b32.xlu0 %v1427, 4
      %v1439 = vpop.permute.xlu0 %1438
      %1440 = vrot.lane.b32.xlu0 %v1428, 4
      %v1441 = vpop.permute.xlu0 %1440
      %1442 = vrot.lane.b32.xlu0 %v1429, 4
      %v1443 = vpop.permute.xlu0 %1442
      %1444 = vrot.lane.b32.xlu0 %v1430, 4
      %v1445 = vpop.permute.xlu0 %1444
      %1446 = vrot.lane.b32.xlu0 %v1431, 4
      %v1447 = vpop.permute.xlu0 %1446
      %1448 = vrot.lane.b32.xlu0 %v1432, 4
      %v1449 = vpop.permute.xlu0 %1448
      %1450 = vrot.lane.b32.xlu0 %v1433, 4
      %v1451 = vpop.permute.xlu0 %1450
      %1452 = vrot.lane.b32.xlu0 %v1434, 4
      %v1453 = vpop.permute.xlu0 %1452
      %1454 = vrot.lane.b32.xlu0 %v1435, 4
      %v1455 = vpop.permute.xlu0 %1454
      %v1456 = vunpack.c.l.b16 %v1299
      %v1457 = vunpack.c.l.b16 %v1302
      %v1458 = vunpack.c.l.b16 %v1306
      %v1459 = vunpack.c.l.b16 %v1309
      %v1460 = vunpack.c.l.b16 %v1313
      %v1461 = vunpack.c.l.b16 %v1316
      %v1462 = vunpack.c.l.b16 %v1320
      %v1463 = vunpack.c.l.b16 %v1323
      %v1464 = vunpack.c.l.b16 %v1327
      %v1465 = vunpack.c.l.b16 %v1330
      %v1466 = vunpack.c.l.b16 %v1334
      %v1467 = vunpack.c.l.b16 %v1337
      %v1468 = vunpack.c.l.b16 %v1341
      %v1469 = vunpack.c.l.b16 %v1344
      %v1470 = vunpack.c.l.b16 %v1348
      %v1471 = vunpack.c.l.b16 %v1351
      %v1472 = vunpack.c.l.b16 %v1355
      %v1473 = vunpack.c.l.b16 %v1358
      %v1474 = vunpack.c.l.b16 %v1362
      %v1475 = vunpack.c.l.b16 %v1365
      %v1476 = vpack.c.b16 %v1457, %v1456
      %v1477 = vpack.c.b16 %v1459, %v1458
      %v1478 = vpack.c.b16 %v1461, %v1460
      %v1479 = vpack.c.b16 %v1463, %v1462
      %v1480 = vpack.c.b16 %v1465, %v1464
      %v1481 = vpack.c.b16 %v1467, %v1466
      %v1482 = vpack.c.b16 %v1469, %v1468
      %v1483 = vpack.c.b16 %v1471, %v1470
      %v1484 = vpack.c.b16 %v1473, %v1472
      %v1485 = vpack.c.b16 %v1475, %v1474
      %1486 = vrot.lane.b32.xlu0 %v1476, 8
      %v1487 = vpop.permute.xlu0 %1486
      %1488 = vrot.lane.b32.xlu0 %v1477, 8
      %v1489 = vpop.permute.xlu0 %1488
      %1490 = vrot.lane.b32.xlu0 %v1478, 8
      %v1491 = vpop.permute.xlu0 %1490
      %1492 = vrot.lane.b32.xlu0 %v1479, 8
      %v1493 = vpop.permute.xlu0 %1492
      %1494 = vrot.lane.b32.xlu0 %v1480, 8
      %v1495 = vpop.permute.xlu0 %1494
      %1496 = vrot.lane.b32.xlu0 %v1481, 8
      %v1497 = vpop.permute.xlu0 %1496
      %1498 = vrot.lane.b32.xlu0 %v1482, 8
      %v1499 = vpop.permute.xlu0 %1498
      %1500 = vrot.lane.b32.xlu0 %v1483, 8
      %v1501 = vpop.permute.xlu0 %1500
      %1502 = vrot.lane.b32.xlu0 %v1484, 8
      %v1503 = vpop.permute.xlu0 %1502
      %1504 = vrot.lane.b32.xlu0 %v1485, 8
      %v1505 = vpop.permute.xlu0 %1504
      %vm1506 = vcmask 31744
      %v1509 = vsel %vm1506, %v1396, %v1437
      %v1512 = vsel %vm1506, %v1397, %v1439
      %v1515 = vsel %vm1506, %v1398, %v1441
      %v1518 = vsel %vm1506, %v1399, %v1443
      %v1521 = vsel %vm1506, %v1400, %v1445
      %v1524 = vsel %vm1506, %v1401, %v1447
      %v1527 = vsel %vm1506, %v1402, %v1449
      %v1530 = vsel %vm1506, %v1403, %v1451
      %v1533 = vsel %vm1506, %v1404, %v1453
      %v1536 = vsel %vm1506, %v1405, %v1455
      %vm1537 = vcmask 64512
      %v1539 = vsel %vm1537, %v1509, %v1487
      %v1541 = vsel %vm1537, %v1512, %v1489
      %v1543 = vsel %vm1537, %v1515, %v1491
      %v1545 = vsel %vm1537, %v1518, %v1493
      %v1547 = vsel %vm1537, %v1521, %v1495
      %v1549 = vsel %vm1537, %v1524, %v1497
      %v1551 = vsel %vm1537, %v1527, %v1499
      %v1553 = vsel %vm1537, %v1530, %v1501
      %v1555 = vsel %vm1537, %v1533, %v1503
      %v1557 = vsel %vm1537, %v1536, %v1505
      %v1558 = vld [vmem:[%s3] sm:$0xf]
      %v1559 = vld [vmem:[%s3 + $0x4] sm:$0x3]
      %s1560 = scalar_lea.vmem [#allocation2], 16
      %v1561 = vld [vmem:[%s1560] sm:$0xf]
      %v1562 = vld [vmem:[%s1560 + $0x4] sm:$0xf]
      %v1563 = vld [vmem:[%s1560 + $0x10] sm:$0xf]
      %v1564 = vld [vmem:[%s1560 + $0x14] sm:$0xf]
      %v1565 = vld [vmem:[%s1560 + $0x20] sm:$0xf]
      %v1566 = vld [vmem:[%s1560 + $0x24] sm:$0xf]
      %v1567 = vld [vmem:[%s1560 + $0x30] sm:$0xf]
      %v1568 = vld [vmem:[%s1560 + $0x34] sm:$0xf]
      %v1569 = vld [vmem:[%s1560 + $0x40] sm:$0xf]
      %v1570 = vld [vmem:[%s1560 + $0x44] sm:$0xf]
      %v1571 = vld [vmem:[%s1560 + $0x50] sm:$0xf]
      %v1572 = vld [vmem:[%s1560 + $0x54] sm:$0xf]
      %v1573 = vld [vmem:[%s1560 + $0x60] sm:$0xf]
      %v1574 = vld [vmem:[%s1560 + $0x64] sm:$0xf]
      %v1575 = vld [vmem:[%s1560 + $0x70] sm:$0xf]
      %v1576 = vld [vmem:[%s1560 + $0x74] sm:$0xf]
      %v1577 = vld [vmem:[%s1560 + $0x80] sm:$0xf]
      %v1578 = vld [vmem:[%s1560 + $0x84] sm:$0xf]
      %v1579 = vld [vmem:[%s1560 + $0x90] sm:$0xf]
      %v1580 = vld [vmem:[%s1560 + $0x94] sm:$0xf]
      %v1581 = vld [vmem:[%s1560 + $0x8] sm:$0x1]
      %v1582 = vld [vmem:[%s1560 + $0x18] sm:$0x1]
      %v1583 = vld [vmem:[%s1560 + $0x28] sm:$0x1]
      %v1584 = vld [vmem:[%s1560 + $0x38] sm:$0x1]
      %v1585 = vld [vmem:[%s1560 + $0x48] sm:$0x1]
      %v1586 = vld [vmem:[%s1560 + $0x58] sm:$0x1]
      %v1587 = vld [vmem:[%s1560 + $0x68] sm:$0x1]
      %v1588 = vld [vmem:[%s1560 + $0x78] sm:$0x1]
      %v1589 = vld [vmem:[%s1560 + $0x88] sm:$0x1]
      %v1590 = vld [vmem:[%s1560 + $0x98] sm:$0x1]
      %v1592 = vshrl.u32 %v1561, 16
      %v1594 = vrot.slane %v1592, 4
      %v1595 = vshll.u32 %v1561, 16
      %v1597 = vrot.slane %v1595, 5
      %v1598 = vor.u32 %v1594, %v1597
      %v1599 = vrot.slane %v1598, 4
      %v1601 = vshll.u32 %v1562, 16
      %v1603 = vrot.slane %v1601, 5
      %v1604 = vsel %vm1012, %v1599, %v1603
      %v1605 = vshrl.u32 %v1562, 16
      %v1607 = vrot.slane %v1605, 4
      %v1608 = vor.u32 %v1607, %v1603
      %v1609 = vrot.slane %v1608, 4
      %v1611 = vshll.u32 %v1581, 16
      %v1613 = vrot.slane %v1611, 5
      %v1614 = vsel %vm1012, %v1609, %v1613
      %v1616 = vshrl.u32 %v1563, 16
      %v1618 = vrot.slane %v1616, 4
      %v1619 = vshll.u32 %v1563, 16
      %v1621 = vrot.slane %v1619, 5
      %v1622 = vor.u32 %v1618, %v1621
      %v1623 = vrot.slane %v1622, 4
      %v1625 = vshll.u32 %v1564, 16
      %v1627 = vrot.slane %v1625, 5
      %v1628 = vsel %vm1012, %v1623, %v1627
      %v1629 = vshrl.u32 %v1564, 16
      %v1631 = vrot.slane %v1629, 4
      %v1632 = vor.u32 %v1631, %v1627
      %v1633 = vrot.slane %v1632, 4
      %v1635 = vshll.u32 %v1582, 16
      %v1637 = vrot.slane %v1635, 5
      %v1638 = vsel %vm1012, %v1633, %v1637
      %v1640 = vshrl.u32 %v1565, 16
      %v1642 = vrot.slane %v1640, 4
      %v1643 = vshll.u32 %v1565, 16
      %v1645 = vrot.slane %v1643, 5
      %v1646 = vor.u32 %v1642, %v1645
      %v1647 = vrot.slane %v1646, 4
      %v1649 = vshll.u32 %v1566, 16
      %v1651 = vrot.slane %v1649, 5
      %v1652 = vsel %vm1012, %v1647, %v1651
      %v1653 = vshrl.u32 %v1566, 16
      %v1655 = vrot.slane %v1653, 4
      %v1656 = vor.u32 %v1655, %v1651
      %v1657 = vrot.slane %v1656, 4
      %v1659 = vshll.u32 %v1583, 16
      %v1661 = vrot.slane %v1659, 5
      %v1662 = vsel %vm1012, %v1657, %v1661
      %v1664 = vshrl.u32 %v1567, 16
      %v1666 = vrot.slane %v1664, 4
      %v1667 = vshll.u32 %v1567, 16
      %v1669 = vrot.slane %v1667, 5
      %v1670 = vor.u32 %v1666, %v1669
      %v1671 = vrot.slane %v1670, 4
      %v1673 = vshll.u32 %v1568, 16
      %v1675 = vrot.slane %v1673, 5
      %v1676 = vsel %vm1012, %v1671, %v1675
      %v1677 = vshrl.u32 %v1568, 16
      %v1679 = vrot.slane %v1677, 4
      %v1680 = vor.u32 %v1679, %v1675
      %v1681 = vrot.slane %v1680, 4
      %v1683 = vshll.u32 %v1584, 16
      %v1685 = vrot.slane %v1683, 5
      %v1686 = vsel %vm1012, %v1681, %v1685
      %v1688 = vshrl.u32 %v1569, 16
      %v1690 = vrot.slane %v1688, 4
      %v1691 = vshll.u32 %v1569, 16
      %v1693 = vrot.slane %v1691, 5
      %v1694 = vor.u32 %v1690, %v1693
      %v1695 = vrot.slane %v1694, 4
      %v1697 = vshll.u32 %v1570, 16
      %v1699 = vrot.slane %v1697, 5
      %v1700 = vsel %vm1012, %v1695, %v1699
      %v1701 = vshrl.u32 %v1570, 16
      %v1703 = vrot.slane %v1701, 4
      %v1704 = vor.u32 %v1703, %v1699
      %v1705 = vrot.slane %v1704, 4
      %v1707 = vshll.u32 %v1585, 16
      %v1709 = vrot.slane %v1707, 5
      %v1710 = vsel %vm1012, %v1705, %v1709
      %v1712 = vshrl.u32 %v1571, 16
      %v1714 = vrot.slane %v1712, 4
      %v1715 = vshll.u32 %v1571, 16
      %v1717 = vrot.slane %v1715, 5
      %v1718 = vor.u32 %v1714, %v1717
      %v1719 = vrot.slane %v1718, 4
      %v1721 = vshll.u32 %v1572, 16
      %v1723 = vrot.slane %v1721, 5
      %v1724 = vsel %vm1012, %v1719, %v1723
      %v1725 = vshrl.u32 %v1572, 16
      %v1727 = vrot.slane %v1725, 4
      %v1728 = vor.u32 %v1727, %v1723
      %v1729 = vrot.slane %v1728, 4
      %v1731 = vshll.u32 %v1586, 16
      %v1733 = vrot.slane %v1731, 5
      %v1734 = vsel %vm1012, %v1729, %v1733
      %v1736 = vshrl.u32 %v1573, 16
      %v1738 = vrot.slane %v1736, 4
      %v1739 = vshll.u32 %v1573, 16
      %v1741 = vrot.slane %v1739, 5
      %v1742 = vor.u32 %v1738, %v1741
      %v1743 = vrot.slane %v1742, 4
      %v1745 = vshll.u32 %v1574, 16
      %v1747 = vrot.slane %v1745, 5
      %v1748 = vsel %vm1012, %v1743, %v1747
      %v1749 = vshrl.u32 %v1574, 16
      %v1751 = vrot.slane %v1749, 4
      %v1752 = vor.u32 %v1751, %v1747
      %v1753 = vrot.slane %v1752, 4
      %v1755 = vshll.u32 %v1587, 16
      %v1757 = vrot.slane %v1755, 5
      %v1758 = vsel %vm1012, %v1753, %v1757
      %v1760 = vshrl.u32 %v1575, 16
      %v1762 = vrot.slane %v1760, 4
      %v1763 = vshll.u32 %v1575, 16
      %v1765 = vrot.slane %v1763, 5
      %v1766 = vor.u32 %v1762, %v1765
      %v1767 = vrot.slane %v1766, 4
      %v1769 = vshll.u32 %v1576, 16
      %v1771 = vrot.slane %v1769, 5
      %v1772 = vsel %vm1012, %v1767, %v1771
      %v1773 = vshrl.u32 %v1576, 16
      %v1775 = vrot.slane %v1773, 4
      %v1776 = vor.u32 %v1775, %v1771
      %v1777 = vrot.slane %v1776, 4
      %v1779 = vshll.u32 %v1588, 16
      %v1781 = vrot.slane %v1779, 5
      %v1782 = vsel %vm1012, %v1777, %v1781
      %v1784 = vshrl.u32 %v1577, 16
      %v1786 = vrot.slane %v1784, 4
      %v1787 = vshll.u32 %v1577, 16
      %v1789 = vrot.slane %v1787, 5
      %v1790 = vor.u32 %v1786, %v1789
      %v1791 = vrot.slane %v1790, 4
      %v1793 = vshll.u32 %v1578, 16
      %v1795 = vrot.slane %v1793, 5
      %v1796 = vsel %vm1012, %v1791, %v1795
      %v1797 = vshrl.u32 %v1578, 16
      %v1799 = vrot.slane %v1797, 4
      %v1800 = vor.u32 %v1799, %v1795
      %v1801 = vrot.slane %v1800, 4
      %v1803 = vshll.u32 %v1589, 16
      %v1805 = vrot.slane %v1803, 5
      %v1806 = vsel %vm1012, %v1801, %v1805
      %v1808 = vshrl.u32 %v1579, 16
      %v1810 = vrot.slane %v1808, 4
      %v1811 = vshll.u32 %v1579, 16
      %v1813 = vrot.slane %v1811, 5
      %v1814 = vor.u32 %v1810, %v1813
      %v1815 = vrot.slane %v1814, 4
      %v1817 = vshll.u32 %v1580, 16
      %v1819 = vrot.slane %v1817, 5
      %v1820 = vsel %vm1012, %v1815, %v1819
      %v1821 = vshrl.u32 %v1580, 16
      %v1823 = vrot.slane %v1821, 4
      %v1824 = vor.u32 %v1823, %v1819
      %v1825 = vrot.slane %v1824, 4
      %v1827 = vshll.u32 %v1590, 16
      %v1829 = vrot.slane %v1827, 5
      %v1830 = vsel %vm1012, %v1825, %v1829
      %v1831 = vld [vmem:[%s1560] sm:$0xe]
      %v1832 = vld [vmem:[%s1560 + $0x10] sm:$0xe]
      %v1833 = vld [vmem:[%s1560 + $0x20] sm:$0xe]
      %v1834 = vld [vmem:[%s1560 + $0x30] sm:$0xe]
      %v1835 = vld [vmem:[%s1560 + $0x40] sm:$0xe]
      %v1836 = vld [vmem:[%s1560 + $0x50] sm:$0xe]
      %v1837 = vld [vmem:[%s1560 + $0x60] sm:$0xe]
      %v1838 = vld [vmem:[%s1560 + $0x70] sm:$0xe]
      %v1839 = vld [vmem:[%s1560 + $0x80] sm:$0xe]
      %v1840 = vld [vmem:[%s1560 + $0x90] sm:$0xe]
      %v1871 = vrot.slane %v1831, 5
      %v1872 = vrot.slane %v1871, 4
      %v1873 = vrot.slane %v1562, 5
      %v1874 = vsel %vm1295, %v1872, %v1873
      %v1875 = vrot.slane %v1873, 4
      %v1876 = vrot.slane %v1581, 5
      %v1877 = vsel %vm1295, %v1875, %v1876
      %v1878 = vrot.slane %v1832, 5
      %v1879 = vrot.slane %v1878, 4
      %v1880 = vrot.slane %v1564, 5
      %v1881 = vsel %vm1295, %v1879, %v1880
      %v1882 = vrot.slane %v1880, 4
      %v1883 = vrot.slane %v1582, 5
      %v1884 = vsel %vm1295, %v1882, %v1883
      %v1885 = vrot.slane %v1833, 5
      %v1886 = vrot.slane %v1885, 4
      %v1887 = vrot.slane %v1566, 5
      %v1888 = vsel %vm1295, %v1886, %v1887
      %v1889 = vrot.slane %v1887, 4
      %v1890 = vrot.slane %v1583, 5
      %v1891 = vsel %vm1295, %v1889, %v1890
      %v1892 = vrot.slane %v1834, 5
      %v1893 = vrot.slane %v1892, 4
      %v1894 = vrot.slane %v1568, 5
      %v1895 = vsel %vm1295, %v1893, %v1894
      %v1896 = vrot.slane %v1894, 4
      %v1897 = vrot.slane %v1584, 5
      %v1898 = vsel %vm1295, %v1896, %v1897
      %v1899 = vrot.slane %v1835, 5
      %v1900 = vrot.slane %v1899, 4
      %v1901 = vrot.slane %v1570, 5
      %v1902 = vsel %vm1295, %v1900, %v1901
      %v1903 = vrot.slane %v1901, 4
      %v1904 = vrot.slane %v1585, 5
      %v1905 = vsel %vm1295, %v1903, %v1904
      %v1906 = vrot.slane %v1836, 5
      %v1907 = vrot.slane %v1906, 4
      %v1908 = vrot.slane %v1572, 5
      %v1909 = vsel %vm1295, %v1907, %v1908
      %v1910 = vrot.slane %v1908, 4
      %v1911 = vrot.slane %v1586, 5
      %v1912 = vsel %vm1295, %v1910, %v1911
      %v1913 = vrot.slane %v1837, 5
      %v1914 = vrot.slane %v1913, 4
      %v1915 = vrot.slane %v1574, 5
      %v1916 = vsel %vm1295, %v1914, %v1915
      %v1917 = vrot.slane %v1915, 4
      %v1918 = vrot.slane %v1587, 5
      %v1919 = vsel %vm1295, %v1917, %v1918
      %v1920 = vrot.slane %v1838, 5
      %v1921 = vrot.slane %v1920, 4
      %v1922 = vrot.slane %v1576, 5
      %v1923 = vsel %vm1295, %v1921, %v1922
      %v1924 = vrot.slane %v1922, 4
      %v1925 = vrot.slane %v1588, 5
      %v1926 = vsel %vm1295, %v1924, %v1925
      %v1927 = vrot.slane %v1839, 5
      %v1928 = vrot.slane %v1927, 4
      %v1929 = vrot.slane %v1578, 5
      %v1930 = vsel %vm1295, %v1928, %v1929
      %v1931 = vrot.slane %v1929, 4
      %v1932 = vrot.slane %v1589, 5
      %v1933 = vsel %vm1295, %v1931, %v1932
      %v1934 = vrot.slane %v1840, 5
      %v1935 = vrot.slane %v1934, 4
      %v1936 = vrot.slane %v1580, 5
      %v1937 = vsel %vm1295, %v1935, %v1936
      %v1938 = vrot.slane %v1936, 4
      %v1939 = vrot.slane %v1590, 5
      %v1940 = vsel %vm1295, %v1938, %v1939
      %v1951 = vunpack.c.l.b16 %v1561
      %v1952 = vunpack.c.l.b16 %v1562
      %v1953 = vunpack.c.l.b16 %v1563
      %v1954 = vunpack.c.l.b16 %v1564
      %v1955 = vunpack.c.l.b16 %v1565
      %v1956 = vunpack.c.l.b16 %v1566
      %v1957 = vunpack.c.l.b16 %v1567
      %v1958 = vunpack.c.l.b16 %v1568
      %v1959 = vunpack.c.l.b16 %v1569
      %v1960 = vunpack.c.l.b16 %v1570
      %v1961 = vunpack.c.l.b16 %v1571
      %v1962 = vunpack.c.l.b16 %v1572
      %v1963 = vunpack.c.l.b16 %v1573
      %v1964 = vunpack.c.l.b16 %v1574
      %v1965 = vunpack.c.l.b16 %v1575
      %v1966 = vunpack.c.l.b16 %v1576
      %v1967 = vunpack.c.l.b16 %v1577
      %v1968 = vunpack.c.l.b16 %v1578
      %v1969 = vunpack.c.l.b16 %v1579
      %v1970 = vunpack.c.l.b16 %v1580
      %v1971 = vpack.c.b16 %v1952, %v1951
      %v1972 = vpack.c.b16 %v1954, %v1953
      %v1973 = vpack.c.b16 %v1956, %v1955
      %v1974 = vpack.c.b16 %v1958, %v1957
      %v1975 = vpack.c.b16 %v1960, %v1959
      %v1976 = vpack.c.b16 %v1962, %v1961
      %v1977 = vpack.c.b16 %v1964, %v1963
      %v1978 = vpack.c.b16 %v1966, %v1965
      %v1979 = vpack.c.b16 %v1968, %v1967
      %v1980 = vpack.c.b16 %v1970, %v1969
      %v1981 = vunpack.c.l.b16 %v1604
      %v1982 = vunpack.c.l.b16 %v1614
      %v1983 = vunpack.c.l.b16 %v1628
      %v1984 = vunpack.c.l.b16 %v1638
      %v1985 = vunpack.c.l.b16 %v1652
      %v1986 = vunpack.c.l.b16 %v1662
      %v1987 = vunpack.c.l.b16 %v1676
      %v1988 = vunpack.c.l.b16 %v1686
      %v1989 = vunpack.c.l.b16 %v1700
      %v1990 = vunpack.c.l.b16 %v1710
      %v1991 = vunpack.c.l.b16 %v1724
      %v1992 = vunpack.c.l.b16 %v1734
      %v1993 = vunpack.c.l.b16 %v1748
      %v1994 = vunpack.c.l.b16 %v1758
      %v1995 = vunpack.c.l.b16 %v1772
      %v1996 = vunpack.c.l.b16 %v1782
      %v1997 = vunpack.c.l.b16 %v1796
      %v1998 = vunpack.c.l.b16 %v1806
      %v1999 = vunpack.c.l.b16 %v1820
      %v2000 = vunpack.c.l.b16 %v1830
      %v2001 = vpack.c.b16 %v1982, %v1981
      %v2002 = vpack.c.b16 %v1984, %v1983
      %v2003 = vpack.c.b16 %v1986, %v1985
      %v2004 = vpack.c.b16 %v1988, %v1987
      %v2005 = vpack.c.b16 %v1990, %v1989
      %v2006 = vpack.c.b16 %v1992, %v1991
      %v2007 = vpack.c.b16 %v1994, %v1993
      %v2008 = vpack.c.b16 %v1996, %v1995
      %v2009 = vpack.c.b16 %v1998, %v1997
      %v2010 = vpack.c.b16 %v2000, %v1999
      %2011 = vrot.lane.b32.xlu0 %v2001, 4
      %v2012 = vpop.permute.xlu0 %2011
      %2013 = vrot.lane.b32.xlu0 %v2002, 4
      %v2014 = vpop.permute.xlu0 %2013
      %2015 = vrot.lane.b32.xlu0 %v2003, 4
      %v2016 = vpop.permute.xlu0 %2015
      %2017 = vrot.lane.b32.xlu0 %v2004, 4
      %v2018 = vpop.permute.xlu0 %2017
      %2019 = vrot.lane.b32.xlu0 %v2005, 4
      %v2020 = vpop.permute.xlu0 %2019
      %2021 = vrot.lane.b32.xlu0 %v2006, 4
      %v2022 = vpop.permute.xlu0 %2021
      %2023 = vrot.lane.b32.xlu0 %v2007, 4
      %v2024 = vpop.permute.xlu0 %2023
      %2025 = vrot.lane.b32.xlu0 %v2008, 4
      %v2026 = vpop.permute.xlu0 %2025
      %2027 = vrot.lane.b32.xlu0 %v2009, 4
      %v2028 = vpop.permute.xlu0 %2027
      %2029 = vrot.lane.b32.xlu0 %v2010, 4
      %v2030 = vpop.permute.xlu0 %2029
      %v2031 = vunpack.c.l.b16 %v1874
      %v2032 = vunpack.c.l.b16 %v1877
      %v2033 = vunpack.c.l.b16 %v1881
      %v2034 = vunpack.c.l.b16 %v1884
      %v2035 = vunpack.c.l.b16 %v1888
      %v2036 = vunpack.c.l.b16 %v1891
      %v2037 = vunpack.c.l.b16 %v1895
      %v2038 = vunpack.c.l.b16 %v1898
      %v2039 = vunpack.c.l.b16 %v1902
      %v2040 = vunpack.c.l.b16 %v1905
      %v2041 = vunpack.c.l.b16 %v1909
      %v2042 = vunpack.c.l.b16 %v1912
      %v2043 = vunpack.c.l.b16 %v1916
      %v2044 = vunpack.c.l.b16 %v1919
      %v2045 = vunpack.c.l.b16 %v1923
      %v2046 = vunpack.c.l.b16 %v1926
      %v2047 = vunpack.c.l.b16 %v1930
      %v2048 = vunpack.c.l.b16 %v1933
      %v2049 = vunpack.c.l.b16 %v1937
      %v2050 = vunpack.c.l.b16 %v1940
      %v2051 = vpack.c.b16 %v2032, %v2031
      %v2052 = vpack.c.b16 %v2034, %v2033
      %v2053 = vpack.c.b16 %v2036, %v2035
      %v2054 = vpack.c.b16 %v2038, %v2037
      %v2055 = vpack.c.b16 %v2040, %v2039
      %v2056 = vpack.c.b16 %v2042, %v2041
      %v2057 = vpack.c.b16 %v2044, %v2043
      %v2058 = vpack.c.b16 %v2046, %v2045
      %v2059 = vpack.c.b16 %v2048, %v2047
      %v2060 = vpack.c.b16 %v2050, %v2049
      %2061 = vrot.lane.b32.xlu0 %v2051, 8
      %v2062 = vpop.permute.xlu0 %2061
      %2063 = vrot.lane.b32.xlu0 %v2052, 8
      %v2064 = vpop.permute.xlu0 %2063
      %2065 = vrot.lane.b32.xlu0 %v2053, 8
      %v2066 = vpop.permute.xlu0 %2065
      %2067 = vrot.lane.b32.xlu0 %v2054, 8
      %v2068 = vpop.permute.xlu0 %2067
      %2069 = vrot.lane.b32.xlu0 %v2055, 8
      %v2070 = vpop.permute.xlu0 %2069
      %2071 = vrot.lane.b32.xlu0 %v2056, 8
      %v2072 = vpop.permute.xlu0 %2071
      %2073 = vrot.lane.b32.xlu0 %v2057, 8
      %v2074 = vpop.permute.xlu0 %2073
      %2075 = vrot.lane.b32.xlu0 %v2058, 8
      %v2076 = vpop.permute.xlu0 %2075
      %2077 = vrot.lane.b32.xlu0 %v2059, 8
      %v2078 = vpop.permute.xlu0 %2077
      %2079 = vrot.lane.b32.xlu0 %v2060, 8
      %v2080 = vpop.permute.xlu0 %2079
      %v2083 = vsel %vm1506, %v1971, %v2012
      %v2086 = vsel %vm1506, %v1972, %v2014
      %v2089 = vsel %vm1506, %v1973, %v2016
      %v2092 = vsel %vm1506, %v1974, %v2018
      %v2095 = vsel %vm1506, %v1975, %v2020
      %v2098 = vsel %vm1506, %v1976, %v2022
      %v2101 = vsel %vm1506, %v1977, %v2024
      %v2104 = vsel %vm1506, %v1978, %v2026
      %v2107 = vsel %vm1506, %v1979, %v2028
      %v2110 = vsel %vm1506, %v1980, %v2030
      %v2112 = vsel %vm1537, %v2083, %v2062
      %v2114 = vsel %vm1537, %v2086, %v2064
      %v2116 = vsel %vm1537, %v2089, %v2066
      %v2118 = vsel %vm1537, %v2092, %v2068
      %v2120 = vsel %vm1537, %v2095, %v2070
      %v2122 = vsel %vm1537, %v2098, %v2072
      %v2124 = vsel %vm1537, %v2101, %v2074
      %v2126 = vsel %vm1537, %v2104, %v2076
      %v2128 = vsel %vm1537, %v2107, %v2078
      %v2130 = vsel %vm1537, %v2110, %v2080
      %s2131 = scalar_lea.vmem %s3, 8
      %v2132 = vld [vmem:[%s2131] sm:$0xf]
      %v2133 = vld [vmem:[%s2131 + $0x4] sm:$0x3]
      %v2136 = vunpack.c.l.b16 %v2132
      %v2137 = vunpack.c.l.b16 %v2133
      %v2138 = vpack.c.b16 %v2137, %v2136
      %vm2139 = vcmask 97280
      %v2140 = vsel %vm2139, %v2112, 0
      %v2142 = vsel %vm2139, %v2114, 0
      %v2144 = vsel %vm2139, %v2116, 0
      %v2146 = vsel %vm2139, %v2118, 0
      %v2148 = vsel %vm2139, %v2120, 0
      %v2150 = vsel %vm2139, %v2122, 0
      %v2152 = vsel %vm2139, %v2124, 0
      %v2154 = vsel %vm2139, %v2126, 0
      %v2156 = vsel %vm2139, %v2128, 0
      %v2158 = vsel %vm2139, %v2130, 0
      %vm2160 = vcmask 1045504
      %v2162 = vsel %vm2160, %v2138, 0
      %2164 = vmatprep.subr.bf16.mxu0 0
      %2165 = vmatpush1.bf16.msra.mxu0 0
      %2166 = vmatprep.subr.bf16.mxu0 0
      %2167 = vmatpush1.bf16.msra.mxu0 0
      %2168 = vmatprep.subr.bf16.mxu0 0
      %2169 = vmatpush1.bf16.msra.mxu0 0
      %2170 = vmatprep.subr.bf16.mxu0 0
      %2171 = vmatpush1.bf16.msra.mxu0 0
      %2172 = vmatprep.subr.bf16.mxu0 0
      %2173 = vmatpush1.bf16.msra.mxu0 0
      %2174 = vmatprep.subr.bf16.mxu0 0
      %2175 = vmatpush1.bf16.msra.mxu0 0
      %2176 = vmatprep.subr.bf16.mxu0 0
      %2177 = vmatpush1.bf16.msra.mxu0 0
      %2178 = vmatprep.subr.bf16.mxu0 0
      %2179 = vmatpush1.bf16.msra.mxu0 %v2162
      %2180 = vmatprep.subr.bf16.mxu0 0
      %2181 = vmatpush2.bf16.msra.mxu0 0
      %2182 = vmatprep.subr.bf16.mxu0 0
      %2183 = vmatpush2.bf16.msra.mxu0 0
      %2184 = vmatprep.subr.bf16.mxu0 0
      %2185 = vmatpush2.bf16.msra.mxu0 0
      %2186 = vmatprep.subr.bf16.mxu0 0
      %2187 = vmatpush2.bf16.msra.mxu0 0
      %2188 = vmatprep.subr.bf16.mxu0 0
      %2189 = vmatpush2.bf16.msra.mxu0 0
      %2190 = vmatprep.subr.bf16.mxu0 0
      %2191 = vmatpush2.bf16.msra.mxu0 0
      %2192 = vmatprep.subr.bf16.mxu0 0
      %2193 = vmatpush2.bf16.msra.mxu0 0
      %2194 = vmatprep.subr.bf16.mxu0 0
      %2195 = vmatpush2.bf16.msra.mxu0 0
      %2196 = vmatprep.mubr.bf16.mxu0 0
      %2197 = vmatmul.mubr.bf16.gmra.mxu0 %v2140
      %v2198 = vpop.f32.mrf.mxu0
      %v2199 = vadd.f32 0.0, %v2198
      %v2200 = vpop.f32.mrf.mxu0
      %v2201 = vpop.f32.mrf.mxu0
      %v2202 = vadd.f32 0.0, %v2201
      %v2203 = vpop.f32.mrf.mxu0
      %2204 = vmatprep.mubr.bf16.mxu0 0
      %2205 = vmatmul.mubr.bf16.gmra.mxu0 %v2142
      %v2206 = vpop.f32.mrf.mxu0
      %v2207 = vadd.f32 0.0, %v2206
      %v2208 = vpop.f32.mrf.mxu0
      %v2209 = vpop.f32.mrf.mxu0
      %v2210 = vadd.f32 0.0, %v2209
      %v2211 = vpop.f32.mrf.mxu0
      %2212 = vmatprep.mubr.bf16.mxu0 0
      %2213 = vmatmul.mubr.bf16.gmra.mxu0 %v2144
      %v2214 = vpop.f32.mrf.mxu0
      %v2215 = vadd.f32 0.0, %v2214
      %v2216 = vpop.f32.mrf.mxu0
      %v2217 = vpop.f32.mrf.mxu0
      %v2218 = vadd.f32 0.0, %v2217
      %v2219 = vpop.f32.mrf.mxu0
      %2220 = vmatprep.mubr.bf16.mxu0 0
      %2221 = vmatmul.mubr.bf16.gmra.mxu0 %v2146
      %v2222 = vpop.f32.mrf.mxu0
      %v2223 = vadd.f32 0.0, %v2222
      %v2224 = vpop.f32.mrf.mxu0
      %v2225 = vpop.f32.mrf.mxu0
      %v2226 = vadd.f32 0.0, %v2225
      %v2227 = vpop.f32.mrf.mxu0
      %2228 = vmatprep.mubr.bf16.mxu0 0
      %2229 = vmatmul.mubr.bf16.gmra.mxu0 %v2148
      %v2230 = vpop.f32.mrf.mxu0
      %v2231 = vadd.f32 0.0, %v2230
      %v2232 = vpop.f32.mrf.mxu0
      %v2233 = vpop.f32.mrf.mxu0
      %v2234 = vadd.f32 0.0, %v2233
      %v2235 = vpop.f32.mrf.mxu0
      %2236 = vmatprep.mubr.bf16.mxu0 0
      %2237 = vmatmul.mubr.bf16.gmra.mxu0 %v2150
      %v2238 = vpop.f32.mrf.mxu0
      %v2239 = vadd.f32 0.0, %v2238
      %v2240 = vpop.f32.mrf.mxu0
      %v2241 = vpop.f32.mrf.mxu0
      %v2242 = vadd.f32 0.0, %v2241
      %v2243 = vpop.f32.mrf.mxu0
      %2244 = vmatprep.mubr.bf16.mxu0 0
      %2245 = vmatmul.mubr.bf16.gmra.mxu0 %v2152
      %v2246 = vpop.f32.mrf.mxu0
      %v2247 = vadd.f32 0.0, %v2246
      %v2248 = vpop.f32.mrf.mxu0
      %v2249 = vpop.f32.mrf.mxu0
      %v2250 = vadd.f32 0.0, %v2249
      %v2251 = vpop.f32.mrf.mxu0
      %2252 = vmatprep.mubr.bf16.mxu0 0
      %2253 = vmatmul.mubr.bf16.gmra.mxu0 %v2154
      %v2254 = vpop.f32.mrf.mxu0
      %v2255 = vadd.f32 0.0, %v2254
      %v2256 = vpop.f32.mrf.mxu0
      %v2257 = vpop.f32.mrf.mxu0
      %v2258 = vadd.f32 0.0, %v2257
      %v2259 = vpop.f32.mrf.mxu0
      %2260 = vmatprep.mubr.bf16.mxu0 0
      %2261 = vmatmul.mubr.bf16.gmra.mxu0 %v2156
      %v2262 = vpop.f32.mrf.mxu0
      %v2263 = vadd.f32 0.0, %v2262
      %v2264 = vpop.f32.mrf.mxu0
      %v2265 = vpop.f32.mrf.mxu0
      %v2266 = vadd.f32 0.0, %v2265
      %v2267 = vpop.f32.mrf.mxu0
      %2268 = vmatprep.mubr.bf16.mxu0 0
      %2269 = vmatmul.mubr.bf16.gmra.mxu0 %v2158
      %v2270 = vpop.f32.mrf.mxu0
      %v2271 = vadd.f32 0.0, %v2270
      %v2272 = vpop.f32.mrf.mxu0
      %v2273 = vpop.f32.mrf.mxu0
      %v2274 = vadd.f32 0.0, %v2273
      %v2275 = vpop.f32.mrf.mxu0
      %2276 = vdwg.mxu0
      %v2279 = vunpack.c.l.b16 %v1558
      %v2280 = vunpack.c.l.b16 %v1559
      %v2281 = vpack.c.b16 %v2280, %v2279
      %v2282 = vsel %vm2139, %v1539, 0
      %v2284 = vsel %vm2139, %v1541, 0
      %v2286 = vsel %vm2139, %v1543, 0
      %v2288 = vsel %vm2139, %v1545, 0
      %v2290 = vsel %vm2139, %v1547, 0
      %v2292 = vsel %vm2139, %v1549, 0
      %v2294 = vsel %vm2139, %v1551, 0
      %v2296 = vsel %vm2139, %v1553, 0
      %v2298 = vsel %vm2139, %v1555, 0
      %v2300 = vsel %vm2139, %v1557, 0
      %v2303 = vsel %vm2160, %v2281, 0
      %2305 = vmatprep.subr.bf16.mxu0 0
      %2306 = vmatpush1.bf16.msra.mxu0 0
      %2307 = vmatprep.subr.bf16.mxu0 0
      %2308 = vmatpush1.bf16.msra.mxu0 0
      %2309 = vmatprep.subr.bf16.mxu0 0
      %2310 = vmatpush1.bf16.msra.mxu0 0
      %2311 = vmatprep.subr.bf16.mxu0 0
      %2312 = vmatpush1.bf16.msra.mxu0 0
      %2313 = vmatprep.subr.bf16.mxu0 0
      %2314 = vmatpush1.bf16.msra.mxu0 0
      %2315 = vmatprep.subr.bf16.mxu0 0
      %2316 = vmatpush1.bf16.msra.mxu0 0
      %2317 = vmatprep.subr.bf16.mxu0 0
      %2318 = vmatpush1.bf16.msra.mxu0 0
      %2319 = vmatprep.subr.bf16.mxu0 0
      %2320 = vmatpush1.bf16.msra.mxu0 %v2303
      %2321 = vmatprep.subr.bf16.mxu0 0
      %2322 = vmatpush2.bf16.msra.mxu0 0
      %2323 = vmatprep.subr.bf16.mxu0 0
      %2324 = vmatpush2.bf16.msra.mxu0 0
      %2325 = vmatprep.subr.bf16.mxu0 0
      %2326 = vmatpush2.bf16.msra.mxu0 0
      %2327 = vmatprep.subr.bf16.mxu0 0
      %2328 = vmatpush2.bf16.msra.mxu0 0
      %2329 = vmatprep.subr.bf16.mxu0 0
      %2330 = vmatpush2.bf16.msra.mxu0 0
      %2331 = vmatprep.subr.bf16.mxu0 0
      %2332 = vmatpush2.bf16.msra.mxu0 0
      %2333 = vmatprep.subr.bf16.mxu0 0
      %2334 = vmatpush2.bf16.msra.mxu0 0
      %2335 = vmatprep.subr.bf16.mxu0 0
      %2336 = vmatpush2.bf16.msra.mxu0 0
      %2337 = vmatprep.mubr.bf16.mxu0 0
      %2338 = vmatmul.mubr.bf16.gmra.mxu0 %v2282
      %v2339 = vpop.f32.mrf.mxu0
      %v2340 = vadd.f32 %v2199, %v2339
      %v2341 = vpop.f32.mrf.mxu0
      %v2342 = vpop.f32.mrf.mxu0
      %v2343 = vadd.f32 %v2202, %v2342
      %v2344 = vpop.f32.mrf.mxu0
      %2345 = vmatprep.mubr.bf16.mxu0 0
      %2346 = vmatmul.mubr.bf16.gmra.mxu0 %v2284
      %v2347 = vpop.f32.mrf.mxu0
      %v2348 = vadd.f32 %v2207, %v2347
      %v2349 = vpop.f32.mrf.mxu0
      %v2350 = vpop.f32.mrf.mxu0
      %v2351 = vadd.f32 %v2210, %v2350
      %v2352 = vpop.f32.mrf.mxu0
      %2353 = vmatprep.mubr.bf16.mxu0 0
      %2354 = vmatmul.mubr.bf16.gmra.mxu0 %v2286
      %v2355 = vpop.f32.mrf.mxu0
      %v2356 = vadd.f32 %v2215, %v2355
      %v2357 = vpop.f32.mrf.mxu0
      %v2358 = vpop.f32.mrf.mxu0
      %v2359 = vadd.f32 %v2218, %v2358
      %v2360 = vpop.f32.mrf.mxu0
      %2361 = vmatprep.mubr.bf16.mxu0 0
      %2362 = vmatmul.mubr.bf16.gmra.mxu0 %v2288
      %v2363 = vpop.f32.mrf.mxu0
      %v2364 = vadd.f32 %v2223, %v2363
      %v2365 = vpop.f32.mrf.mxu0
      %v2366 = vpop.f32.mrf.mxu0
      %v2367 = vadd.f32 %v2226, %v2366
      %v2368 = vpop.f32.mrf.mxu0
      %2369 = vmatprep.mubr.bf16.mxu0 0
      %2370 = vmatmul.mubr.bf16.gmra.mxu0 %v2290
      %v2371 = vpop.f32.mrf.mxu0
      %v2372 = vadd.f32 %v2231, %v2371
      %v2373 = vpop.f32.mrf.mxu0
      %v2374 = vpop.f32.mrf.mxu0
      %v2375 = vadd.f32 %v2234, %v2374
      %v2376 = vpop.f32.mrf.mxu0
      %2377 = vmatprep.mubr.bf16.mxu0 0
      %2378 = vmatmul.mubr.bf16.gmra.mxu0 %v2292
      %v2379 = vpop.f32.mrf.mxu0
      %v2380 = vadd.f32 %v2239, %v2379
      %v2381 = vpop.f32.mrf.mxu0
      %v2382 = vpop.f32.mrf.mxu0
      %v2383 = vadd.f32 %v2242, %v2382
      %v2384 = vpop.f32.mrf.mxu0
      %2385 = vmatprep.mubr.bf16.mxu0 0
      %2386 = vmatmul.mubr.bf16.gmra.mxu0 %v2294
      %v2387 = vpop.f32.mrf.mxu0
      %v2388 = vadd.f32 %v2247, %v2387
      %v2389 = vpop.f32.mrf.mxu0
      %v2390 = vpop.f32.mrf.mxu0
      %v2391 = vadd.f32 %v2250, %v2390
      %v2392 = vpop.f32.mrf.mxu0
      %2393 = vmatprep.mubr.bf16.mxu0 0
      %2394 = vmatmul.mubr.bf16.gmra.mxu0 %v2296
      %v2395 = vpop.f32.mrf.mxu0
      %v2396 = vadd.f32 %v2255, %v2395
      %v2397 = vpop.f32.mrf.mxu0
      %v2398 = vpop.f32.mrf.mxu0
      %v2399 = vadd.f32 %v2258, %v2398
      %v2400 = vpop.f32.mrf.mxu0
      %2401 = vmatprep.mubr.bf16.mxu0 0
      %2402 = vmatmul.mubr.bf16.gmra.mxu0 %v2298
      %v2403 = vpop.f32.mrf.mxu0
      %v2404 = vadd.f32 %v2263, %v2403
      %v2405 = vpop.f32.mrf.mxu0
      %v2406 = vpop.f32.mrf.mxu0
      %v2407 = vadd.f32 %v2266, %v2406
      %v2408 = vpop.f32.mrf.mxu0
      %2409 = vmatprep.mubr.bf16.mxu0 0
      %2410 = vmatmul.mubr.bf16.gmra.mxu0 %v2300
      %v2411 = vpop.f32.mrf.mxu0
      %v2412 = vadd.f32 %v2271, %v2411
      %v2413 = vpop.f32.mrf.mxu0
      %v2414 = vpop.f32.mrf.mxu0
      %v2415 = vadd.f32 %v2274, %v2414
      %v2416 = vpop.f32.mrf.mxu0
      %2417 = vdwg.mxu0
      %v2418 = vld [vmem:[%s734] sm:$0xf]
      %v2419 = vld [vmem:[%s734 + $0x4] sm:$0xf]
      %v2420 = vld [vmem:[%s734 + $0x10] sm:$0xf]
      %v2421 = vld [vmem:[%s734 + $0x14] sm:$0xf]
      %v2422 = vld [vmem:[%s734 + $0x20] sm:$0xf]
      %v2423 = vld [vmem:[%s734 + $0x24] sm:$0xf]
      %v2424 = vld [vmem:[%s734 + $0x30] sm:$0xf]
      %v2425 = vld [vmem:[%s734 + $0x34] sm:$0xf]
      %v2426 = vld [vmem:[%s734 + $0x40] sm:$0xf]
      %v2427 = vld [vmem:[%s734 + $0x44] sm:$0xf]
      %v2428 = vld [vmem:[%s734 + $0x50] sm:$0xf]
      %v2429 = vld [vmem:[%s734 + $0x54] sm:$0xf]
      %v2430 = vld [vmem:[%s734 + $0x60] sm:$0xf]
      %v2431 = vld [vmem:[%s734 + $0x64] sm:$0xf]
      %v2432 = vld [vmem:[%s734 + $0x70] sm:$0xf]
      %v2433 = vld [vmem:[%s734 + $0x74] sm:$0xf]
      %v2434 = vld [vmem:[%s734 + $0x80] sm:$0xf]
      %v2435 = vld [vmem:[%s734 + $0x84] sm:$0xf]
      %v2436 = vld [vmem:[%s734 + $0x90] sm:$0xf]
      %v2437 = vld [vmem:[%s734 + $0x94] sm:$0xf]
      %v2438 = vld [vmem:[%s734 + $0x8] sm:$0x1]
      %v2439 = vld [vmem:[%s734 + $0x18] sm:$0x1]
      %v2440 = vld [vmem:[%s734 + $0x28] sm:$0x1]
      %v2441 = vld [vmem:[%s734 + $0x38] sm:$0x1]
      %v2442 = vld [vmem:[%s734 + $0x48] sm:$0x1]
      %v2443 = vld [vmem:[%s734 + $0x58] sm:$0x1]
      %v2444 = vld [vmem:[%s734 + $0x68] sm:$0x1]
      %v2445 = vld [vmem:[%s734 + $0x78] sm:$0x1]
      %v2446 = vld [vmem:[%s734 + $0x88] sm:$0x1]
      %v2447 = vld [vmem:[%s734 + $0x98] sm:$0x1]
      %v2449 = vshrl.u32 %v2418, 16
      %v2451 = vrot.slane %v2449, 4
      %v2452 = vshll.u32 %v2418, 16
      %v2454 = vrot.slane %v2452, 5
      %v2455 = vor.u32 %v2451, %v2454
      %v2456 = vrot.slane %v2455, 4
      %v2458 = vshll.u32 %v2419, 16
      %v2460 = vrot.slane %v2458, 5
      %v2461 = vsel %vm1012, %v2456, %v2460
      %v2462 = vshrl.u32 %v2419, 16
      %v2464 = vrot.slane %v2462, 4
      %v2465 = vor.u32 %v2464, %v2460
      %v2466 = vrot.slane %v2465, 4
      %v2468 = vshll.u32 %v2438, 16
      %v2470 = vrot.slane %v2468, 5
      %v2471 = vsel %vm1012, %v2466, %v2470
      %v2473 = vshrl.u32 %v2420, 16
      %v2475 = vrot.slane %v2473, 4
      %v2476 = vshll.u32 %v2420, 16
      %v2478 = vrot.slane %v2476, 5
      %v2479 = vor.u32 %v2475, %v2478
      %v2480 = vrot.slane %v2479, 4
      %v2482 = vshll.u32 %v2421, 16
      %v2484 = vrot.slane %v2482, 5
      %v2485 = vsel %vm1012, %v2480, %v2484
      %v2486 = vshrl.u32 %v2421, 16
      %v2488 = vrot.slane %v2486, 4
      %v2489 = vor.u32 %v2488, %v2484
      %v2490 = vrot.slane %v2489, 4
      %v2492 = vshll.u32 %v2439, 16
      %v2494 = vrot.slane %v2492, 5
      %v2495 = vsel %vm1012, %v2490, %v2494
      %v2497 = vshrl.u32 %v2422, 16
      %v2499 = vrot.slane %v2497, 4
      %v2500 = vshll.u32 %v2422, 16
      %v2502 = vrot.slane %v2500, 5
      %v2503 = vor.u32 %v2499, %v2502
      %v2504 = vrot.slane %v2503, 4
      %v2506 = vshll.u32 %v2423, 16
      %v2508 = vrot.slane %v2506, 5
      %v2509 = vsel %vm1012, %v2504, %v2508
      %v2510 = vshrl.u32 %v2423, 16
      %v2512 = vrot.slane %v2510, 4
      %v2513 = vor.u32 %v2512, %v2508
      %v2514 = vrot.slane %v2513, 4
      %v2516 = vshll.u32 %v2440, 16
      %v2518 = vrot.slane %v2516, 5
      %v2519 = vsel %vm1012, %v2514, %v2518
      %v2521 = vshrl.u32 %v2424, 16
      %v2523 = vrot.slane %v2521, 4
      %v2524 = vshll.u32 %v2424, 16
      %v2526 = vrot.slane %v2524, 5
      %v2527 = vor.u32 %v2523, %v2526
      %v2528 = vrot.slane %v2527, 4
      %v2530 = vshll.u32 %v2425, 16
      %v2532 = vrot.slane %v2530, 5
      %v2533 = vsel %vm1012, %v2528, %v2532
      %v2534 = vshrl.u32 %v2425, 16
      %v2536 = vrot.slane %v2534, 4
      %v2537 = vor.u32 %v2536, %v2532
      %v2538 = vrot.slane %v2537, 4
      %v2540 = vshll.u32 %v2441, 16
      %v2542 = vrot.slane %v2540, 5
      %v2543 = vsel %vm1012, %v2538, %v2542
      %v2545 = vshrl.u32 %v2426, 16
      %v2547 = vrot.slane %v2545, 4
      %v2548 = vshll.u32 %v2426, 16
      %v2550 = vrot.slane %v2548, 5
      %v2551 = vor.u32 %v2547, %v2550
      %v2552 = vrot.slane %v2551, 4
      %v2554 = vshll.u32 %v2427, 16
      %v2556 = vrot.slane %v2554, 5
      %v2557 = vsel %vm1012, %v2552, %v2556
      %v2558 = vshrl.u32 %v2427, 16
      %v2560 = vrot.slane %v2558, 4
      %v2561 = vor.u32 %v2560, %v2556
      %v2562 = vrot.slane %v2561, 4
      %v2564 = vshll.u32 %v2442, 16
      %v2566 = vrot.slane %v2564, 5
      %v2567 = vsel %vm1012, %v2562, %v2566
      %v2569 = vshrl.u32 %v2428, 16
      %v2571 = vrot.slane %v2569, 4
      %v2572 = vshll.u32 %v2428, 16
      %v2574 = vrot.slane %v2572, 5
      %v2575 = vor.u32 %v2571, %v2574
      %v2576 = vrot.slane %v2575, 4
      %v2578 = vshll.u32 %v2429, 16
      %v2580 = vrot.slane %v2578, 5
      %v2581 = vsel %vm1012, %v2576, %v2580
      %v2582 = vshrl.u32 %v2429, 16
      %v2584 = vrot.slane %v2582, 4
      %v2585 = vor.u32 %v2584, %v2580
      %v2586 = vrot.slane %v2585, 4
      %v2588 = vshll.u32 %v2443, 16
      %v2590 = vrot.slane %v2588, 5
      %v2591 = vsel %vm1012, %v2586, %v2590
      %v2593 = vshrl.u32 %v2430, 16
      %v2595 = vrot.slane %v2593, 4
      %v2596 = vshll.u32 %v2430, 16
      %v2598 = vrot.slane %v2596, 5
      %v2599 = vor.u32 %v2595, %v2598
      %v2600 = vrot.slane %v2599, 4
      %v2602 = vshll.u32 %v2431, 16
      %v2604 = vrot.slane %v2602, 5
      %v2605 = vsel %vm1012, %v2600, %v2604
      %v2606 = vshrl.u32 %v2431, 16
      %v2608 = vrot.slane %v2606, 4
      %v2609 = vor.u32 %v2608, %v2604
      %v2610 = vrot.slane %v2609, 4
      %v2612 = vshll.u32 %v2444, 16
      %v2614 = vrot.slane %v2612, 5
      %v2615 = vsel %vm1012, %v2610, %v2614
      %v2617 = vshrl.u32 %v2432, 16
      %v2619 = vrot.slane %v2617, 4
      %v2620 = vshll.u32 %v2432, 16
      %v2622 = vrot.slane %v2620, 5
      %v2623 = vor.u32 %v2619, %v2622
      %v2624 = vrot.slane %v2623, 4
      %v2626 = vshll.u32 %v2433, 16
      %v2628 = vrot.slane %v2626, 5
      %v2629 = vsel %vm1012, %v2624, %v2628
      %v2630 = vshrl.u32 %v2433, 16
      %v2632 = vrot.slane %v2630, 4
      %v2633 = vor.u32 %v2632, %v2628
      %v2634 = vrot.slane %v2633, 4
      %v2636 = vshll.u32 %v2445, 16
      %v2638 = vrot.slane %v2636, 5
      %v2639 = vsel %vm1012, %v2634, %v2638
      %v2641 = vshrl.u32 %v2434, 16
      %v2643 = vrot.slane %v2641, 4
      %v2644 = vshll.u32 %v2434, 16
      %v2646 = vrot.slane %v2644, 5
      %v2647 = vor.u32 %v2643, %v2646
      %v2648 = vrot.slane %v2647, 4
      %v2650 = vshll.u32 %v2435, 16
      %v2652 = vrot.slane %v2650, 5
      %v2653 = vsel %vm1012, %v2648, %v2652
      %v2654 = vshrl.u32 %v2435, 16
      %v2656 = vrot.slane %v2654, 4
      %v2657 = vor.u32 %v2656, %v2652
      %v2658 = vrot.slane %v2657, 4
      %v2660 = vshll.u32 %v2446, 16
      %v2662 = vrot.slane %v2660, 5
      %v2663 = vsel %vm1012, %v2658, %v2662
      %v2665 = vshrl.u32 %v2436, 16
      %v2667 = vrot.slane %v2665, 4
      %v2668 = vshll.u32 %v2436, 16
      %v2670 = vrot.slane %v2668, 5
      %v2671 = vor.u32 %v2667, %v2670
      %v2672 = vrot.slane %v2671, 4
      %v2674 = vshll.u32 %v2437, 16
      %v2676 = vrot.slane %v2674, 5
      %v2677 = vsel %vm1012, %v2672, %v2676
      %v2678 = vshrl.u32 %v2437, 16
      %v2680 = vrot.slane %v2678, 4
      %v2681 = vor.u32 %v2680, %v2676
      %v2682 = vrot.slane %v2681, 4
      %v2684 = vshll.u32 %v2447, 16
      %v2686 = vrot.slane %v2684, 5
      %v2687 = vsel %vm1012, %v2682, %v2686
      %v2688 = vld [vmem:[%s734] sm:$0xe]
      %v2689 = vld [vmem:[%s734 + $0x10] sm:$0xe]
      %v2690 = vld [vmem:[%s734 + $0x20] sm:$0xe]
      %v2691 = vld [vmem:[%s734 + $0x30] sm:$0xe]
      %v2692 = vld [vmem:[%s734 + $0x40] sm:$0xe]
      %v2693 = vld [vmem:[%s734 + $0x50] sm:$0xe]
      %v2694 = vld [vmem:[%s734 + $0x60] sm:$0xe]
      %v2695 = vld [vmem:[%s734 + $0x70] sm:$0xe]
      %v2696 = vld [vmem:[%s734 + $0x80] sm:$0xe]
      %v2697 = vld [vmem:[%s734 + $0x90] sm:$0xe]
      %v2728 = vrot.slane %v2688, 5
      %v2729 = vrot.slane %v2728, 4
      %v2730 = vrot.slane %v2419, 5
      %v2731 = vsel %vm1295, %v2729, %v2730
      %v2732 = vrot.slane %v2730, 4
      %v2733 = vrot.slane %v2438, 5
      %v2734 = vsel %vm1295, %v2732, %v2733
      %v2735 = vrot.slane %v2689, 5
      %v2736 = vrot.slane %v2735, 4
      %v2737 = vrot.slane %v2421, 5
      %v2738 = vsel %vm1295, %v2736, %v2737
      %v2739 = vrot.slane %v2737, 4
      %v2740 = vrot.slane %v2439, 5
      %v2741 = vsel %vm1295, %v2739, %v2740
      %v2742 = vrot.slane %v2690, 5
      %v2743 = vrot.slane %v2742, 4
      %v2744 = vrot.slane %v2423, 5
      %v2745 = vsel %vm1295, %v2743, %v2744
      %v2746 = vrot.slane %v2744, 4
      %v2747 = vrot.slane %v2440, 5
      %v2748 = vsel %vm1295, %v2746, %v2747
      %v2749 = vrot.slane %v2691, 5
      %v2750 = vrot.slane %v2749, 4
      %v2751 = vrot.slane %v2425, 5
      %v2752 = vsel %vm1295, %v2750, %v2751
      %v2753 = vrot.slane %v2751, 4
      %v2754 = vrot.slane %v2441, 5
      %v2755 = vsel %vm1295, %v2753, %v2754
      %v2756 = vrot.slane %v2692, 5
      %v2757 = vrot.slane %v2756, 4
      %v2758 = vrot.slane %v2427, 5
      %v2759 = vsel %vm1295, %v2757, %v2758
      %v2760 = vrot.slane %v2758, 4
      %v2761 = vrot.slane %v2442, 5
      %v2762 = vsel %vm1295, %v2760, %v2761
      %v2763 = vrot.slane %v2693, 5
      %v2764 = vrot.slane %v2763, 4
      %v2765 = vrot.slane %v2429, 5
      %v2766 = vsel %vm1295, %v2764, %v2765
      %v2767 = vrot.slane %v2765, 4
      %v2768 = vrot.slane %v2443, 5
      %v2769 = vsel %vm1295, %v2767, %v2768
      %v2770 = vrot.slane %v2694, 5
      %v2771 = vrot.slane %v2770, 4
      %v2772 = vrot.slane %v2431, 5
      %v2773 = vsel %vm1295, %v2771, %v2772
      %v2774 = vrot.slane %v2772, 4
      %v2775 = vrot.slane %v2444, 5
      %v2776 = vsel %vm1295, %v2774, %v2775
      %v2777 = vrot.slane %v2695, 5
      %v2778 = vrot.slane %v2777, 4
      %v2779 = vrot.slane %v2433, 5
      %v2780 = vsel %vm1295, %v2778, %v2779
      %v2781 = vrot.slane %v2779, 4
      %v2782 = vrot.slane %v2445, 5
      %v2783 = vsel %vm1295, %v2781, %v2782
      %v2784 = vrot.slane %v2696, 5
      %v2785 = vrot.slane %v2784, 4
      %v2786 = vrot.slane %v2435, 5
      %v2787 = vsel %vm1295, %v2785, %v2786
      %v2788 = vrot.slane %v2786, 4
      %v2789 = vrot.slane %v2446, 5
      %v2790 = vsel %vm1295, %v2788, %v2789
      %v2791 = vrot.slane %v2697, 5
      %v2792 = vrot.slane %v2791, 4
      %v2793 = vrot.slane %v2437, 5
      %v2794 = vsel %vm1295, %v2792, %v2793
      %v2795 = vrot.slane %v2793, 4
      %v2796 = vrot.slane %v2447, 5
      %v2797 = vsel %vm1295, %v2795, %v2796
      %v2808 = vunpack.c.l.b16 %v2418
      %v2809 = vunpack.c.l.b16 %v2419
      %v2810 = vunpack.c.l.b16 %v2420
      %v2811 = vunpack.c.l.b16 %v2421
      %v2812 = vunpack.c.l.b16 %v2422
      %v2813 = vunpack.c.l.b16 %v2423
      %v2814 = vunpack.c.l.b16 %v2424
      %v2815 = vunpack.c.l.b16 %v2425
      %v2816 = vunpack.c.l.b16 %v2426
      %v2817 = vunpack.c.l.b16 %v2427
      %v2818 = vunpack.c.l.b16 %v2428
      %v2819 = vunpack.c.l.b16 %v2429
      %v2820 = vunpack.c.l.b16 %v2430
      %v2821 = vunpack.c.l.b16 %v2431
      %v2822 = vunpack.c.l.b16 %v2432
      %v2823 = vunpack.c.l.b16 %v2433
      %v2824 = vunpack.c.l.b16 %v2434
      %v2825 = vunpack.c.l.b16 %v2435
      %v2826 = vunpack.c.l.b16 %v2436
      %v2827 = vunpack.c.l.b16 %v2437
      %v2828 = vpack.c.b16 %v2809, %v2808
      %v2829 = vpack.c.b16 %v2811, %v2810
      %v2830 = vpack.c.b16 %v2813, %v2812
      %v2831 = vpack.c.b16 %v2815, %v2814
      %v2832 = vpack.c.b16 %v2817, %v2816
      %v2833 = vpack.c.b16 %v2819, %v2818
      %v2834 = vpack.c.b16 %v2821, %v2820
      %v2835 = vpack.c.b16 %v2823, %v2822
      %v2836 = vpack.c.b16 %v2825, %v2824
      %v2837 = vpack.c.b16 %v2827, %v2826
      %v2838 = vunpack.c.l.b16 %v2461
      %v2839 = vunpack.c.l.b16 %v2471
      %v2840 = vunpack.c.l.b16 %v2485
      %v2841 = vunpack.c.l.b16 %v2495
      %v2842 = vunpack.c.l.b16 %v2509
      %v2843 = vunpack.c.l.b16 %v2519
      %v2844 = vunpack.c.l.b16 %v2533
      %v2845 = vunpack.c.l.b16 %v2543
      %v2846 = vunpack.c.l.b16 %v2557
      %v2847 = vunpack.c.l.b16 %v2567
      %v2848 = vunpack.c.l.b16 %v2581
      %v2849 = vunpack.c.l.b16 %v2591
      %v2850 = vunpack.c.l.b16 %v2605
      %v2851 = vunpack.c.l.b16 %v2615
      %v2852 = vunpack.c.l.b16 %v2629
      %v2853 = vunpack.c.l.b16 %v2639
      %v2854 = vunpack.c.l.b16 %v2653
      %v2855 = vunpack.c.l.b16 %v2663
      %v2856 = vunpack.c.l.b16 %v2677
      %v2857 = vunpack.c.l.b16 %v2687
      %v2858 = vpack.c.b16 %v2839, %v2838
      %v2859 = vpack.c.b16 %v2841, %v2840
      %v2860 = vpack.c.b16 %v2843, %v2842
      %v2861 = vpack.c.b16 %v2845, %v2844
      %v2862 = vpack.c.b16 %v2847, %v2846
      %v2863 = vpack.c.b16 %v2849, %v2848
      %v2864 = vpack.c.b16 %v2851, %v2850
      %v2865 = vpack.c.b16 %v2853, %v2852
      %v2866 = vpack.c.b16 %v2855, %v2854
      %v2867 = vpack.c.b16 %v2857, %v2856
      %2868 = vrot.lane.b32.xlu0 %v2858, 4
      %v2869 = vpop.permute.xlu0 %2868
      %2870 = vrot.lane.b32.xlu0 %v2859, 4
      %v2871 = vpop.permute.xlu0 %2870
      %2872 = vrot.lane.b32.xlu0 %v2860, 4
      %v2873 = vpop.permute.xlu0 %2872
      %2874 = vrot.lane.b32.xlu0 %v2861, 4
      %v2875 = vpop.permute.xlu0 %2874
      %2876 = vrot.lane.b32.xlu0 %v2862, 4
      %v2877 = vpop.permute.xlu0 %2876
      %2878 = vrot.lane.b32.xlu0 %v2863, 4
      %v2879 = vpop.permute.xlu0 %2878
      %2880 = vrot.lane.b32.xlu0 %v2864, 4
      %v2881 = vpop.permute.xlu0 %2880
      %2882 = vrot.lane.b32.xlu0 %v2865, 4
      %v2883 = vpop.permute.xlu0 %2882
      %2884 = vrot.lane.b32.xlu0 %v2866, 4
      %v2885 = vpop.permute.xlu0 %2884
      %2886 = vrot.lane.b32.xlu0 %v2867, 4
      %v2887 = vpop.permute.xlu0 %2886
      %v2888 = vunpack.c.l.b16 %v2731
      %v2889 = vunpack.c.l.b16 %v2734
      %v2890 = vunpack.c.l.b16 %v2738
      %v2891 = vunpack.c.l.b16 %v2741
      %v2892 = vunpack.c.l.b16 %v2745
      %v2893 = vunpack.c.l.b16 %v2748
      %v2894 = vunpack.c.l.b16 %v2752
      %v2895 = vunpack.c.l.b16 %v2755
      %v2896 = vunpack.c.l.b16 %v2759
      %v2897 = vunpack.c.l.b16 %v2762
      %v2898 = vunpack.c.l.b16 %v2766
      %v2899 = vunpack.c.l.b16 %v2769
      %v2900 = vunpack.c.l.b16 %v2773
      %v2901 = vunpack.c.l.b16 %v2776
      %v2902 = vunpack.c.l.b16 %v2780
      %v2903 = vunpack.c.l.b16 %v2783
      %v2904 = vunpack.c.l.b16 %v2787
      %v2905 = vunpack.c.l.b16 %v2790
      %v2906 = vunpack.c.l.b16 %v2794
      %v2907 = vunpack.c.l.b16 %v2797
      %v2908 = vpack.c.b16 %v2889, %v2888
      %v2909 = vpack.c.b16 %v2891, %v2890
      %v2910 = vpack.c.b16 %v2893, %v2892
      %v2911 = vpack.c.b16 %v2895, %v2894
      %v2912 = vpack.c.b16 %v2897, %v2896
      %v2913 = vpack.c.b16 %v2899, %v2898
      %v2914 = vpack.c.b16 %v2901, %v2900
      %v2915 = vpack.c.b16 %v2903, %v2902
      %v2916 = vpack.c.b16 %v2905, %v2904
      %v2917 = vpack.c.b16 %v2907, %v2906
      %2918 = vrot.lane.b32.xlu0 %v2908, 8
      %v2919 = vpop.permute.xlu0 %2918
      %2920 = vrot.lane.b32.xlu0 %v2909, 8
      %v2921 = vpop.permute.xlu0 %2920
      %2922 = vrot.lane.b32.xlu0 %v2910, 8
      %v2923 = vpop.permute.xlu0 %2922
      %2924 = vrot.lane.b32.xlu0 %v2911, 8
      %v2925 = vpop.permute.xlu0 %2924
      %2926 = vrot.lane.b32.xlu0 %v2912, 8
      %v2927 = vpop.permute.xlu0 %2926
      %2928 = vrot.lane.b32.xlu0 %v2913, 8
      %v2929 = vpop.permute.xlu0 %2928
      %2930 = vrot.lane.b32.xlu0 %v2914, 8
      %v2931 = vpop.permute.xlu0 %2930
      %2932 = vrot.lane.b32.xlu0 %v2915, 8
      %v2933 = vpop.permute.xlu0 %2932
      %2934 = vrot.lane.b32.xlu0 %v2916, 8
      %v2935 = vpop.permute.xlu0 %2934
      %2936 = vrot.lane.b32.xlu0 %v2917, 8
      %v2937 = vpop.permute.xlu0 %2936
      %v2940 = vsel %vm1506, %v2828, %v2869
      %v2943 = vsel %vm1506, %v2829, %v2871
      %v2946 = vsel %vm1506, %v2830, %v2873
      %v2949 = vsel %vm1506, %v2831, %v2875
      %v2952 = vsel %vm1506, %v2832, %v2877
      %v2955 = vsel %vm1506, %v2833, %v2879
      %v2958 = vsel %vm1506, %v2834, %v2881
      %v2961 = vsel %vm1506, %v2835, %v2883
      %v2964 = vsel %vm1506, %v2836, %v2885
      %v2967 = vsel %vm1506, %v2837, %v2887
      %v2969 = vsel %vm1537, %v2940, %v2919
      %v2971 = vsel %vm1537, %v2943, %v2921
      %v2973 = vsel %vm1537, %v2946, %v2923
      %v2975 = vsel %vm1537, %v2949, %v2925
      %v2977 = vsel %vm1537, %v2952, %v2927
      %v2979 = vsel %vm1537, %v2955, %v2929
      %v2981 = vsel %vm1537, %v2958, %v2931
      %v2983 = vsel %vm1537, %v2961, %v2933
      %v2985 = vsel %vm1537, %v2964, %v2935
      %v2987 = vsel %vm1537, %v2967, %v2937
      %s2988 = scalar_lea.vmem %s3, 16
      %v2989 = vld [vmem:[%s2988] sm:$0xf]
      %v2990 = vld [vmem:[%s2988 + $0x4] sm:$0x3]
      %v2993 = vunpack.c.l.b16 %v2989
      %v2994 = vunpack.c.l.b16 %v2990
      %v2995 = vpack.c.b16 %v2994, %v2993
      %v2996 = vsel %vm2139, %v2969, 0
      %v2998 = vsel %vm2139, %v2971, 0
      %v3000 = vsel %vm2139, %v2973, 0
      %v3002 = vsel %vm2139, %v2975, 0
      %v3004 = vsel %vm2139, %v2977, 0
      %v3006 = vsel %vm2139, %v2979, 0
      %v3008 = vsel %vm2139, %v2981, 0
      %v3010 = vsel %vm2139, %v2983, 0
      %v3012 = vsel %vm2139, %v2985, 0
      %v3014 = vsel %vm2139, %v2987, 0
      %v3017 = vsel %vm2160, %v2995, 0
      %3019 = vmatprep.subr.bf16.mxu0 0
      %3020 = vmatpush1.bf16.msra.mxu0 0
      %3021 = vmatprep.subr.bf16.mxu0 0
      %3022 = vmatpush1.bf16.msra.mxu0 0
      %3023 = vmatprep.subr.bf16.mxu0 0
      %3024 = vmatpush1.bf16.msra.mxu0 0
      %3025 = vmatprep.subr.bf16.mxu0 0
      %3026 = vmatpush1.bf16.msra.mxu0 0
      %3027 = vmatprep.subr.bf16.mxu0 0
      %3028 = vmatpush1.bf16.msra.mxu0 0
      %3029 = vmatprep.subr.bf16.mxu0 0
      %3030 = vmatpush1.bf16.msra.mxu0 0
      %3031 = vmatprep.subr.bf16.mxu0 0
      %3032 = vmatpush1.bf16.msra.mxu0 0
      %3033 = vmatprep.subr.bf16.mxu0 0
      %3034 = vmatpush1.bf16.msra.mxu0 %v3017
      %3035 = vmatprep.subr.bf16.mxu0 0
      %3036 = vmatpush2.bf16.msra.mxu0 0
      %3037 = vmatprep.subr.bf16.mxu0 0
      %3038 = vmatpush2.bf16.msra.mxu0 0
      %3039 = vmatprep.subr.bf16.mxu0 0
      %3040 = vmatpush2.bf16.msra.mxu0 0
      %3041 = vmatprep.subr.bf16.mxu0 0
      %3042 = vmatpush2.bf16.msra.mxu0 0
      %3043 = vmatprep.subr.bf16.mxu0 0
      %3044 = vmatpush2.bf16.msra.mxu0 0
      %3045 = vmatprep.subr.bf16.mxu0 0
      %3046 = vmatpush2.bf16.msra.mxu0 0
      %3047 = vmatprep.subr.bf16.mxu0 0
      %3048 = vmatpush2.bf16.msra.mxu0 0
      %3049 = vmatprep.subr.bf16.mxu0 0
      %3050 = vmatpush2.bf16.msra.mxu0 0
      %3051 = vmatprep.mubr.bf16.mxu0 0
      %3052 = vmatmul.mubr.bf16.gmra.mxu0 %v2996
      %v3053 = vpop.f32.mrf.mxu0
      %v3054 = vadd.f32 0.0, %v3053
      %v3055 = vpop.f32.mrf.mxu0
      %v3056 = vpop.f32.mrf.mxu0
      %v3057 = vadd.f32 0.0, %v3056
      %v3058 = vpop.f32.mrf.mxu0
      %3059 = vmatprep.mubr.bf16.mxu0 0
      %3060 = vmatmul.mubr.bf16.gmra.mxu0 %v2998
      %v3061 = vpop.f32.mrf.mxu0
      %v3062 = vadd.f32 0.0, %v3061
      %v3063 = vpop.f32.mrf.mxu0
      %v3064 = vpop.f32.mrf.mxu0
      %v3065 = vadd.f32 0.0, %v3064
      %v3066 = vpop.f32.mrf.mxu0
      %3067 = vmatprep.mubr.bf16.mxu0 0
      %3068 = vmatmul.mubr.bf16.gmra.mxu0 %v3000
      %v3069 = vpop.f32.mrf.mxu0
      %v3070 = vadd.f32 0.0, %v3069
      %v3071 = vpop.f32.mrf.mxu0
      %v3072 = vpop.f32.mrf.mxu0
      %v3073 = vadd.f32 0.0, %v3072
      %v3074 = vpop.f32.mrf.mxu0
      %3075 = vmatprep.mubr.bf16.mxu0 0
      %3076 = vmatmul.mubr.bf16.gmra.mxu0 %v3002
      %v3077 = vpop.f32.mrf.mxu0
      %v3078 = vadd.f32 0.0, %v3077
      %v3079 = vpop.f32.mrf.mxu0
      %v3080 = vpop.f32.mrf.mxu0
      %v3081 = vadd.f32 0.0, %v3080
      %v3082 = vpop.f32.mrf.mxu0
      %3083 = vmatprep.mubr.bf16.mxu0 0
      %3084 = vmatmul.mubr.bf16.gmra.mxu0 %v3004
      %v3085 = vpop.f32.mrf.mxu0
      %v3086 = vadd.f32 0.0, %v3085
      %v3087 = vpop.f32.mrf.mxu0
      %v3088 = vpop.f32.mrf.mxu0
      %v3089 = vadd.f32 0.0, %v3088
      %v3090 = vpop.f32.mrf.mxu0
      %3091 = vmatprep.mubr.bf16.mxu0 0
      %3092 = vmatmul.mubr.bf16.gmra.mxu0 %v3006
      %v3093 = vpop.f32.mrf.mxu0
      %v3094 = vadd.f32 0.0, %v3093
      %v3095 = vpop.f32.mrf.mxu0
      %v3096 = vpop.f32.mrf.mxu0
      %v3097 = vadd.f32 0.0, %v3096
      %v3098 = vpop.f32.mrf.mxu0
      %3099 = vmatprep.mubr.bf16.mxu0 0
      %3100 = vmatmul.mubr.bf16.gmra.mxu0 %v3008
      %v3101 = vpop.f32.mrf.mxu0
      %v3102 = vadd.f32 0.0, %v3101
      %v3103 = vpop.f32.mrf.mxu0
      %v3104 = vpop.f32.mrf.mxu0
      %v3105 = vadd.f32 0.0, %v3104
      %v3106 = vpop.f32.mrf.mxu0
      %3107 = vmatprep.mubr.bf16.mxu0 0
      %3108 = vmatmul.mubr.bf16.gmra.mxu0 %v3010
      %v3109 = vpop.f32.mrf.mxu0
      %v3110 = vadd.f32 0.0, %v3109
      %v3111 = vpop.f32.mrf.mxu0
      %v3112 = vpop.f32.mrf.mxu0
      %v3113 = vadd.f32 0.0, %v3112
      %v3114 = vpop.f32.mrf.mxu0
      %3115 = vmatprep.mubr.bf16.mxu0 0
      %3116 = vmatmul.mubr.bf16.gmra.mxu0 %v3012
      %v3117 = vpop.f32.mrf.mxu0
      %v3118 = vadd.f32 0.0, %v3117
      %v3119 = vpop.f32.mrf.mxu0
      %v3120 = vpop.f32.mrf.mxu0
      %v3121 = vadd.f32 0.0, %v3120
      %v3122 = vpop.f32.mrf.mxu0
      %3123 = vmatprep.mubr.bf16.mxu0 0
      %3124 = vmatmul.mubr.bf16.gmra.mxu0 %v3014
      %v3125 = vpop.f32.mrf.mxu0
      %v3126 = vadd.f32 0.0, %v3125
      %v3127 = vpop.f32.mrf.mxu0
      %v3128 = vpop.f32.mrf.mxu0
      %v3129 = vadd.f32 0.0, %v3128
      %v3130 = vpop.f32.mrf.mxu0
      %3131 = vdwg.mxu0
      %v3132 = vadd.f32 %v2340, %v3054
      %v3133 = vadd.f32 %v2343, %v3057
      %v3134 = vadd.f32 %v2348, %v3062
      %v3135 = vadd.f32 %v2351, %v3065
      %v3136 = vadd.f32 %v2356, %v3070
      %v3137 = vadd.f32 %v2359, %v3073
      %v3138 = vadd.f32 %v2364, %v3078
      %v3139 = vadd.f32 %v2367, %v3081
      %v3140 = vadd.f32 %v2372, %v3086
      %v3141 = vadd.f32 %v2375, %v3089
      %v3142 = vadd.f32 %v2380, %v3094
      %v3143 = vadd.f32 %v2383, %v3097
      %v3144 = vadd.f32 %v2388, %v3102
      %v3145 = vadd.f32 %v2391, %v3105
      %v3146 = vadd.f32 %v2396, %v3110
      %v3147 = vadd.f32 %v2399, %v3113
      %v3148 = vadd.f32 %v2404, %v3118
      %v3149 = vadd.f32 %v2407, %v3121
      %v3150 = vadd.f32 %v2412, %v3126
      %v3151 = vadd.f32 %v2415, %v3129
      %v3152 = vld [vmem:[%s5] sm:$0x1]
      %v3153 = vld [vmem:[%s5 + $0x1] sm:$0x1]
      %v3154 = vlaneseq
      %v3155 = vshrl.u32 %v3154, 7
      %v3156 = vsub.s32 0, %v3155
      %v3157 = vrot.slane %v3152, %v3156
      %v3158 = vmul.f32 %v3132, %v3157
      %v3159 = vmul.f32 %v3133, %v3157
      %v3160 = vmul.f32 %v3134, %v3157
      %v3161 = vmul.f32 %v3135, %v3157
      %v3162 = vmul.f32 %v3136, %v3157
      %v3163 = vmul.f32 %v3137, %v3157
      %v3164 = vmul.f32 %v3138, %v3157
      %v3165 = vmul.f32 %v3139, %v3157
      %v3166 = vmul.f32 %v3140, %v3157
      %v3167 = vmul.f32 %v3141, %v3157
      %v3168 = vmul.f32 %v3142, %v3157
      %v3169 = vmul.f32 %v3143, %v3157
      %v3170 = vmul.f32 %v3144, %v3157
      %v3171 = vmul.f32 %v3145, %v3157
      %v3172 = vmul.f32 %v3146, %v3157
      %v3173 = vmul.f32 %v3147, %v3157
      %v3174 = vmul.f32 %v3148, %v3157
      %v3175 = vmul.f32 %v3149, %v3157
      %v3176 = vmul.f32 %v3150, %v3157
      %v3177 = vmul.f32 %v3151, %v3157
      %v3178 = vlaneseq
      %v3179 = vshrl.u32 %v3178, 7
      %v3180 = vsub.s32 0, %v3179
      %v3181 = vrot.slane %v3153, %v3180
      %v3182 = vadd.f32 %v3158, %v3181
      %v3183 = vadd.f32 %v3159, %v3181
      %v3184 = vadd.f32 %v3160, %v3181
      %v3185 = vadd.f32 %v3161, %v3181
      %v3186 = vadd.f32 %v3162, %v3181
      %v3187 = vadd.f32 %v3163, %v3181
      %v3188 = vadd.f32 %v3164, %v3181
      %v3189 = vadd.f32 %v3165, %v3181
      %v3190 = vadd.f32 %v3166, %v3181
      %v3191 = vadd.f32 %v3167, %v3181
      %v3192 = vadd.f32 %v3168, %v3181
      %v3193 = vadd.f32 %v3169, %v3181
      %v3194 = vadd.f32 %v3170, %v3181
      %v3195 = vadd.f32 %v3171, %v3181
      %v3196 = vadd.f32 %v3172, %v3181
      %v3197 = vadd.f32 %v3173, %v3181
      %v3198 = vadd.f32 %v3174, %v3181
      %v3199 = vadd.f32 %v3175, %v3181
      %v3200 = vadd.f32 %v3176, %v3181
      %v3201 = vadd.f32 %v3177, %v3181
      %vm3202 = vcmp.ge.f32.partialorder %v3182, 0.0
      %vm3203 = vcmp.ge.f32.partialorder %v3183, 0.0
      %vm3204 = vcmp.ge.f32.partialorder %v3184, 0.0
      %vm3205 = vcmp.ge.f32.partialorder %v3185, 0.0
      %vm3206 = vcmp.ge.f32.partialorder %v3186, 0.0
      %vm3207 = vcmp.ge.f32.partialorder %v3187, 0.0
      %vm3208 = vcmp.ge.f32.partialorder %v3188, 0.0
      %vm3209 = vcmp.ge.f32.partialorder %v3189, 0.0
      %vm3210 = vcmp.ge.f32.partialorder %v3190, 0.0
      %vm3211 = vcmp.ge.f32.partialorder %v3191, 0.0
      %vm3212 = vcmp.ge.f32.partialorder %v3192, 0.0
      %vm3213 = vcmp.ge.f32.partialorder %v3193, 0.0
      %vm3214 = vcmp.ge.f32.partialorder %v3194, 0.0
      %vm3215 = vcmp.ge.f32.partialorder %v3195, 0.0
      %vm3216 = vcmp.ge.f32.partialorder %v3196, 0.0
      %vm3217 = vcmp.ge.f32.partialorder %v3197, 0.0
      %vm3218 = vcmp.ge.f32.partialorder %v3198, 0.0
      %vm3219 = vcmp.ge.f32.partialorder %v3199, 0.0
      %vm3220 = vcmp.ge.f32.partialorder %v3200, 0.0
      %vm3221 = vcmp.ge.f32.partialorder %v3201, 0.0
      %v3222 = vmul.f32 %v3182, 0.01
      %v3223 = vmul.f32 %v3183, 0.01
      %v3224 = vmul.f32 %v3184, 0.01
      %v3225 = vmul.f32 %v3185, 0.01
      %v3226 = vmul.f32 %v3186, 0.01
      %v3227 = vmul.f32 %v3187, 0.01
      %v3228 = vmul.f32 %v3188, 0.01
      %v3229 = vmul.f32 %v3189, 0.01
      %v3230 = vmul.f32 %v3190, 0.01
      %v3231 = vmul.f32 %v3191, 0.01
      %v3232 = vmul.f32 %v3192, 0.01
      %v3233 = vmul.f32 %v3193, 0.01
      %v3234 = vmul.f32 %v3194, 0.01
      %v3235 = vmul.f32 %v3195, 0.01
      %v3236 = vmul.f32 %v3196, 0.01
      %v3237 = vmul.f32 %v3197, 0.01
      %v3238 = vmul.f32 %v3198, 0.01
      %v3239 = vmul.f32 %v3199, 0.01
      %v3240 = vmul.f32 %v3200, 0.01
      %v3241 = vmul.f32 %v3201, 0.01
      %v3242 = vsel %vm3202, %v3182, %v3222
      %v3243 = vsel %vm3203, %v3183, %v3223
      %v3244 = vsel %vm3204, %v3184, %v3224
      %v3245 = vsel %vm3205, %v3185, %v3225
      %v3246 = vsel %vm3206, %v3186, %v3226
      %v3247 = vsel %vm3207, %v3187, %v3227
      %v3248 = vsel %vm3208, %v3188, %v3228
      %v3249 = vsel %vm3209, %v3189, %v3229
      %v3250 = vsel %vm3210, %v3190, %v3230
      %v3251 = vsel %vm3211, %v3191, %v3231
      %v3252 = vsel %vm3212, %v3192, %v3232
      %v3253 = vsel %vm3213, %v3193, %v3233
      %v3254 = vsel %vm3214, %v3194, %v3234
      %v3255 = vsel %vm3215, %v3195, %v3235
      %v3256 = vsel %vm3216, %v3196, %v3236
      %v3257 = vsel %vm3217, %v3197, %v3237
      %v3258 = vsel %vm3218, %v3198, %v3238
      %v3259 = vsel %vm3219, %v3199, %v3239
      %v3260 = vsel %vm3220, %v3200, %v3240
      %v3261 = vsel %vm3221, %v3201, %v3241
      %v3262 = vpack.c.bf16 %v3243, %v3242
      %v3263 = vpack.c.bf16 %v3245, %v3244
      %v3264 = vpack.c.bf16 %v3247, %v3246
      %v3265 = vpack.c.bf16 %v3249, %v3248
      %v3266 = vpack.c.bf16 %v3251, %v3250
      %v3267 = vpack.c.bf16 %v3253, %v3252
      %v3268 = vpack.c.bf16 %v3255, %v3254
      %v3269 = vpack.c.bf16 %v3257, %v3256
      %v3270 = vpack.c.bf16 %v3259, %v3258
      %v3271 = vpack.c.bf16 %v3261, %v3260
      %v3282 = vunpack.c.l.b16 %v3262
      %v3283 = vunpack.c.h.b16 %v3262
      %v3284 = vunpack.c.l.b16 %v3263
      %v3285 = vunpack.c.h.b16 %v3263
      %v3286 = vunpack.c.l.b16 %v3264
      %v3287 = vunpack.c.h.b16 %v3264
      %v3288 = vunpack.c.l.b16 %v3265
      %v3289 = vunpack.c.h.b16 %v3265
      %v3290 = vunpack.c.l.b16 %v3266
      %v3291 = vunpack.c.h.b16 %v3266
      %v3292 = vunpack.c.l.b16 %v3267
      %v3293 = vunpack.c.h.b16 %v3267
      %v3294 = vunpack.c.l.b16 %v3268
      %v3295 = vunpack.c.h.b16 %v3268
      %v3296 = vunpack.c.l.b16 %v3269
      %v3297 = vunpack.c.h.b16 %v3269
      %v3298 = vunpack.c.l.b16 %v3270
      %v3299 = vunpack.c.h.b16 %v3270
      %v3300 = vunpack.c.l.b16 %v3271
      %v3301 = vunpack.c.h.b16 %v3271
      %v3302 = vpack.c.b16 %v3282, %v3282
      %v3303 = vpack.c.b16 %v3283, %v3283
      %v3304 = vpack.c.b16 %v3284, %v3284
      %v3305 = vpack.c.b16 %v3285, %v3285
      %v3306 = vpack.c.b16 %v3286, %v3286
      %v3307 = vpack.c.b16 %v3287, %v3287
      %v3308 = vpack.c.b16 %v3288, %v3288
      %v3309 = vpack.c.b16 %v3289, %v3289
      %v3310 = vpack.c.b16 %v3290, %v3290
      %v3311 = vpack.c.b16 %v3291, %v3291
      %v3312 = vpack.c.b16 %v3292, %v3292
      %v3313 = vpack.c.b16 %v3293, %v3293
      %v3314 = vpack.c.b16 %v3294, %v3294
      %v3315 = vpack.c.b16 %v3295, %v3295
      %v3316 = vpack.c.b16 %v3296, %v3296
      %v3317 = vpack.c.b16 %v3297, %v3297
      %v3318 = vpack.c.b16 %v3298, %v3298
      %v3319 = vpack.c.b16 %v3299, %v3299
      %v3320 = vpack.c.b16 %v3300, %v3300
      %v3321 = vpack.c.b16 %v3301, %v3301
      %v3323 = vshrl.u32 %v3302, 16
      %v3325 = vrot.slane %v3323, 7
      %v3326 = vshll.u32 %v3302, 16
      %v3328 = vor.u32 %v3325, %v3326
      %v3329 = vrot.slane %v3325, 4
      %v3331 = vshrl.u32 %v3303, 16
      %v3333 = vrot.slane %v3331, 7
      %v3334 = vshll.u32 %v3303, 16
      %v3336 = vor.u32 %v3333, %v3334
      %v3337 = vsel %vm573, %v3329, %v3336
      %v3338 = vrot.slane %v3333, 4
      %v3340 = vshrl.u32 %v3304, 16
      %v3342 = vrot.slane %v3340, 7
      %v3343 = vshll.u32 %v3304, 16
      %v3345 = vor.u32 %v3342, %v3343
      %v3346 = vrot.slane %v3342, 4
      %v3348 = vshrl.u32 %v3305, 16
      %v3350 = vrot.slane %v3348, 7
      %v3351 = vshll.u32 %v3305, 16
      %v3353 = vor.u32 %v3350, %v3351
      %v3354 = vsel %vm573, %v3346, %v3353
      %v3355 = vrot.slane %v3350, 4
      %v3357 = vshrl.u32 %v3306, 16
      %v3359 = vrot.slane %v3357, 7
      %v3360 = vshll.u32 %v3306, 16
      %v3362 = vor.u32 %v3359, %v3360
      %v3363 = vrot.slane %v3359, 4
      %v3365 = vshrl.u32 %v3307, 16
      %v3367 = vrot.slane %v3365, 7
      %v3368 = vshll.u32 %v3307, 16
      %v3370 = vor.u32 %v3367, %v3368
      %v3371 = vsel %vm573, %v3363, %v3370
      %v3372 = vrot.slane %v3367, 4
      %v3374 = vshrl.u32 %v3308, 16
      %v3376 = vrot.slane %v3374, 7
      %v3377 = vshll.u32 %v3308, 16
      %v3379 = vor.u32 %v3376, %v3377
      %v3380 = vrot.slane %v3376, 4
      %v3382 = vshrl.u32 %v3309, 16
      %v3384 = vrot.slane %v3382, 7
      %v3385 = vshll.u32 %v3309, 16
      %v3387 = vor.u32 %v3384, %v3385
      %v3388 = vsel %vm573, %v3380, %v3387
      %v3389 = vrot.slane %v3384, 4
      %v3391 = vshrl.u32 %v3310, 16
      %v3393 = vrot.slane %v3391, 7
      %v3394 = vshll.u32 %v3310, 16
      %v3396 = vor.u32 %v3393, %v3394
      %v3397 = vrot.slane %v3393, 4
      %v3399 = vshrl.u32 %v3311, 16
      %v3401 = vrot.slane %v3399, 7
      %v3402 = vshll.u32 %v3311, 16
      %v3404 = vor.u32 %v3401, %v3402
      %v3405 = vsel %vm573, %v3397, %v3404
      %v3406 = vrot.slane %v3401, 4
      %v3408 = vshrl.u32 %v3312, 16
      %v3410 = vrot.slane %v3408, 7
      %v3411 = vshll.u32 %v3312, 16
      %v3413 = vor.u32 %v3410, %v3411
      %v3414 = vrot.slane %v3410, 4
      %v3416 = vshrl.u32 %v3313, 16
      %v3418 = vrot.slane %v3416, 7
      %v3419 = vshll.u32 %v3313, 16
      %v3421 = vor.u32 %v3418, %v3419
      %v3422 = vsel %vm573, %v3414, %v3421
      %v3423 = vrot.slane %v3418, 4
      %v3425 = vshrl.u32 %v3314, 16
      %v3427 = vrot.slane %v3425, 7
      %v3428 = vshll.u32 %v3314, 16
      %v3430 = vor.u32 %v3427, %v3428
      %v3431 = vrot.slane %v3427, 4
      %v3433 = vshrl.u32 %v3315, 16
      %v3435 = vrot.slane %v3433, 7
      %v3436 = vshll.u32 %v3315, 16
      %v3438 = vor.u32 %v3435, %v3436
      %v3439 = vsel %vm573, %v3431, %v3438
      %v3440 = vrot.slane %v3435, 4
      %v3442 = vshrl.u32 %v3316, 16
      %v3444 = vrot.slane %v3442, 7
      %v3445 = vshll.u32 %v3316, 16
      %v3447 = vor.u32 %v3444, %v3445
      %v3448 = vrot.slane %v3444, 4
      %v3450 = vshrl.u32 %v3317, 16
      %v3452 = vrot.slane %v3450, 7
      %v3453 = vshll.u32 %v3317, 16
      %v3455 = vor.u32 %v3452, %v3453
      %v3456 = vsel %vm573, %v3448, %v3455
      %v3457 = vrot.slane %v3452, 4
      %v3459 = vshrl.u32 %v3318, 16
      %v3461 = vrot.slane %v3459, 7
      %v3462 = vshll.u32 %v3318, 16
      %v3464 = vor.u32 %v3461, %v3462
      %v3465 = vrot.slane %v3461, 4
      %v3467 = vshrl.u32 %v3319, 16
      %v3469 = vrot.slane %v3467, 7
      %v3470 = vshll.u32 %v3319, 16
      %v3472 = vor.u32 %v3469, %v3470
      %v3473 = vsel %vm573, %v3465, %v3472
      %v3474 = vrot.slane %v3469, 4
      %v3476 = vshrl.u32 %v3320, 16
      %v3478 = vrot.slane %v3476, 7
      %v3479 = vshll.u32 %v3320, 16
      %v3481 = vor.u32 %v3478, %v3479
      %v3482 = vrot.slane %v3478, 4
      %v3484 = vshrl.u32 %v3321, 16
      %v3486 = vrot.slane %v3484, 7
      %v3487 = vshll.u32 %v3321, 16
      %v3489 = vor.u32 %v3486, %v3487
      %v3490 = vsel %vm573, %v3482, %v3489
      %v3491 = vrot.slane %v3486, 4
      %v3522 = vsel %vm736, %v3328, %v980
      %3523 = vst [vmem:[#allocation2] sm:$0xf] %v3522
      %3524 = vst.msk [vmem:[#allocation2 + $0x4] sm:$0xf] %vm740, %v3337
      %v3525 = vld [vmem:[#allocation2 + $0x8] sm:$0x1]
      %v3526 = vsel %vm433, %v3338, %v3525
      %3527 = vst [vmem:[#allocation2 + $0x8] sm:$0x1] %v3526
      %v3528 = vld [vmem:[#allocation2 + $0x10] sm:$0xf]
      %v3529 = vsel %vm736, %v3345, %v3528
      %3530 = vst [vmem:[#allocation2 + $0x10] sm:$0xf] %v3529
      %3531 = vst.msk [vmem:[#allocation2 + $0x14] sm:$0xf] %vm740, %v3354
      %v3532 = vld [vmem:[#allocation2 + $0x18] sm:$0x1]
      %v3533 = vsel %vm433, %v3355, %v3532
      %3534 = vst [vmem:[#allocation2 + $0x18] sm:$0x1] %v3533
      %v3535 = vld [vmem:[#allocation2 + $0x20] sm:$0xf]
      %v3536 = vsel %vm736, %v3362, %v3535
      %3537 = vst [vmem:[#allocation2 + $0x20] sm:$0xf] %v3536
      %3538 = vst.msk [vmem:[#allocation2 + $0x24] sm:$0xf] %vm740, %v3371
      %v3539 = vld [vmem:[#allocation2 + $0x28] sm:$0x1]
      %v3540 = vsel %vm433, %v3372, %v3539
      %3541 = vst [vmem:[#allocation2 + $0x28] sm:$0x1] %v3540
      %v3542 = vld [vmem:[#allocation2 + $0x30] sm:$0xf]
      %v3543 = vsel %vm736, %v3379, %v3542
      %3544 = vst [vmem:[#allocation2 + $0x30] sm:$0xf] %v3543
      %3545 = vst.msk [vmem:[#allocation2 + $0x34] sm:$0xf] %vm740, %v3388
      %v3546 = vld [vmem:[#allocation2 + $0x38] sm:$0x1]
      %v3547 = vsel %vm433, %v3389, %v3546
      %3548 = vst [vmem:[#allocation2 + $0x38] sm:$0x1] %v3547
      %v3549 = vld [vmem:[#allocation2 + $0x40] sm:$0xf]
      %v3550 = vsel %vm736, %v3396, %v3549
      %3551 = vst [vmem:[#allocation2 + $0x40] sm:$0xf] %v3550
      %3552 = vst.msk [vmem:[#allocation2 + $0x44] sm:$0xf] %vm740, %v3405
      %v3553 = vld [vmem:[#allocation2 + $0x48] sm:$0x1]
      %v3554 = vsel %vm433, %v3406, %v3553
      %3555 = vst [vmem:[#allocation2 + $0x48] sm:$0x1] %v3554
      %v3556 = vld [vmem:[#allocation2 + $0x50] sm:$0xf]
      %v3557 = vsel %vm736, %v3413, %v3556
      %3558 = vst [vmem:[#allocation2 + $0x50] sm:$0xf] %v3557
      %3559 = vst.msk [vmem:[#allocation2 + $0x54] sm:$0xf] %vm740, %v3422
      %v3560 = vld [vmem:[#allocation2 + $0x58] sm:$0x1]
      %v3561 = vsel %vm433, %v3423, %v3560
      %3562 = vst [vmem:[#allocation2 + $0x58] sm:$0x1] %v3561
      %v3563 = vld [vmem:[#allocation2 + $0x60] sm:$0xf]
      %v3564 = vsel %vm736, %v3430, %v3563
      %3565 = vst [vmem:[#allocation2 + $0x60] sm:$0xf] %v3564
      %3566 = vst.msk [vmem:[#allocation2 + $0x64] sm:$0xf] %vm740, %v3439
      %v3567 = vld [vmem:[#allocation2 + $0x68] sm:$0x1]
      %v3568 = vsel %vm433, %v3440, %v3567
      %3569 = vst [vmem:[#allocation2 + $0x68] sm:$0x1] %v3568
      %v3570 = vld [vmem:[#allocation2 + $0x70] sm:$0xf]
      %v3571 = vsel %vm736, %v3447, %v3570
      %3572 = vst [vmem:[#allocation2 + $0x70] sm:$0xf] %v3571
      %3573 = vst.msk [vmem:[#allocation2 + $0x74] sm:$0xf] %vm740, %v3456
      %v3574 = vld [vmem:[#allocation2 + $0x78] sm:$0x1]
      %v3575 = vsel %vm433, %v3457, %v3574
      %3576 = vst [vmem:[#allocation2 + $0x78] sm:$0x1] %v3575
      %v3577 = vld [vmem:[#allocation2 + $0x80] sm:$0xf]
      %v3578 = vsel %vm736, %v3464, %v3577
      %3579 = vst [vmem:[#allocation2 + $0x80] sm:$0xf] %v3578
      %3580 = vst.msk [vmem:[#allocation2 + $0x84] sm:$0xf] %vm740, %v3473
      %v3581 = vld [vmem:[#allocation2 + $0x88] sm:$0x1]
      %v3582 = vsel %vm433, %v3474, %v3581
      %3583 = vst [vmem:[#allocation2 + $0x88] sm:$0x1] %v3582
      %v3584 = vld [vmem:[#allocation2 + $0x90] sm:$0xf]
      %v3585 = vsel %vm736, %v3481, %v3584
      %3586 = vst [vmem:[#allocation2 + $0x90] sm:$0xf] %v3585
      %3587 = vst.msk [vmem:[#allocation2 + $0x94] sm:$0xf] %vm740, %v3490
      %v3588 = vld [vmem:[#allocation2 + $0x98] sm:$0x1]
      %v3589 = vsel %vm433, %v3491, %v3588
      %3590 = vst [vmem:[#allocation2 + $0x98] sm:$0x1] %v3589
      // Predicated region
      $region61: #{tpu_custom_call.1} parent=43 // pred_check
        %p3591 = pneg %p794
      $region62: #{tpu_custom_call.1} parent=43 // pred_check_branch
        %3593 = sbr.rel (%p3591) target = $region64
      $region63: #{tpu_custom_call.1} parent=43 // pred_region
        %v3594 = vld [vmem:[#allocation2] sm:$0xf]
        %v3595 = vsel %vm736, 0, %v3594
        %3596 = vst [vmem:[#allocation2] sm:$0xf] %v3595
        %3597 = vst.msk [vmem:[#allocation2 + $0x4] sm:$0xf] %vm740, 0
        %v3598 = vld [vmem:[#allocation2 + $0x8] sm:$0x1]
        %v3599 = vsel %vm433, 0, %v3598
        %3600 = vst [vmem:[#allocation2 + $0x8] sm:$0x1] %v3599
      $region64: #{tpu_custom_call.1} parent=43 // pred_fallthru
        _
      // Predicated region
      $region65: #{tpu_custom_call.1} parent=43 // pred_check
        %p3601 = pneg %p886
      $region66: #{tpu_custom_call.1} parent=43 // pred_check_branch
        %3603 = sbr.rel (%p3601) target = $region68
      $region67: #{tpu_custom_call.1} parent=43 // pred_region
        %s3604 = scalar_lea.vmem [#allocation2], 144
        %v3605 = vld [vmem:[%s3604] sm:$0xf]
        %v3606 = vsel %vm736, 0, %v3605
        %3607 = vst [vmem:[%s3604] sm:$0xf] %v3606
        %3608 = vst.msk [vmem:[%s3604 + $0x4] sm:$0xf] %vm740, 0
        %v3609 = vld [vmem:[%s3604 + $0x8] sm:$0x1]
        %v3610 = vsel %vm433, 0, %v3609
        %3611 = vst [vmem:[%s3604 + $0x8] sm:$0x1] %v3610
      $region68: #{tpu_custom_call.1} parent=43 // pred_fallthru
        _
      %v3612 = vld [vmem:[#allocation2] sm:$0xf]
      %v3613 = vld [vmem:[#allocation2 + $0x4] sm:$0xf]
      %v3614 = vld [vmem:[#allocation2 + $0x10] sm:$0xf]
      %v3615 = vld [vmem:[#allocation2 + $0x14] sm:$0xf]
      %v3616 = vld [vmem:[#allocation2 + $0x20] sm:$0xf]
      %v3617 = vld [vmem:[#allocation2 + $0x24] sm:$0xf]
      %v3618 = vld [vmem:[#allocation2 + $0x30] sm:$0xf]
      %v3619 = vld [vmem:[#allocation2 + $0x34] sm:$0xf]
      %v3620 = vld [vmem:[#allocation2 + $0x40] sm:$0xf]
      %v3621 = vld [vmem:[#allocation2 + $0x44] sm:$0xf]
      %v3622 = vld [vmem:[#allocation2 + $0x50] sm:$0xf]
      %v3623 = vld [vmem:[#allocation2 + $0x54] sm:$0xf]
      %v3624 = vld [vmem:[#allocation2 + $0x60] sm:$0xf]
      %v3625 = vld [vmem:[#allocation2 + $0x64] sm:$0xf]
      %v3626 = vld [vmem:[#allocation2 + $0x70] sm:$0xf]
      %v3627 = vld [vmem:[#allocation2 + $0x74] sm:$0xf]
      %v3628 = vld [vmem:[#allocation2 + $0x8] sm:$0x1]
      %v3629 = vld [vmem:[#allocation2 + $0x18] sm:$0x1]
      %v3630 = vld [vmem:[#allocation2 + $0x28] sm:$0x1]
      %v3631 = vld [vmem:[#allocation2 + $0x38] sm:$0x1]
      %v3632 = vld [vmem:[#allocation2 + $0x48] sm:$0x1]
      %v3633 = vld [vmem:[#allocation2 + $0x58] sm:$0x1]
      %v3634 = vld [vmem:[#allocation2 + $0x68] sm:$0x1]
      %v3635 = vld [vmem:[#allocation2 + $0x78] sm:$0x1]
      %v3637 = vshrl.u32 %v3612, 16
      %v3639 = vrot.slane %v3637, 4
      %v3640 = vshll.u32 %v3612, 16
      %v3642 = vrot.slane %v3640, 5
      %v3643 = vor.u32 %v3639, %v3642
      %v3644 = vrot.slane %v3643, 4
      %v3646 = vshll.u32 %v3613, 16
      %v3648 = vrot.slane %v3646, 5
      %v3649 = vsel %vm1012, %v3644, %v3648
      %v3650 = vshrl.u32 %v3613, 16
      %v3652 = vrot.slane %v3650, 4
      %v3653 = vor.u32 %v3652, %v3648
      %v3654 = vrot.slane %v3653, 4
      %v3656 = vshll.u32 %v3628, 16
      %v3658 = vrot.slane %v3656, 5
      %v3659 = vsel %vm1012, %v3654, %v3658
      %v3661 = vshrl.u32 %v3614, 16
      %v3663 = vrot.slane %v3661, 4
      %v3664 = vshll.u32 %v3614, 16
      %v3666 = vrot.slane %v3664, 5
      %v3667 = vor.u32 %v3663, %v3666
      %v3668 = vrot.slane %v3667, 4
      %v3670 = vshll.u32 %v3615, 16
      %v3672 = vrot.slane %v3670, 5
      %v3673 = vsel %vm1012, %v3668, %v3672
      %v3674 = vshrl.u32 %v3615, 16
      %v3676 = vrot.slane %v3674, 4
      %v3677 = vor.u32 %v3676, %v3672
      %v3678 = vrot.slane %v3677, 4
      %v3680 = vshll.u32 %v3629, 16
      %v3682 = vrot.slane %v3680, 5
      %v3683 = vsel %vm1012, %v3678, %v3682
      %v3685 = vshrl.u32 %v3616, 16
      %v3687 = vrot.slane %v3685, 4
      %v3688 = vshll.u32 %v3616, 16
      %v3690 = vrot.slane %v3688, 5
      %v3691 = vor.u32 %v3687, %v3690
      %v3692 = vrot.slane %v3691, 4
      %v3694 = vshll.u32 %v3617, 16
      %v3696 = vrot.slane %v3694, 5
      %v3697 = vsel %vm1012, %v3692, %v3696
      %v3698 = vshrl.u32 %v3617, 16
      %v3700 = vrot.slane %v3698, 4
      %v3701 = vor.u32 %v3700, %v3696
      %v3702 = vrot.slane %v3701, 4
      %v3704 = vshll.u32 %v3630, 16
      %v3706 = vrot.slane %v3704, 5
      %v3707 = vsel %vm1012, %v3702, %v3706
      %v3709 = vshrl.u32 %v3618, 16
      %v3711 = vrot.slane %v3709, 4
      %v3712 = vshll.u32 %v3618, 16
      %v3714 = vrot.slane %v3712, 5
      %v3715 = vor.u32 %v3711, %v3714
      %v3716 = vrot.slane %v3715, 4
      %v3718 = vshll.u32 %v3619, 16
      %v3720 = vrot.slane %v3718, 5
      %v3721 = vsel %vm1012, %v3716, %v3720
      %v3722 = vshrl.u32 %v3619, 16
      %v3724 = vrot.slane %v3722, 4
      %v3725 = vor.u32 %v3724, %v3720
      %v3726 = vrot.slane %v3725, 4
      %v3728 = vshll.u32 %v3631, 16
      %v3730 = vrot.slane %v3728, 5
      %v3731 = vsel %vm1012, %v3726, %v3730
      %v3733 = vshrl.u32 %v3620, 16
      %v3735 = vrot.slane %v3733, 4
      %v3736 = vshll.u32 %v3620, 16
      %v3738 = vrot.slane %v3736, 5
      %v3739 = vor.u32 %v3735, %v3738
      %v3740 = vrot.slane %v3739, 4
      %v3742 = vshll.u32 %v3621, 16
      %v3744 = vrot.slane %v3742, 5
      %v3745 = vsel %vm1012, %v3740, %v3744
      %v3746 = vshrl.u32 %v3621, 16
      %v3748 = vrot.slane %v3746, 4
      %v3749 = vor.u32 %v3748, %v3744
      %v3750 = vrot.slane %v3749, 4
      %v3752 = vshll.u32 %v3632, 16
      %v3754 = vrot.slane %v3752, 5
      %v3755 = vsel %vm1012, %v3750, %v3754
      %v3757 = vshrl.u32 %v3622, 16
      %v3759 = vrot.slane %v3757, 4
      %v3760 = vshll.u32 %v3622, 16
      %v3762 = vrot.slane %v3760, 5
      %v3763 = vor.u32 %v3759, %v3762
      %v3764 = vrot.slane %v3763, 4
      %v3766 = vshll.u32 %v3623, 16
      %v3768 = vrot.slane %v3766, 5
      %v3769 = vsel %vm1012, %v3764, %v3768
      %v3770 = vshrl.u32 %v3623, 16
      %v3772 = vrot.slane %v3770, 4
      %v3773 = vor.u32 %v3772, %v3768
      %v3774 = vrot.slane %v3773, 4
      %v3776 = vshll.u32 %v3633, 16
      %v3778 = vrot.slane %v3776, 5
      %v3779 = vsel %vm1012, %v3774, %v3778
      %v3781 = vshrl.u32 %v3624, 16
      %v3783 = vrot.slane %v3781, 4
      %v3784 = vshll.u32 %v3624, 16
      %v3786 = vrot.slane %v3784, 5
      %v3787 = vor.u32 %v3783, %v3786
      %v3788 = vrot.slane %v3787, 4
      %v3790 = vshll.u32 %v3625, 16
      %v3792 = vrot.slane %v3790, 5
      %v3793 = vsel %vm1012, %v3788, %v3792
      %v3794 = vshrl.u32 %v3625, 16
      %v3796 = vrot.slane %v3794, 4
      %v3797 = vor.u32 %v3796, %v3792
      %v3798 = vrot.slane %v3797, 4
      %v3800 = vshll.u32 %v3634, 16
      %v3802 = vrot.slane %v3800, 5
      %v3803 = vsel %vm1012, %v3798, %v3802
      %v3805 = vshrl.u32 %v3626, 16
      %v3807 = vrot.slane %v3805, 4
      %v3808 = vshll.u32 %v3626, 16
      %v3810 = vrot.slane %v3808, 5
      %v3811 = vor.u32 %v3807, %v3810
      %v3812 = vrot.slane %v3811, 4
      %v3814 = vshll.u32 %v3627, 16
      %v3816 = vrot.slane %v3814, 5
      %v3817 = vsel %vm1012, %v3812, %v3816
      %v3818 = vshrl.u32 %v3627, 16
      %v3820 = vrot.slane %v3818, 4
      %v3821 = vor.u32 %v3820, %v3816
      %v3822 = vrot.slane %v3821, 4
      %v3824 = vshll.u32 %v3635, 16
      %v3826 = vrot.slane %v3824, 5
      %v3827 = vsel %vm1012, %v3822, %v3826
      %v3828 = vld [vmem:[#allocation2] sm:$0xe]
      %v3829 = vld [vmem:[#allocation2 + $0x10] sm:$0xe]
      %v3830 = vld [vmem:[#allocation2 + $0x20] sm:$0xe]
      %v3831 = vld [vmem:[#allocation2 + $0x30] sm:$0xe]
      %v3832 = vld [vmem:[#allocation2 + $0x40] sm:$0xe]
      %v3833 = vld [vmem:[#allocation2 + $0x50] sm:$0xe]
      %v3834 = vld [vmem:[#allocation2 + $0x60] sm:$0xe]
      %v3835 = vld [vmem:[#allocation2 + $0x70] sm:$0xe]
      %v3860 = vrot.slane %v3828, 5
      %v3861 = vrot.slane %v3860, 4
      %v3862 = vrot.slane %v3613, 5
      %v3863 = vsel %vm1295, %v3861, %v3862
      %v3864 = vrot.slane %v3862, 4
      %v3865 = vrot.slane %v3628, 5
      %v3866 = vsel %vm1295, %v3864, %v3865
      %v3867 = vrot.slane %v3829, 5
      %v3868 = vrot.slane %v3867, 4
      %v3869 = vrot.slane %v3615, 5
      %v3870 = vsel %vm1295, %v3868, %v3869
      %v3871 = vrot.slane %v3869, 4
      %v3872 = vrot.slane %v3629, 5
      %v3873 = vsel %vm1295, %v3871, %v3872
      %v3874 = vrot.slane %v3830, 5
      %v3875 = vrot.slane %v3874, 4
      %v3876 = vrot.slane %v3617, 5
      %v3877 = vsel %vm1295, %v3875, %v3876
      %v3878 = vrot.slane %v3876, 4
      %v3879 = vrot.slane %v3630, 5
      %v3880 = vsel %vm1295, %v3878, %v3879
      %v3881 = vrot.slane %v3831, 5
      %v3882 = vrot.slane %v3881, 4
      %v3883 = vrot.slane %v3619, 5
      %v3884 = vsel %vm1295, %v3882, %v3883
      %v3885 = vrot.slane %v3883, 4
      %v3886 = vrot.slane %v3631, 5
      %v3887 = vsel %vm1295, %v3885, %v3886
      %v3888 = vrot.slane %v3832, 5
      %v3889 = vrot.slane %v3888, 4
      %v3890 = vrot.slane %v3621, 5
      %v3891 = vsel %vm1295, %v3889, %v3890
      %v3892 = vrot.slane %v3890, 4
      %v3893 = vrot.slane %v3632, 5
      %v3894 = vsel %vm1295, %v3892, %v3893
      %v3895 = vrot.slane %v3833, 5
      %v3896 = vrot.slane %v3895, 4
      %v3897 = vrot.slane %v3623, 5
      %v3898 = vsel %vm1295, %v3896, %v3897
      %v3899 = vrot.slane %v3897, 4
      %v3900 = vrot.slane %v3633, 5
      %v3901 = vsel %vm1295, %v3899, %v3900
      %v3902 = vrot.slane %v3834, 5
      %v3903 = vrot.slane %v3902, 4
      %v3904 = vrot.slane %v3625, 5
      %v3905 = vsel %vm1295, %v3903, %v3904
      %v3906 = vrot.slane %v3904, 4
      %v3907 = vrot.slane %v3634, 5
      %v3908 = vsel %vm1295, %v3906, %v3907
      %v3909 = vrot.slane %v3835, 5
      %v3910 = vrot.slane %v3909, 4
      %v3911 = vrot.slane %v3627, 5
      %v3912 = vsel %vm1295, %v3910, %v3911
      %v3913 = vrot.slane %v3911, 4
      %v3914 = vrot.slane %v3635, 5
      %v3915 = vsel %vm1295, %v3913, %v3914
      %v3924 = vunpack.c.l.b16 %v3612
      %v3925 = vunpack.c.l.b16 %v3613
      %v3926 = vunpack.c.l.b16 %v3614
      %v3927 = vunpack.c.l.b16 %v3615
      %v3928 = vunpack.c.l.b16 %v3616
      %v3929 = vunpack.c.l.b16 %v3617
      %v3930 = vunpack.c.l.b16 %v3618
      %v3931 = vunpack.c.l.b16 %v3619
      %v3932 = vunpack.c.l.b16 %v3620
      %v3933 = vunpack.c.l.b16 %v3621
      %v3934 = vunpack.c.l.b16 %v3622
      %v3935 = vunpack.c.l.b16 %v3623
      %v3936 = vunpack.c.l.b16 %v3624
      %v3937 = vunpack.c.l.b16 %v3625
      %v3938 = vunpack.c.l.b16 %v3626
      %v3939 = vunpack.c.l.b16 %v3627
      %v3940 = vpack.c.b16 %v3925, %v3924
      %v3941 = vpack.c.b16 %v3927, %v3926
      %v3942 = vpack.c.b16 %v3929, %v3928
      %v3943 = vpack.c.b16 %v3931, %v3930
      %v3944 = vpack.c.b16 %v3933, %v3932
      %v3945 = vpack.c.b16 %v3935, %v3934
      %v3946 = vpack.c.b16 %v3937, %v3936
      %v3947 = vpack.c.b16 %v3939, %v3938
      %v3948 = vunpack.c.l.b16 %v3649
      %v3949 = vunpack.c.l.b16 %v3659
      %v3950 = vunpack.c.l.b16 %v3673
      %v3951 = vunpack.c.l.b16 %v3683
      %v3952 = vunpack.c.l.b16 %v3697
      %v3953 = vunpack.c.l.b16 %v3707
      %v3954 = vunpack.c.l.b16 %v3721
      %v3955 = vunpack.c.l.b16 %v3731
      %v3956 = vunpack.c.l.b16 %v3745
      %v3957 = vunpack.c.l.b16 %v3755
      %v3958 = vunpack.c.l.b16 %v3769
      %v3959 = vunpack.c.l.b16 %v3779
      %v3960 = vunpack.c.l.b16 %v3793
      %v3961 = vunpack.c.l.b16 %v3803
      %v3962 = vunpack.c.l.b16 %v3817
      %v3963 = vunpack.c.l.b16 %v3827
      %v3964 = vpack.c.b16 %v3949, %v3948
      %v3965 = vpack.c.b16 %v3951, %v3950
      %v3966 = vpack.c.b16 %v3953, %v3952
      %v3967 = vpack.c.b16 %v3955, %v3954
      %v3968 = vpack.c.b16 %v3957, %v3956
      %v3969 = vpack.c.b16 %v3959, %v3958
      %v3970 = vpack.c.b16 %v3961, %v3960
      %v3971 = vpack.c.b16 %v3963, %v3962
      %3972 = vrot.lane.b32.xlu0 %v3964, 4
      %v3973 = vpop.permute.xlu0 %3972
      %3974 = vrot.lane.b32.xlu0 %v3965, 4
      %v3975 = vpop.permute.xlu0 %3974
      %3976 = vrot.lane.b32.xlu0 %v3966, 4
      %v3977 = vpop.permute.xlu0 %3976
      %3978 = vrot.lane.b32.xlu0 %v3967, 4
      %v3979 = vpop.permute.xlu0 %3978
      %3980 = vrot.lane.b32.xlu0 %v3968, 4
      %v3981 = vpop.permute.xlu0 %3980
      %3982 = vrot.lane.b32.xlu0 %v3969, 4
      %v3983 = vpop.permute.xlu0 %3982
      %3984 = vrot.lane.b32.xlu0 %v3970, 4
      %v3985 = vpop.permute.xlu0 %3984
      %3986 = vrot.lane.b32.xlu0 %v3971, 4
      %v3987 = vpop.permute.xlu0 %3986
      %v3988 = vunpack.c.l.b16 %v3863
      %v3989 = vunpack.c.l.b16 %v3866
      %v3990 = vunpack.c.l.b16 %v3870
      %v3991 = vunpack.c.l.b16 %v3873
      %v3992 = vunpack.c.l.b16 %v3877
      %v3993 = vunpack.c.l.b16 %v3880
      %v3994 = vunpack.c.l.b16 %v3884
      %v3995 = vunpack.c.l.b16 %v3887
      %v3996 = vunpack.c.l.b16 %v3891
      %v3997 = vunpack.c.l.b16 %v3894
      %v3998 = vunpack.c.l.b16 %v3898
      %v3999 = vunpack.c.l.b16 %v3901
      %v4000 = vunpack.c.l.b16 %v3905
      %v4001 = vunpack.c.l.b16 %v3908
      %v4002 = vunpack.c.l.b16 %v3912
      %v4003 = vunpack.c.l.b16 %v3915
      %v4004 = vpack.c.b16 %v3989, %v3988
      %v4005 = vpack.c.b16 %v3991, %v3990
      %v4006 = vpack.c.b16 %v3993, %v3992
      %v4007 = vpack.c.b16 %v3995, %v3994
      %v4008 = vpack.c.b16 %v3997, %v3996
      %v4009 = vpack.c.b16 %v3999, %v3998
      %v4010 = vpack.c.b16 %v4001, %v4000
      %v4011 = vpack.c.b16 %v4003, %v4002
      %4012 = vrot.lane.b32.xlu0 %v4004, 8
      %v4013 = vpop.permute.xlu0 %4012
      %4014 = vrot.lane.b32.xlu0 %v4005, 8
      %v4015 = vpop.permute.xlu0 %4014
      %4016 = vrot.lane.b32.xlu0 %v4006, 8
      %v4017 = vpop.permute.xlu0 %4016
      %4018 = vrot.lane.b32.xlu0 %v4007, 8
      %v4019 = vpop.permute.xlu0 %4018
      %4020 = vrot.lane.b32.xlu0 %v4008, 8
      %v4021 = vpop.permute.xlu0 %4020
      %4022 = vrot.lane.b32.xlu0 %v4009, 8
      %v4023 = vpop.permute.xlu0 %4022
      %4024 = vrot.lane.b32.xlu0 %v4010, 8
      %v4025 = vpop.permute.xlu0 %4024
      %4026 = vrot.lane.b32.xlu0 %v4011, 8
      %v4027 = vpop.permute.xlu0 %4026
      %v4030 = vsel %vm1506, %v3940, %v3973
      %v4033 = vsel %vm1506, %v3941, %v3975
      %v4036 = vsel %vm1506, %v3942, %v3977
      %v4039 = vsel %vm1506, %v3943, %v3979
      %v4042 = vsel %vm1506, %v3944, %v3981
      %v4045 = vsel %vm1506, %v3945, %v3983
      %v4048 = vsel %vm1506, %v3946, %v3985
      %v4051 = vsel %vm1506, %v3947, %v3987
      %v4053 = vsel %vm1537, %v4030, %v4013
      %v4055 = vsel %vm1537, %v4033, %v4015
      %v4057 = vsel %vm1537, %v4036, %v4017
      %v4059 = vsel %vm1537, %v4039, %v4019
      %v4061 = vsel %vm1537, %v4042, %v4021
      %v4063 = vsel %vm1537, %v4045, %v4023
      %v4065 = vsel %vm1537, %v4048, %v4025
      %v4067 = vsel %vm1537, %v4051, %v4027
      %v4068 = vld [vmem:[%s4] sm:$0xf]
      %v4069 = vld [vmem:[%s4 + $0x4] sm:$0x3]
      %v4070 = vld [vmem:[%s1560] sm:$0xf]
      %v4071 = vld [vmem:[%s1560 + $0x4] sm:$0xf]
      %v4072 = vld [vmem:[%s1560 + $0x10] sm:$0xf]
      %v4073 = vld [vmem:[%s1560 + $0x14] sm:$0xf]
      %v4074 = vld [vmem:[%s1560 + $0x20] sm:$0xf]
      %v4075 = vld [vmem:[%s1560 + $0x24] sm:$0xf]
      %v4076 = vld [vmem:[%s1560 + $0x30] sm:$0xf]
      %v4077 = vld [vmem:[%s1560 + $0x34] sm:$0xf]
      %v4078 = vld [vmem:[%s1560 + $0x40] sm:$0xf]
      %v4079 = vld [vmem:[%s1560 + $0x44] sm:$0xf]
      %v4080 = vld [vmem:[%s1560 + $0x50] sm:$0xf]
      %v4081 = vld [vmem:[%s1560 + $0x54] sm:$0xf]
      %v4082 = vld [vmem:[%s1560 + $0x60] sm:$0xf]
      %v4083 = vld [vmem:[%s1560 + $0x64] sm:$0xf]
      %v4084 = vld [vmem:[%s1560 + $0x70] sm:$0xf]
      %v4085 = vld [vmem:[%s1560 + $0x74] sm:$0xf]
      %v4086 = vld [vmem:[%s1560 + $0x8] sm:$0x1]
      %v4087 = vld [vmem:[%s1560 + $0x18] sm:$0x1]
      %v4088 = vld [vmem:[%s1560 + $0x28] sm:$0x1]
      %v4089 = vld [vmem:[%s1560 + $0x38] sm:$0x1]
      %v4090 = vld [vmem:[%s1560 + $0x48] sm:$0x1]
      %v4091 = vld [vmem:[%s1560 + $0x58] sm:$0x1]
      %v4092 = vld [vmem:[%s1560 + $0x68] sm:$0x1]
      %v4093 = vld [vmem:[%s1560 + $0x78] sm:$0x1]
      %v4095 = vshrl.u32 %v4070, 16
      %v4097 = vrot.slane %v4095, 4
      %v4098 = vshll.u32 %v4070, 16
      %v4100 = vrot.slane %v4098, 5
      %v4101 = vor.u32 %v4097, %v4100
      %v4102 = vrot.slane %v4101, 4
      %v4104 = vshll.u32 %v4071, 16
      %v4106 = vrot.slane %v4104, 5
      %v4107 = vsel %vm1012, %v4102, %v4106
      %v4108 = vshrl.u32 %v4071, 16
      %v4110 = vrot.slane %v4108, 4
      %v4111 = vor.u32 %v4110, %v4106
      %v4112 = vrot.slane %v4111, 4
      %v4114 = vshll.u32 %v4086, 16
      %v4116 = vrot.slane %v4114, 5
      %v4117 = vsel %vm1012, %v4112, %v4116
      %v4119 = vshrl.u32 %v4072, 16
      %v4121 = vrot.slane %v4119, 4
      %v4122 = vshll.u32 %v4072, 16
      %v4124 = vrot.slane %v4122, 5
      %v4125 = vor.u32 %v4121, %v4124
      %v4126 = vrot.slane %v4125, 4
      %v4128 = vshll.u32 %v4073, 16
      %v4130 = vrot.slane %v4128, 5
      %v4131 = vsel %vm1012, %v4126, %v4130
      %v4132 = vshrl.u32 %v4073, 16
      %v4134 = vrot.slane %v4132, 4
      %v4135 = vor.u32 %v4134, %v4130
      %v4136 = vrot.slane %v4135, 4
      %v4138 = vshll.u32 %v4087, 16
      %v4140 = vrot.slane %v4138, 5
      %v4141 = vsel %vm1012, %v4136, %v4140
      %v4143 = vshrl.u32 %v4074, 16
      %v4145 = vrot.slane %v4143, 4
      %v4146 = vshll.u32 %v4074, 16
      %v4148 = vrot.slane %v4146, 5
      %v4149 = vor.u32 %v4145, %v4148
      %v4150 = vrot.slane %v4149, 4
      %v4152 = vshll.u32 %v4075, 16
      %v4154 = vrot.slane %v4152, 5
      %v4155 = vsel %vm1012, %v4150, %v4154
      %v4156 = vshrl.u32 %v4075, 16
      %v4158 = vrot.slane %v4156, 4
      %v4159 = vor.u32 %v4158, %v4154
      %v4160 = vrot.slane %v4159, 4
      %v4162 = vshll.u32 %v4088, 16
      %v4164 = vrot.slane %v4162, 5
      %v4165 = vsel %vm1012, %v4160, %v4164
      %v4167 = vshrl.u32 %v4076, 16
      %v4169 = vrot.slane %v4167, 4
      %v4170 = vshll.u32 %v4076, 16
      %v4172 = vrot.slane %v4170, 5
      %v4173 = vor.u32 %v4169, %v4172
      %v4174 = vrot.slane %v4173, 4
      %v4176 = vshll.u32 %v4077, 16
      %v4178 = vrot.slane %v4176, 5
      %v4179 = vsel %vm1012, %v4174, %v4178
      %v4180 = vshrl.u32 %v4077, 16
      %v4182 = vrot.slane %v4180, 4
      %v4183 = vor.u32 %v4182, %v4178
      %v4184 = vrot.slane %v4183, 4
      %v4186 = vshll.u32 %v4089, 16
      %v4188 = vrot.slane %v4186, 5
      %v4189 = vsel %vm1012, %v4184, %v4188
      %v4191 = vshrl.u32 %v4078, 16
      %v4193 = vrot.slane %v4191, 4
      %v4194 = vshll.u32 %v4078, 16
      %v4196 = vrot.slane %v4194, 5
      %v4197 = vor.u32 %v4193, %v4196
      %v4198 = vrot.slane %v4197, 4
      %v4200 = vshll.u32 %v4079, 16
      %v4202 = vrot.slane %v4200, 5
      %v4203 = vsel %vm1012, %v4198, %v4202
      %v4204 = vshrl.u32 %v4079, 16
      %v4206 = vrot.slane %v4204, 4
      %v4207 = vor.u32 %v4206, %v4202
      %v4208 = vrot.slane %v4207, 4
      %v4210 = vshll.u32 %v4090, 16
      %v4212 = vrot.slane %v4210, 5
      %v4213 = vsel %vm1012, %v4208, %v4212
      %v4215 = vshrl.u32 %v4080, 16
      %v4217 = vrot.slane %v4215, 4
      %v4218 = vshll.u32 %v4080, 16
      %v4220 = vrot.slane %v4218, 5
      %v4221 = vor.u32 %v4217, %v4220
      %v4222 = vrot.slane %v4221, 4
      %v4224 = vshll.u32 %v4081, 16
      %v4226 = vrot.slane %v4224, 5
      %v4227 = vsel %vm1012, %v4222, %v4226
      %v4228 = vshrl.u32 %v4081, 16
      %v4230 = vrot.slane %v4228, 4
      %v4231 = vor.u32 %v4230, %v4226
      %v4232 = vrot.slane %v4231, 4
      %v4234 = vshll.u32 %v4091, 16
      %v4236 = vrot.slane %v4234, 5
      %v4237 = vsel %vm1012, %v4232, %v4236
      %v4239 = vshrl.u32 %v4082, 16
      %v4241 = vrot.slane %v4239, 4
      %v4242 = vshll.u32 %v4082, 16
      %v4244 = vrot.slane %v4242, 5
      %v4245 = vor.u32 %v4241, %v4244
      %v4246 = vrot.slane %v4245, 4
      %v4248 = vshll.u32 %v4083, 16
      %v4250 = vrot.slane %v4248, 5
      %v4251 = vsel %vm1012, %v4246, %v4250
      %v4252 = vshrl.u32 %v4083, 16
      %v4254 = vrot.slane %v4252, 4
      %v4255 = vor.u32 %v4254, %v4250
      %v4256 = vrot.slane %v4255, 4
      %v4258 = vshll.u32 %v4092, 16
      %v4260 = vrot.slane %v4258, 5
      %v4261 = vsel %vm1012, %v4256, %v4260
      %v4263 = vshrl.u32 %v4084, 16
      %v4265 = vrot.slane %v4263, 4
      %v4266 = vshll.u32 %v4084, 16
      %v4268 = vrot.slane %v4266, 5
      %v4269 = vor.u32 %v4265, %v4268
      %v4270 = vrot.slane %v4269, 4
      %v4272 = vshll.u32 %v4085, 16
      %v4274 = vrot.slane %v4272, 5
      %v4275 = vsel %vm1012, %v4270, %v4274
      %v4276 = vshrl.u32 %v4085, 16
      %v4278 = vrot.slane %v4276, 4
      %v4279 = vor.u32 %v4278, %v4274
      %v4280 = vrot.slane %v4279, 4
      %v4282 = vshll.u32 %v4093, 16
      %v4284 = vrot.slane %v4282, 5
      %v4285 = vsel %vm1012, %v4280, %v4284
      %v4286 = vld [vmem:[%s1560] sm:$0xe]
      %v4287 = vld [vmem:[%s1560 + $0x10] sm:$0xe]
      %v4288 = vld [vmem:[%s1560 + $0x20] sm:$0xe]
      %v4289 = vld [vmem:[%s1560 + $0x30] sm:$0xe]
      %v4290 = vld [vmem:[%s1560 + $0x40] sm:$0xe]
      %v4291 = vld [vmem:[%s1560 + $0x50] sm:$0xe]
      %v4292 = vld [vmem:[%s1560 + $0x60] sm:$0xe]
      %v4293 = vld [vmem:[%s1560 + $0x70] sm:$0xe]
      %v4318 = vrot.slane %v4286, 5
      %v4319 = vrot.slane %v4318, 4
      %v4320 = vrot.slane %v4071, 5
      %v4321 = vsel %vm1295, %v4319, %v4320
      %v4322 = vrot.slane %v4320, 4
      %v4323 = vrot.slane %v4086, 5
      %v4324 = vsel %vm1295, %v4322, %v4323
      %v4325 = vrot.slane %v4287, 5
      %v4326 = vrot.slane %v4325, 4
      %v4327 = vrot.slane %v4073, 5
      %v4328 = vsel %vm1295, %v4326, %v4327
      %v4329 = vrot.slane %v4327, 4
      %v4330 = vrot.slane %v4087, 5
      %v4331 = vsel %vm1295, %v4329, %v4330
      %v4332 = vrot.slane %v4288, 5
      %v4333 = vrot.slane %v4332, 4
      %v4334 = vrot.slane %v4075, 5
      %v4335 = vsel %vm1295, %v4333, %v4334
      %v4336 = vrot.slane %v4334, 4
      %v4337 = vrot.slane %v4088, 5
      %v4338 = vsel %vm1295, %v4336, %v4337
      %v4339 = vrot.slane %v4289, 5
      %v4340 = vrot.slane %v4339, 4
      %v4341 = vrot.slane %v4077, 5
      %v4342 = vsel %vm1295, %v4340, %v4341
      %v4343 = vrot.slane %v4341, 4
      %v4344 = vrot.slane %v4089, 5
      %v4345 = vsel %vm1295, %v4343, %v4344
      %v4346 = vrot.slane %v4290, 5
      %v4347 = vrot.slane %v4346, 4
      %v4348 = vrot.slane %v4079, 5
      %v4349 = vsel %vm1295, %v4347, %v4348
      %v4350 = vrot.slane %v4348, 4
      %v4351 = vrot.slane %v4090, 5
      %v4352 = vsel %vm1295, %v4350, %v4351
      %v4353 = vrot.slane %v4291, 5
      %v4354 = vrot.slane %v4353, 4
      %v4355 = vrot.slane %v4081, 5
      %v4356 = vsel %vm1295, %v4354, %v4355
      %v4357 = vrot.slane %v4355, 4
      %v4358 = vrot.slane %v4091, 5
      %v4359 = vsel %vm1295, %v4357, %v4358
      %v4360 = vrot.slane %v4292, 5
      %v4361 = vrot.slane %v4360, 4
      %v4362 = vrot.slane %v4083, 5
      %v4363 = vsel %vm1295, %v4361, %v4362
      %v4364 = vrot.slane %v4362, 4
      %v4365 = vrot.slane %v4092, 5
      %v4366 = vsel %vm1295, %v4364, %v4365
      %v4367 = vrot.slane %v4293, 5
      %v4368 = vrot.slane %v4367, 4
      %v4369 = vrot.slane %v4085, 5
      %v4370 = vsel %vm1295, %v4368, %v4369
      %v4371 = vrot.slane %v4369, 4
      %v4372 = vrot.slane %v4093, 5
      %v4373 = vsel %vm1295, %v4371, %v4372
      %v4382 = vunpack.c.l.b16 %v4070
      %v4383 = vunpack.c.l.b16 %v4071
      %v4384 = vunpack.c.l.b16 %v4072
      %v4385 = vunpack.c.l.b16 %v4073
      %v4386 = vunpack.c.l.b16 %v4074
      %v4387 = vunpack.c.l.b16 %v4075
      %v4388 = vunpack.c.l.b16 %v4076
      %v4389 = vunpack.c.l.b16 %v4077
      %v4390 = vunpack.c.l.b16 %v4078
      %v4391 = vunpack.c.l.b16 %v4079
      %v4392 = vunpack.c.l.b16 %v4080
      %v4393 = vunpack.c.l.b16 %v4081
      %v4394 = vunpack.c.l.b16 %v4082
      %v4395 = vunpack.c.l.b16 %v4083
      %v4396 = vunpack.c.l.b16 %v4084
      %v4397 = vunpack.c.l.b16 %v4085
      %v4398 = vpack.c.b16 %v4383, %v4382
      %v4399 = vpack.c.b16 %v4385, %v4384
      %v4400 = vpack.c.b16 %v4387, %v4386
      %v4401 = vpack.c.b16 %v4389, %v4388
      %v4402 = vpack.c.b16 %v4391, %v4390
      %v4403 = vpack.c.b16 %v4393, %v4392
      %v4404 = vpack.c.b16 %v4395, %v4394
      %v4405 = vpack.c.b16 %v4397, %v4396
      %v4406 = vunpack.c.l.b16 %v4107
      %v4407 = vunpack.c.l.b16 %v4117
      %v4408 = vunpack.c.l.b16 %v4131
      %v4409 = vunpack.c.l.b16 %v4141
      %v4410 = vunpack.c.l.b16 %v4155
      %v4411 = vunpack.c.l.b16 %v4165
      %v4412 = vunpack.c.l.b16 %v4179
      %v4413 = vunpack.c.l.b16 %v4189
      %v4414 = vunpack.c.l.b16 %v4203
      %v4415 = vunpack.c.l.b16 %v4213
      %v4416 = vunpack.c.l.b16 %v4227
      %v4417 = vunpack.c.l.b16 %v4237
      %v4418 = vunpack.c.l.b16 %v4251
      %v4419 = vunpack.c.l.b16 %v4261
      %v4420 = vunpack.c.l.b16 %v4275
      %v4421 = vunpack.c.l.b16 %v4285
      %v4422 = vpack.c.b16 %v4407, %v4406
      %v4423 = vpack.c.b16 %v4409, %v4408
      %v4424 = vpack.c.b16 %v4411, %v4410
      %v4425 = vpack.c.b16 %v4413, %v4412
      %v4426 = vpack.c.b16 %v4415, %v4414
      %v4427 = vpack.c.b16 %v4417, %v4416
      %v4428 = vpack.c.b16 %v4419, %v4418
      %v4429 = vpack.c.b16 %v4421, %v4420
      %4430 = vrot.lane.b32.xlu0 %v4422, 4
      %v4431 = vpop.permute.xlu0 %4430
      %4432 = vrot.lane.b32.xlu0 %v4423, 4
      %v4433 = vpop.permute.xlu0 %4432
      %4434 = vrot.lane.b32.xlu0 %v4424, 4
      %v4435 = vpop.permute.xlu0 %4434
      %4436 = vrot.lane.b32.xlu0 %v4425, 4
      %v4437 = vpop.permute.xlu0 %4436
      %4438 = vrot.lane.b32.xlu0 %v4426, 4
      %v4439 = vpop.permute.xlu0 %4438
      %4440 = vrot.lane.b32.xlu0 %v4427, 4
      %v4441 = vpop.permute.xlu0 %4440
      %4442 = vrot.lane.b32.xlu0 %v4428, 4
      %v4443 = vpop.permute.xlu0 %4442
      %4444 = vrot.lane.b32.xlu0 %v4429, 4
      %v4445 = vpop.permute.xlu0 %4444
      %v4446 = vunpack.c.l.b16 %v4321
      %v4447 = vunpack.c.l.b16 %v4324
      %v4448 = vunpack.c.l.b16 %v4328
      %v4449 = vunpack.c.l.b16 %v4331
      %v4450 = vunpack.c.l.b16 %v4335
      %v4451 = vunpack.c.l.b16 %v4338
      %v4452 = vunpack.c.l.b16 %v4342
      %v4453 = vunpack.c.l.b16 %v4345
      %v4454 = vunpack.c.l.b16 %v4349
      %v4455 = vunpack.c.l.b16 %v4352
      %v4456 = vunpack.c.l.b16 %v4356
      %v4457 = vunpack.c.l.b16 %v4359
      %v4458 = vunpack.c.l.b16 %v4363
      %v4459 = vunpack.c.l.b16 %v4366
      %v4460 = vunpack.c.l.b16 %v4370
      %v4461 = vunpack.c.l.b16 %v4373
      %v4462 = vpack.c.b16 %v4447, %v4446
      %v4463 = vpack.c.b16 %v4449, %v4448
      %v4464 = vpack.c.b16 %v4451, %v4450
      %v4465 = vpack.c.b16 %v4453, %v4452
      %v4466 = vpack.c.b16 %v4455, %v4454
      %v4467 = vpack.c.b16 %v4457, %v4456
      %v4468 = vpack.c.b16 %v4459, %v4458
      %v4469 = vpack.c.b16 %v4461, %v4460
      %4470 = vrot.lane.b32.xlu0 %v4462, 8
      %v4471 = vpop.permute.xlu0 %4470
      %4472 = vrot.lane.b32.xlu0 %v4463, 8
      %v4473 = vpop.permute.xlu0 %4472
      %4474 = vrot.lane.b32.xlu0 %v4464, 8
      %v4475 = vpop.permute.xlu0 %4474
      %4476 = vrot.lane.b32.xlu0 %v4465, 8
      %v4477 = vpop.permute.xlu0 %4476
      %4478 = vrot.lane.b32.xlu0 %v4466, 8
      %v4479 = vpop.permute.xlu0 %4478
      %4480 = vrot.lane.b32.xlu0 %v4467, 8
      %v4481 = vpop.permute.xlu0 %4480
      %4482 = vrot.lane.b32.xlu0 %v4468, 8
      %v4483 = vpop.permute.xlu0 %4482
      %4484 = vrot.lane.b32.xlu0 %v4469, 8
      %v4485 = vpop.permute.xlu0 %4484
      %v4488 = vsel %vm1506, %v4398, %v4431
      %v4491 = vsel %vm1506, %v4399, %v4433
      %v4494 = vsel %vm1506, %v4400, %v4435
      %v4497 = vsel %vm1506, %v4401, %v4437
      %v4500 = vsel %vm1506, %v4402, %v4439
      %v4503 = vsel %vm1506, %v4403, %v4441
      %v4506 = vsel %vm1506, %v4404, %v4443
      %v4509 = vsel %vm1506, %v4405, %v4445
      %v4511 = vsel %vm1537, %v4488, %v4471
      %v4513 = vsel %vm1537, %v4491, %v4473
      %v4515 = vsel %vm1537, %v4494, %v4475
      %v4517 = vsel %vm1537, %v4497, %v4477
      %v4519 = vsel %vm1537, %v4500, %v4479
      %v4521 = vsel %vm1537, %v4503, %v4481
      %v4523 = vsel %vm1537, %v4506, %v4483
      %v4525 = vsel %vm1537, %v4509, %v4485
      %s4526 = scalar_lea.vmem %s4, 8
      %v4527 = vld [vmem:[%s4526] sm:$0xf]
      %v4528 = vld [vmem:[%s4526 + $0x4] sm:$0x3]
      %v4531 = vunpack.c.l.b16 %v4527
      %v4532 = vunpack.c.l.b16 %v4528
      %v4533 = vpack.c.b16 %v4532, %v4531
      %v4534 = vsel %vm2139, %v4511, 0
      %v4536 = vsel %vm2139, %v4513, 0
      %v4538 = vsel %vm2139, %v4515, 0
      %v4540 = vsel %vm2139, %v4517, 0
      %v4542 = vsel %vm2139, %v4519, 0
      %v4544 = vsel %vm2139, %v4521, 0
      %v4546 = vsel %vm2139, %v4523, 0
      %v4548 = vsel %vm2139, %v4525, 0
      %v4551 = vsel %vm2160, %v4533, 0
      %4553 = vmatprep.subr.bf16.mxu0 0
      %4554 = vmatpush1.bf16.msra.mxu0 0
      %4555 = vmatprep.subr.bf16.mxu0 0
      %4556 = vmatpush1.bf16.msra.mxu0 0
      %4557 = vmatprep.subr.bf16.mxu0 0
      %4558 = vmatpush1.bf16.msra.mxu0 0
      %4559 = vmatprep.subr.bf16.mxu0 0
      %4560 = vmatpush1.bf16.msra.mxu0 0
      %4561 = vmatprep.subr.bf16.mxu0 0
      %4562 = vmatpush1.bf16.msra.mxu0 0
      %4563 = vmatprep.subr.bf16.mxu0 0
      %4564 = vmatpush1.bf16.msra.mxu0 0
      %4565 = vmatprep.subr.bf16.mxu0 0
      %4566 = vmatpush1.bf16.msra.mxu0 0
      %4567 = vmatprep.subr.bf16.mxu0 0
      %4568 = vmatpush1.bf16.msra.mxu0 %v4551
      %4569 = vmatprep.subr.bf16.mxu0 0
      %4570 = vmatpush2.bf16.msra.mxu0 0
      %4571 = vmatprep.subr.bf16.mxu0 0
      %4572 = vmatpush2.bf16.msra.mxu0 0
      %4573 = vmatprep.subr.bf16.mxu0 0
      %4574 = vmatpush2.bf16.msra.mxu0 0
      %4575 = vmatprep.subr.bf16.mxu0 0
      %4576 = vmatpush2.bf16.msra.mxu0 0
      %4577 = vmatprep.subr.bf16.mxu0 0
      %4578 = vmatpush2.bf16.msra.mxu0 0
      %4579 = vmatprep.subr.bf16.mxu0 0
      %4580 = vmatpush2.bf16.msra.mxu0 0
      %4581 = vmatprep.subr.bf16.mxu0 0
      %4582 = vmatpush2.bf16.msra.mxu0 0
      %4583 = vmatprep.subr.bf16.mxu0 0
      %4584 = vmatpush2.bf16.msra.mxu0 0
      %4585 = vmatprep.mubr.bf16.mxu0 0
      %4586 = vmatmul.mubr.bf16.gmra.mxu0 %v4534
      %v4587 = vpop.f32.mrf.mxu0
      %v4588 = vadd.f32 0.0, %v4587
      %v4589 = vpop.f32.mrf.mxu0
      %v4590 = vpop.f32.mrf.mxu0
      %v4591 = vadd.f32 0.0, %v4590
      %v4592 = vpop.f32.mrf.mxu0
      %4593 = vmatprep.mubr.bf16.mxu0 0
      %4594 = vmatmul.mubr.bf16.gmra.mxu0 %v4536
      %v4595 = vpop.f32.mrf.mxu0
      %v4596 = vadd.f32 0.0, %v4595
      %v4597 = vpop.f32.mrf.mxu0
      %v4598 = vpop.f32.mrf.mxu0
      %v4599 = vadd.f32 0.0, %v4598
      %v4600 = vpop.f32.mrf.mxu0
      %4601 = vmatprep.mubr.bf16.mxu0 0
      %4602 = vmatmul.mubr.bf16.gmra.mxu0 %v4538
      %v4603 = vpop.f32.mrf.mxu0
      %v4604 = vadd.f32 0.0, %v4603
      %v4605 = vpop.f32.mrf.mxu0
      %v4606 = vpop.f32.mrf.mxu0
      %v4607 = vadd.f32 0.0, %v4606
      %v4608 = vpop.f32.mrf.mxu0
      %4609 = vmatprep.mubr.bf16.mxu0 0
      %4610 = vmatmul.mubr.bf16.gmra.mxu0 %v4540
      %v4611 = vpop.f32.mrf.mxu0
      %v4612 = vadd.f32 0.0, %v4611
      %v4613 = vpop.f32.mrf.mxu0
      %v4614 = vpop.f32.mrf.mxu0
      %v4615 = vadd.f32 0.0, %v4614
      %v4616 = vpop.f32.mrf.mxu0
      %4617 = vmatprep.mubr.bf16.mxu0 0
      %4618 = vmatmul.mubr.bf16.gmra.mxu0 %v4542
      %v4619 = vpop.f32.mrf.mxu0
      %v4620 = vadd.f32 0.0, %v4619
      %v4621 = vpop.f32.mrf.mxu0
      %v4622 = vpop.f32.mrf.mxu0
      %v4623 = vadd.f32 0.0, %v4622
      %v4624 = vpop.f32.mrf.mxu0
      %4625 = vmatprep.mubr.bf16.mxu0 0
      %4626 = vmatmul.mubr.bf16.gmra.mxu0 %v4544
      %v4627 = vpop.f32.mrf.mxu0
      %v4628 = vadd.f32 0.0, %v4627
      %v4629 = vpop.f32.mrf.mxu0
      %v4630 = vpop.f32.mrf.mxu0
      %v4631 = vadd.f32 0.0, %v4630
      %v4632 = vpop.f32.mrf.mxu0
      %4633 = vmatprep.mubr.bf16.mxu0 0
      %4634 = vmatmul.mubr.bf16.gmra.mxu0 %v4546
      %v4635 = vpop.f32.mrf.mxu0
      %v4636 = vadd.f32 0.0, %v4635
      %v4637 = vpop.f32.mrf.mxu0
      %v4638 = vpop.f32.mrf.mxu0
      %v4639 = vadd.f32 0.0, %v4638
      %v4640 = vpop.f32.mrf.mxu0
      %4641 = vmatprep.mubr.bf16.mxu0 0
      %4642 = vmatmul.mubr.bf16.gmra.mxu0 %v4548
      %v4643 = vpop.f32.mrf.mxu0
      %v4644 = vadd.f32 0.0, %v4643
      %v4645 = vpop.f32.mrf.mxu0
      %v4646 = vpop.f32.mrf.mxu0
      %v4647 = vadd.f32 0.0, %v4646
      %v4648 = vpop.f32.mrf.mxu0
      %4649 = vdwg.mxu0
      %v4652 = vunpack.c.l.b16 %v4068
      %v4653 = vunpack.c.l.b16 %v4069
      %v4654 = vpack.c.b16 %v4653, %v4652
      %v4655 = vsel %vm2139, %v4053, 0
      %v4657 = vsel %vm2139, %v4055, 0
      %v4659 = vsel %vm2139, %v4057, 0
      %v4661 = vsel %vm2139, %v4059, 0
      %v4663 = vsel %vm2139, %v4061, 0
      %v4665 = vsel %vm2139, %v4063, 0
      %v4667 = vsel %vm2139, %v4065, 0
      %v4669 = vsel %vm2139, %v4067, 0
      %v4672 = vsel %vm2160, %v4654, 0
      %4674 = vmatprep.subr.bf16.mxu0 0
      %4675 = vmatpush1.bf16.msra.mxu0 0
      %4676 = vmatprep.subr.bf16.mxu0 0
      %4677 = vmatpush1.bf16.msra.mxu0 0
      %4678 = vmatprep.subr.bf16.mxu0 0
      %4679 = vmatpush1.bf16.msra.mxu0 0
      %4680 = vmatprep.subr.bf16.mxu0 0
      %4681 = vmatpush1.bf16.msra.mxu0 0
      %4682 = vmatprep.subr.bf16.mxu0 0
      %4683 = vmatpush1.bf16.msra.mxu0 0
      %4684 = vmatprep.subr.bf16.mxu0 0
      %4685 = vmatpush1.bf16.msra.mxu0 0
      %4686 = vmatprep.subr.bf16.mxu0 0
      %4687 = vmatpush1.bf16.msra.mxu0 0
      %4688 = vmatprep.subr.bf16.mxu0 0
      %4689 = vmatpush1.bf16.msra.mxu0 %v4672
      %4690 = vmatprep.subr.bf16.mxu0 0
      %4691 = vmatpush2.bf16.msra.mxu0 0
      %4692 = vmatprep.subr.bf16.mxu0 0
      %4693 = vmatpush2.bf16.msra.mxu0 0
      %4694 = vmatprep.subr.bf16.mxu0 0
      %4695 = vmatpush2.bf16.msra.mxu0 0
      %4696 = vmatprep.subr.bf16.mxu0 0
      %4697 = vmatpush2.bf16.msra.mxu0 0
      %4698 = vmatprep.subr.bf16.mxu0 0
      %4699 = vmatpush2.bf16.msra.mxu0 0
      %4700 = vmatprep.subr.bf16.mxu0 0
      %4701 = vmatpush2.bf16.msra.mxu0 0
      %4702 = vmatprep.subr.bf16.mxu0 0
      %4703 = vmatpush2.bf16.msra.mxu0 0
      %4704 = vmatprep.subr.bf16.mxu0 0
      %4705 = vmatpush2.bf16.msra.mxu0 0
      %4706 = vmatprep.mubr.bf16.mxu0 0
      %4707 = vmatmul.mubr.bf16.gmra.mxu0 %v4655
      %v4708 = vpop.f32.mrf.mxu0
      %v4709 = vadd.f32 %v4588, %v4708
      %v4710 = vpop.f32.mrf.mxu0
      %v4711 = vpop.f32.mrf.mxu0
      %v4712 = vadd.f32 %v4591, %v4711
      %v4713 = vpop.f32.mrf.mxu0
      %4714 = vmatprep.mubr.bf16.mxu0 0
      %4715 = vmatmul.mubr.bf16.gmra.mxu0 %v4657
      %v4716 = vpop.f32.mrf.mxu0
      %v4717 = vadd.f32 %v4596, %v4716
      %v4718 = vpop.f32.mrf.mxu0
      %v4719 = vpop.f32.mrf.mxu0
      %v4720 = vadd.f32 %v4599, %v4719
      %v4721 = vpop.f32.mrf.mxu0
      %4722 = vmatprep.mubr.bf16.mxu0 0
      %4723 = vmatmul.mubr.bf16.gmra.mxu0 %v4659
      %v4724 = vpop.f32.mrf.mxu0
      %v4725 = vadd.f32 %v4604, %v4724
      %v4726 = vpop.f32.mrf.mxu0
      %v4727 = vpop.f32.mrf.mxu0
      %v4728 = vadd.f32 %v4607, %v4727
      %v4729 = vpop.f32.mrf.mxu0
      %4730 = vmatprep.mubr.bf16.mxu0 0
      %4731 = vmatmul.mubr.bf16.gmra.mxu0 %v4661
      %v4732 = vpop.f32.mrf.mxu0
      %v4733 = vadd.f32 %v4612, %v4732
      %v4734 = vpop.f32.mrf.mxu0
      %v4735 = vpop.f32.mrf.mxu0
      %v4736 = vadd.f32 %v4615, %v4735
      %v4737 = vpop.f32.mrf.mxu0
      %4738 = vmatprep.mubr.bf16.mxu0 0
      %4739 = vmatmul.mubr.bf16.gmra.mxu0 %v4663
      %v4740 = vpop.f32.mrf.mxu0
      %v4741 = vadd.f32 %v4620, %v4740
      %v4742 = vpop.f32.mrf.mxu0
      %v4743 = vpop.f32.mrf.mxu0
      %v4744 = vadd.f32 %v4623, %v4743
      %v4745 = vpop.f32.mrf.mxu0
      %4746 = vmatprep.mubr.bf16.mxu0 0
      %4747 = vmatmul.mubr.bf16.gmra.mxu0 %v4665
      %v4748 = vpop.f32.mrf.mxu0
      %v4749 = vadd.f32 %v4628, %v4748
      %v4750 = vpop.f32.mrf.mxu0
      %v4751 = vpop.f32.mrf.mxu0
      %v4752 = vadd.f32 %v4631, %v4751
      %v4753 = vpop.f32.mrf.mxu0
      %4754 = vmatprep.mubr.bf16.mxu0 0
      %4755 = vmatmul.mubr.bf16.gmra.mxu0 %v4667
      %v4756 = vpop.f32.mrf.mxu0
      %v4757 = vadd.f32 %v4636, %v4756
      %v4758 = vpop.f32.mrf.mxu0
      %v4759 = vpop.f32.mrf.mxu0
      %v4760 = vadd.f32 %v4639, %v4759
      %v4761 = vpop.f32.mrf.mxu0
      %4762 = vmatprep.mubr.bf16.mxu0 0
      %4763 = vmatmul.mubr.bf16.gmra.mxu0 %v4669
      %v4764 = vpop.f32.mrf.mxu0
      %v4765 = vadd.f32 %v4644, %v4764
      %v4766 = vpop.f32.mrf.mxu0
      %v4767 = vpop.f32.mrf.mxu0
      %v4768 = vadd.f32 %v4647, %v4767
      %v4769 = vpop.f32.mrf.mxu0
      %4770 = vdwg.mxu0
      %v4771 = vld [vmem:[%s734] sm:$0xf]
      %v4772 = vld [vmem:[%s734 + $0x4] sm:$0xf]
      %v4773 = vld [vmem:[%s734 + $0x10] sm:$0xf]
      %v4774 = vld [vmem:[%s734 + $0x14] sm:$0xf]
      %v4775 = vld [vmem:[%s734 + $0x20] sm:$0xf]
      %v4776 = vld [vmem:[%s734 + $0x24] sm:$0xf]
      %v4777 = vld [vmem:[%s734 + $0x30] sm:$0xf]
      %v4778 = vld [vmem:[%s734 + $0x34] sm:$0xf]
      %v4779 = vld [vmem:[%s734 + $0x40] sm:$0xf]
      %v4780 = vld [vmem:[%s734 + $0x44] sm:$0xf]
      %v4781 = vld [vmem:[%s734 + $0x50] sm:$0xf]
      %v4782 = vld [vmem:[%s734 + $0x54] sm:$0xf]
      %v4783 = vld [vmem:[%s734 + $0x60] sm:$0xf]
      %v4784 = vld [vmem:[%s734 + $0x64] sm:$0xf]
      %v4785 = vld [vmem:[%s734 + $0x70] sm:$0xf]
      %v4786 = vld [vmem:[%s734 + $0x74] sm:$0xf]
      %v4787 = vld [vmem:[%s734 + $0x8] sm:$0x1]
      %v4788 = vld [vmem:[%s734 + $0x18] sm:$0x1]
      %v4789 = vld [vmem:[%s734 + $0x28] sm:$0x1]
      %v4790 = vld [vmem:[%s734 + $0x38] sm:$0x1]
      %v4791 = vld [vmem:[%s734 + $0x48] sm:$0x1]
      %v4792 = vld [vmem:[%s734 + $0x58] sm:$0x1]
      %v4793 = vld [vmem:[%s734 + $0x68] sm:$0x1]
      %v4794 = vld [vmem:[%s734 + $0x78] sm:$0x1]
      %v4796 = vshrl.u32 %v4771, 16
      %v4798 = vrot.slane %v4796, 4
      %v4799 = vshll.u32 %v4771, 16
      %v4801 = vrot.slane %v4799, 5
      %v4802 = vor.u32 %v4798, %v4801
      %v4803 = vrot.slane %v4802, 4
      %v4805 = vshll.u32 %v4772, 16
      %v4807 = vrot.slane %v4805, 5
      %v4808 = vsel %vm1012, %v4803, %v4807
      %v4809 = vshrl.u32 %v4772, 16
      %v4811 = vrot.slane %v4809, 4
      %v4812 = vor.u32 %v4811, %v4807
      %v4813 = vrot.slane %v4812, 4
      %v4815 = vshll.u32 %v4787, 16
      %v4817 = vrot.slane %v4815, 5
      %v4818 = vsel %vm1012, %v4813, %v4817
      %v4820 = vshrl.u32 %v4773, 16
      %v4822 = vrot.slane %v4820, 4
      %v4823 = vshll.u32 %v4773, 16
      %v4825 = vrot.slane %v4823, 5
      %v4826 = vor.u32 %v4822, %v4825
      %v4827 = vrot.slane %v4826, 4
      %v4829 = vshll.u32 %v4774, 16
      %v4831 = vrot.slane %v4829, 5
      %v4832 = vsel %vm1012, %v4827, %v4831
      %v4833 = vshrl.u32 %v4774, 16
      %v4835 = vrot.slane %v4833, 4
      %v4836 = vor.u32 %v4835, %v4831
      %v4837 = vrot.slane %v4836, 4
      %v4839 = vshll.u32 %v4788, 16
      %v4841 = vrot.slane %v4839, 5
      %v4842 = vsel %vm1012, %v4837, %v4841
      %v4844 = vshrl.u32 %v4775, 16
      %v4846 = vrot.slane %v4844, 4
      %v4847 = vshll.u32 %v4775, 16
      %v4849 = vrot.slane %v4847, 5
      %v4850 = vor.u32 %v4846, %v4849
      %v4851 = vrot.slane %v4850, 4
      %v4853 = vshll.u32 %v4776, 16
      %v4855 = vrot.slane %v4853, 5
      %v4856 = vsel %vm1012, %v4851, %v4855
      %v4857 = vshrl.u32 %v4776, 16
      %v4859 = vrot.slane %v4857, 4
      %v4860 = vor.u32 %v4859, %v4855
      %v4861 = vrot.slane %v4860, 4
      %v4863 = vshll.u32 %v4789, 16
      %v4865 = vrot.slane %v4863, 5
      %v4866 = vsel %vm1012, %v4861, %v4865
      %v4868 = vshrl.u32 %v4777, 16
      %v4870 = vrot.slane %v4868, 4
      %v4871 = vshll.u32 %v4777, 16
      %v4873 = vrot.slane %v4871, 5
      %v4874 = vor.u32 %v4870, %v4873
      %v4875 = vrot.slane %v4874, 4
      %v4877 = vshll.u32 %v4778, 16
      %v4879 = vrot.slane %v4877, 5
      %v4880 = vsel %vm1012, %v4875, %v4879
      %v4881 = vshrl.u32 %v4778, 16
      %v4883 = vrot.slane %v4881, 4
      %v4884 = vor.u32 %v4883, %v4879
      %v4885 = vrot.slane %v4884, 4
      %v4887 = vshll.u32 %v4790, 16
      %v4889 = vrot.slane %v4887, 5
      %v4890 = vsel %vm1012, %v4885, %v4889
      %v4892 = vshrl.u32 %v4779, 16
      %v4894 = vrot.slane %v4892, 4
      %v4895 = vshll.u32 %v4779, 16
      %v4897 = vrot.slane %v4895, 5
      %v4898 = vor.u32 %v4894, %v4897
      %v4899 = vrot.slane %v4898, 4
      %v4901 = vshll.u32 %v4780, 16
      %v4903 = vrot.slane %v4901, 5
      %v4904 = vsel %vm1012, %v4899, %v4903
      %v4905 = vshrl.u32 %v4780, 16
      %v4907 = vrot.slane %v4905, 4
      %v4908 = vor.u32 %v4907, %v4903
      %v4909 = vrot.slane %v4908, 4
      %v4911 = vshll.u32 %v4791, 16
      %v4913 = vrot.slane %v4911, 5
      %v4914 = vsel %vm1012, %v4909, %v4913
      %v4916 = vshrl.u32 %v4781, 16
      %v4918 = vrot.slane %v4916, 4
      %v4919 = vshll.u32 %v4781, 16
      %v4921 = vrot.slane %v4919, 5
      %v4922 = vor.u32 %v4918, %v4921
      %v4923 = vrot.slane %v4922, 4
      %v4925 = vshll.u32 %v4782, 16
      %v4927 = vrot.slane %v4925, 5
      %v4928 = vsel %vm1012, %v4923, %v4927
      %v4929 = vshrl.u32 %v4782, 16
      %v4931 = vrot.slane %v4929, 4
      %v4932 = vor.u32 %v4931, %v4927
      %v4933 = vrot.slane %v4932, 4
      %v4935 = vshll.u32 %v4792, 16
      %v4937 = vrot.slane %v4935, 5
      %v4938 = vsel %vm1012, %v4933, %v4937
      %v4940 = vshrl.u32 %v4783, 16
      %v4942 = vrot.slane %v4940, 4
      %v4943 = vshll.u32 %v4783, 16
      %v4945 = vrot.slane %v4943, 5
      %v4946 = vor.u32 %v4942, %v4945
      %v4947 = vrot.slane %v4946, 4
      %v4949 = vshll.u32 %v4784, 16
      %v4951 = vrot.slane %v4949, 5
      %v4952 = vsel %vm1012, %v4947, %v4951
      %v4953 = vshrl.u32 %v4784, 16
      %v4955 = vrot.slane %v4953, 4
      %v4956 = vor.u32 %v4955, %v4951
      %v4957 = vrot.slane %v4956, 4
      %v4959 = vshll.u32 %v4793, 16
      %v4961 = vrot.slane %v4959, 5
      %v4962 = vsel %vm1012, %v4957, %v4961
      %v4964 = vshrl.u32 %v4785, 16
      %v4966 = vrot.slane %v4964, 4
      %v4967 = vshll.u32 %v4785, 16
      %v4969 = vrot.slane %v4967, 5
      %v4970 = vor.u32 %v4966, %v4969
      %v4971 = vrot.slane %v4970, 4
      %v4973 = vshll.u32 %v4786, 16
      %v4975 = vrot.slane %v4973, 5
      %v4976 = vsel %vm1012, %v4971, %v4975
      %v4977 = vshrl.u32 %v4786, 16
      %v4979 = vrot.slane %v4977, 4
      %v4980 = vor.u32 %v4979, %v4975
      %v4981 = vrot.slane %v4980, 4
      %v4983 = vshll.u32 %v4794, 16
      %v4985 = vrot.slane %v4983, 5
      %v4986 = vsel %vm1012, %v4981, %v4985
      %v4987 = vld [vmem:[%s734] sm:$0xe]
      %v4988 = vld [vmem:[%s734 + $0x10] sm:$0xe]
      %v4989 = vld [vmem:[%s734 + $0x20] sm:$0xe]
      %v4990 = vld [vmem:[%s734 + $0x30] sm:$0xe]
      %v4991 = vld [vmem:[%s734 + $0x40] sm:$0xe]
      %v4992 = vld [vmem:[%s734 + $0x50] sm:$0xe]
      %v4993 = vld [vmem:[%s734 + $0x60] sm:$0xe]
      %v4994 = vld [vmem:[%s734 + $0x70] sm:$0xe]
      %v5019 = vrot.slane %v4987, 5
      %v5020 = vrot.slane %v5019, 4
      %v5021 = vrot.slane %v4772, 5
      %v5022 = vsel %vm1295, %v5020, %v5021
      %v5023 = vrot.slane %v5021, 4
      %v5024 = vrot.slane %v4787, 5
      %v5025 = vsel %vm1295, %v5023, %v5024
      %v5026 = vrot.slane %v4988, 5
      %v5027 = vrot.slane %v5026, 4
      %v5028 = vrot.slane %v4774, 5
      %v5029 = vsel %vm1295, %v5027, %v5028
      %v5030 = vrot.slane %v5028, 4
      %v5031 = vrot.slane %v4788, 5
      %v5032 = vsel %vm1295, %v5030, %v5031
      %v5033 = vrot.slane %v4989, 5
      %v5034 = vrot.slane %v5033, 4
      %v5035 = vrot.slane %v4776, 5
      %v5036 = vsel %vm1295, %v5034, %v5035
      %v5037 = vrot.slane %v5035, 4
      %v5038 = vrot.slane %v4789, 5
      %v5039 = vsel %vm1295, %v5037, %v5038
      %v5040 = vrot.slane %v4990, 5
      %v5041 = vrot.slane %v5040, 4
      %v5042 = vrot.slane %v4778, 5
      %v5043 = vsel %vm1295, %v5041, %v5042
      %v5044 = vrot.slane %v5042, 4
      %v5045 = vrot.slane %v4790, 5
      %v5046 = vsel %vm1295, %v5044, %v5045
      %v5047 = vrot.slane %v4991, 5
      %v5048 = vrot.slane %v5047, 4
      %v5049 = vrot.slane %v4780, 5
      %v5050 = vsel %vm1295, %v5048, %v5049
      %v5051 = vrot.slane %v5049, 4
      %v5052 = vrot.slane %v4791, 5
      %v5053 = vsel %vm1295, %v5051, %v5052
      %v5054 = vrot.slane %v4992, 5
      %v5055 = vrot.slane %v5054, 4
      %v5056 = vrot.slane %v4782, 5
      %v5057 = vsel %vm1295, %v5055, %v5056
      %v5058 = vrot.slane %v5056, 4
      %v5059 = vrot.slane %v4792, 5
      %v5060 = vsel %vm1295, %v5058, %v5059
      %v5061 = vrot.slane %v4993, 5
      %v5062 = vrot.slane %v5061, 4
      %v5063 = vrot.slane %v4784, 5
      %v5064 = vsel %vm1295, %v5062, %v5063
      %v5065 = vrot.slane %v5063, 4
      %v5066 = vrot.slane %v4793, 5
      %v5067 = vsel %vm1295, %v5065, %v5066
      %v5068 = vrot.slane %v4994, 5
      %v5069 = vrot.slane %v5068, 4
      %v5070 = vrot.slane %v4786, 5
      %v5071 = vsel %vm1295, %v5069, %v5070
      %v5072 = vrot.slane %v5070, 4
      %v5073 = vrot.slane %v4794, 5
      %v5074 = vsel %vm1295, %v5072, %v5073
      %v5083 = vunpack.c.l.b16 %v4771
      %v5084 = vunpack.c.l.b16 %v4772
      %v5085 = vunpack.c.l.b16 %v4773
      %v5086 = vunpack.c.l.b16 %v4774
      %v5087 = vunpack.c.l.b16 %v4775
      %v5088 = vunpack.c.l.b16 %v4776
      %v5089 = vunpack.c.l.b16 %v4777
      %v5090 = vunpack.c.l.b16 %v4778
      %v5091 = vunpack.c.l.b16 %v4779
      %v5092 = vunpack.c.l.b16 %v4780
      %v5093 = vunpack.c.l.b16 %v4781
      %v5094 = vunpack.c.l.b16 %v4782
      %v5095 = vunpack.c.l.b16 %v4783
      %v5096 = vunpack.c.l.b16 %v4784
      %v5097 = vunpack.c.l.b16 %v4785
      %v5098 = vunpack.c.l.b16 %v4786
      %v5099 = vpack.c.b16 %v5084, %v5083
      %v5100 = vpack.c.b16 %v5086, %v5085
      %v5101 = vpack.c.b16 %v5088, %v5087
      %v5102 = vpack.c.b16 %v5090, %v5089
      %v5103 = vpack.c.b16 %v5092, %v5091
      %v5104 = vpack.c.b16 %v5094, %v5093
      %v5105 = vpack.c.b16 %v5096, %v5095
      %v5106 = vpack.c.b16 %v5098, %v5097
      %v5107 = vunpack.c.l.b16 %v4808
      %v5108 = vunpack.c.l.b16 %v4818
      %v5109 = vunpack.c.l.b16 %v4832
      %v5110 = vunpack.c.l.b16 %v4842
      %v5111 = vunpack.c.l.b16 %v4856
      %v5112 = vunpack.c.l.b16 %v4866
      %v5113 = vunpack.c.l.b16 %v4880
      %v5114 = vunpack.c.l.b16 %v4890
      %v5115 = vunpack.c.l.b16 %v4904
      %v5116 = vunpack.c.l.b16 %v4914
      %v5117 = vunpack.c.l.b16 %v4928
      %v5118 = vunpack.c.l.b16 %v4938
      %v5119 = vunpack.c.l.b16 %v4952
      %v5120 = vunpack.c.l.b16 %v4962
      %v5121 = vunpack.c.l.b16 %v4976
      %v5122 = vunpack.c.l.b16 %v4986
      %v5123 = vpack.c.b16 %v5108, %v5107
      %v5124 = vpack.c.b16 %v5110, %v5109
      %v5125 = vpack.c.b16 %v5112, %v5111
      %v5126 = vpack.c.b16 %v5114, %v5113
      %v5127 = vpack.c.b16 %v5116, %v5115
      %v5128 = vpack.c.b16 %v5118, %v5117
      %v5129 = vpack.c.b16 %v5120, %v5119
      %v5130 = vpack.c.b16 %v5122, %v5121
      %5131 = vrot.lane.b32.xlu0 %v5123, 4
      %v5132 = vpop.permute.xlu0 %5131
      %5133 = vrot.lane.b32.xlu0 %v5124, 4
      %v5134 = vpop.permute.xlu0 %5133
      %5135 = vrot.lane.b32.xlu0 %v5125, 4
      %v5136 = vpop.permute.xlu0 %5135
      %5137 = vrot.lane.b32.xlu0 %v5126, 4
      %v5138 = vpop.permute.xlu0 %5137
      %5139 = vrot.lane.b32.xlu0 %v5127, 4
      %v5140 = vpop.permute.xlu0 %5139
      %5141 = vrot.lane.b32.xlu0 %v5128, 4
      %v5142 = vpop.permute.xlu0 %5141
      %5143 = vrot.lane.b32.xlu0 %v5129, 4
      %v5144 = vpop.permute.xlu0 %5143
      %5145 = vrot.lane.b32.xlu0 %v5130, 4
      %v5146 = vpop.permute.xlu0 %5145
      %v5147 = vunpack.c.l.b16 %v5022
      %v5148 = vunpack.c.l.b16 %v5025
      %v5149 = vunpack.c.l.b16 %v5029
      %v5150 = vunpack.c.l.b16 %v5032
      %v5151 = vunpack.c.l.b16 %v5036
      %v5152 = vunpack.c.l.b16 %v5039
      %v5153 = vunpack.c.l.b16 %v5043
      %v5154 = vunpack.c.l.b16 %v5046
      %v5155 = vunpack.c.l.b16 %v5050
      %v5156 = vunpack.c.l.b16 %v5053
      %v5157 = vunpack.c.l.b16 %v5057
      %v5158 = vunpack.c.l.b16 %v5060
      %v5159 = vunpack.c.l.b16 %v5064
      %v5160 = vunpack.c.l.b16 %v5067
      %v5161 = vunpack.c.l.b16 %v5071
      %v5162 = vunpack.c.l.b16 %v5074
      %v5163 = vpack.c.b16 %v5148, %v5147
      %v5164 = vpack.c.b16 %v5150, %v5149
      %v5165 = vpack.c.b16 %v5152, %v5151
      %v5166 = vpack.c.b16 %v5154, %v5153
      %v5167 = vpack.c.b16 %v5156, %v5155
      %v5168 = vpack.c.b16 %v5158, %v5157
      %v5169 = vpack.c.b16 %v5160, %v5159
      %v5170 = vpack.c.b16 %v5162, %v5161
      %5171 = vrot.lane.b32.xlu0 %v5163, 8
      %v5172 = vpop.permute.xlu0 %5171
      %5173 = vrot.lane.b32.xlu0 %v5164, 8
      %v5174 = vpop.permute.xlu0 %5173
      %5175 = vrot.lane.b32.xlu0 %v5165, 8
      %v5176 = vpop.permute.xlu0 %5175
      %5177 = vrot.lane.b32.xlu0 %v5166, 8
      %v5178 = vpop.permute.xlu0 %5177
      %5179 = vrot.lane.b32.xlu0 %v5167, 8
      %v5180 = vpop.permute.xlu0 %5179
      %5181 = vrot.lane.b32.xlu0 %v5168, 8
      %v5182 = vpop.permute.xlu0 %5181
      %5183 = vrot.lane.b32.xlu0 %v5169, 8
      %v5184 = vpop.permute.xlu0 %5183
      %5185 = vrot.lane.b32.xlu0 %v5170, 8
      %v5186 = vpop.permute.xlu0 %5185
      %v5189 = vsel %vm1506, %v5099, %v5132
      %v5192 = vsel %vm1506, %v5100, %v5134
      %v5195 = vsel %vm1506, %v5101, %v5136
      %v5198 = vsel %vm1506, %v5102, %v5138
      %v5201 = vsel %vm1506, %v5103, %v5140
      %v5204 = vsel %vm1506, %v5104, %v5142
      %v5207 = vsel %vm1506, %v5105, %v5144
      %v5210 = vsel %vm1506, %v5106, %v5146
      %v5212 = vsel %vm1537, %v5189, %v5172
      %v5214 = vsel %vm1537, %v5192, %v5174
      %v5216 = vsel %vm1537, %v5195, %v5176
      %v5218 = vsel %vm1537, %v5198, %v5178
      %v5220 = vsel %vm1537, %v5201, %v5180
      %v5222 = vsel %vm1537, %v5204, %v5182
      %v5224 = vsel %vm1537, %v5207, %v5184
      %v5226 = vsel %vm1537, %v5210, %v5186
      %s5227 = scalar_lea.vmem %s4, 16
      %v5228 = vld [vmem:[%s5227] sm:$0xf]
      %v5229 = vld [vmem:[%s5227 + $0x4] sm:$0x3]
      %v5232 = vunpack.c.l.b16 %v5228
      %v5233 = vunpack.c.l.b16 %v5229
      %v5234 = vpack.c.b16 %v5233, %v5232
      %v5235 = vsel %vm2139, %v5212, 0
      %v5237 = vsel %vm2139, %v5214, 0
      %v5239 = vsel %vm2139, %v5216, 0
      %v5241 = vsel %vm2139, %v5218, 0
      %v5243 = vsel %vm2139, %v5220, 0
      %v5245 = vsel %vm2139, %v5222, 0
      %v5247 = vsel %vm2139, %v5224, 0
      %v5249 = vsel %vm2139, %v5226, 0
      %v5252 = vsel %vm2160, %v5234, 0
      %5254 = vmatprep.subr.bf16.mxu0 0
      %5255 = vmatpush1.bf16.msra.mxu0 0
      %5256 = vmatprep.subr.bf16.mxu0 0
      %5257 = vmatpush1.bf16.msra.mxu0 0
      %5258 = vmatprep.subr.bf16.mxu0 0
      %5259 = vmatpush1.bf16.msra.mxu0 0
      %5260 = vmatprep.subr.bf16.mxu0 0
      %5261 = vmatpush1.bf16.msra.mxu0 0
      %5262 = vmatprep.subr.bf16.mxu0 0
      %5263 = vmatpush1.bf16.msra.mxu0 0
      %5264 = vmatprep.subr.bf16.mxu0 0
      %5265 = vmatpush1.bf16.msra.mxu0 0
      %5266 = vmatprep.subr.bf16.mxu0 0
      %5267 = vmatpush1.bf16.msra.mxu0 0
      %5268 = vmatprep.subr.bf16.mxu0 0
      %5269 = vmatpush1.bf16.msra.mxu0 %v5252
      %5270 = vmatprep.subr.bf16.mxu0 0
      %5271 = vmatpush2.bf16.msra.mxu0 0
      %5272 = vmatprep.subr.bf16.mxu0 0
      %5273 = vmatpush2.bf16.msra.mxu0 0
      %5274 = vmatprep.subr.bf16.mxu0 0
      %5275 = vmatpush2.bf16.msra.mxu0 0
      %5276 = vmatprep.subr.bf16.mxu0 0
      %5277 = vmatpush2.bf16.msra.mxu0 0
      %5278 = vmatprep.subr.bf16.mxu0 0
      %5279 = vmatpush2.bf16.msra.mxu0 0
      %5280 = vmatprep.subr.bf16.mxu0 0
      %5281 = vmatpush2.bf16.msra.mxu0 0
      %5282 = vmatprep.subr.bf16.mxu0 0
      %5283 = vmatpush2.bf16.msra.mxu0 0
      %5284 = vmatprep.subr.bf16.mxu0 0
      %5285 = vmatpush2.bf16.msra.mxu0 0
      %5286 = vmatprep.mubr.bf16.mxu0 0
      %5287 = vmatmul.mubr.bf16.gmra.mxu0 %v5235
      %v5288 = vpop.f32.mrf.mxu0
      %v5289 = vadd.f32 0.0, %v5288
      %v5290 = vpop.f32.mrf.mxu0
      %v5291 = vpop.f32.mrf.mxu0
      %v5292 = vadd.f32 0.0, %v5291
      %v5293 = vpop.f32.mrf.mxu0
      %5294 = vmatprep.mubr.bf16.mxu0 0
      %5295 = vmatmul.mubr.bf16.gmra.mxu0 %v5237
      %v5296 = vpop.f32.mrf.mxu0
      %v5297 = vadd.f32 0.0, %v5296
      %v5298 = vpop.f32.mrf.mxu0
      %v5299 = vpop.f32.mrf.mxu0
      %v5300 = vadd.f32 0.0, %v5299
      %v5301 = vpop.f32.mrf.mxu0
      %5302 = vmatprep.mubr.bf16.mxu0 0
      %5303 = vmatmul.mubr.bf16.gmra.mxu0 %v5239
      %v5304 = vpop.f32.mrf.mxu0
      %v5305 = vadd.f32 0.0, %v5304
      %v5306 = vpop.f32.mrf.mxu0
      %v5307 = vpop.f32.mrf.mxu0
      %v5308 = vadd.f32 0.0, %v5307
      %v5309 = vpop.f32.mrf.mxu0
      %5310 = vmatprep.mubr.bf16.mxu0 0
      %5311 = vmatmul.mubr.bf16.gmra.mxu0 %v5241
      %v5312 = vpop.f32.mrf.mxu0
      %v5313 = vadd.f32 0.0, %v5312
      %v5314 = vpop.f32.mrf.mxu0
      %v5315 = vpop.f32.mrf.mxu0
      %v5316 = vadd.f32 0.0, %v5315
      %v5317 = vpop.f32.mrf.mxu0
      %5318 = vmatprep.mubr.bf16.mxu0 0
      %5319 = vmatmul.mubr.bf16.gmra.mxu0 %v5243
      %v5320 = vpop.f32.mrf.mxu0
      %v5321 = vadd.f32 0.0, %v5320
      %v5322 = vpop.f32.mrf.mxu0
      %v5323 = vpop.f32.mrf.mxu0
      %v5324 = vadd.f32 0.0, %v5323
      %v5325 = vpop.f32.mrf.mxu0
      %5326 = vmatprep.mubr.bf16.mxu0 0
      %5327 = vmatmul.mubr.bf16.gmra.mxu0 %v5245
      %v5328 = vpop.f32.mrf.mxu0
      %v5329 = vadd.f32 0.0, %v5328
      %v5330 = vpop.f32.mrf.mxu0
      %v5331 = vpop.f32.mrf.mxu0
      %v5332 = vadd.f32 0.0, %v5331
      %v5333 = vpop.f32.mrf.mxu0
      %5334 = vmatprep.mubr.bf16.mxu0 0
      %5335 = vmatmul.mubr.bf16.gmra.mxu0 %v5247
      %v5336 = vpop.f32.mrf.mxu0
      %v5337 = vadd.f32 0.0, %v5336
      %v5338 = vpop.f32.mrf.mxu0
      %v5339 = vpop.f32.mrf.mxu0
      %v5340 = vadd.f32 0.0, %v5339
      %v5341 = vpop.f32.mrf.mxu0
      %5342 = vmatprep.mubr.bf16.mxu0 0
      %5343 = vmatmul.mubr.bf16.gmra.mxu0 %v5249
      %v5344 = vpop.f32.mrf.mxu0
      %v5345 = vadd.f32 0.0, %v5344
      %v5346 = vpop.f32.mrf.mxu0
      %v5347 = vpop.f32.mrf.mxu0
      %v5348 = vadd.f32 0.0, %v5347
      %v5349 = vpop.f32.mrf.mxu0
      %5350 = vdwg.mxu0
      %v5351 = vadd.f32 %v4709, %v5289
      %v5352 = vadd.f32 %v4712, %v5292
      %v5353 = vadd.f32 %v4717, %v5297
      %v5354 = vadd.f32 %v4720, %v5300
      %v5355 = vadd.f32 %v4725, %v5305
      %v5356 = vadd.f32 %v4728, %v5308
      %v5357 = vadd.f32 %v4733, %v5313
      %v5358 = vadd.f32 %v4736, %v5316
      %v5359 = vadd.f32 %v4741, %v5321
      %v5360 = vadd.f32 %v4744, %v5324
      %v5361 = vadd.f32 %v4749, %v5329
      %v5362 = vadd.f32 %v4752, %v5332
      %v5363 = vadd.f32 %v4757, %v5337
      %v5364 = vadd.f32 %v4760, %v5340
      %v5365 = vadd.f32 %v4765, %v5345
      %v5366 = vadd.f32 %v4768, %v5348
      %v5367 = vld [vmem:[%s5 + $0x2] sm:$0x1]
      %v5368 = vld [vmem:[%s5 + $0x3] sm:$0x1]
      %v5369 = vlaneseq
      %v5370 = vshrl.u32 %v5369, 7
      %v5371 = vsub.s32 0, %v5370
      %v5372 = vrot.slane %v5367, %v5371
      %v5373 = vmul.f32 %v5351, %v5372
      %v5374 = vmul.f32 %v5352, %v5372
      %v5375 = vmul.f32 %v5353, %v5372
      %v5376 = vmul.f32 %v5354, %v5372
      %v5377 = vmul.f32 %v5355, %v5372
      %v5378 = vmul.f32 %v5356, %v5372
      %v5379 = vmul.f32 %v5357, %v5372
      %v5380 = vmul.f32 %v5358, %v5372
      %v5381 = vmul.f32 %v5359, %v5372
      %v5382 = vmul.f32 %v5360, %v5372
      %v5383 = vmul.f32 %v5361, %v5372
      %v5384 = vmul.f32 %v5362, %v5372
      %v5385 = vmul.f32 %v5363, %v5372
      %v5386 = vmul.f32 %v5364, %v5372
      %v5387 = vmul.f32 %v5365, %v5372
      %v5388 = vmul.f32 %v5366, %v5372
      %v5389 = vlaneseq
      %v5390 = vshrl.u32 %v5389, 7
      %v5391 = vsub.s32 0, %v5390
      %v5392 = vrot.slane %v5368, %v5391
      %v5393 = vadd.f32 %v5373, %v5392
      %v5394 = vadd.f32 %v5374, %v5392
      %v5395 = vadd.f32 %v5375, %v5392
      %v5396 = vadd.f32 %v5376, %v5392
      %v5397 = vadd.f32 %v5377, %v5392
      %v5398 = vadd.f32 %v5378, %v5392
      %v5399 = vadd.f32 %v5379, %v5392
      %v5400 = vadd.f32 %v5380, %v5392
      %v5401 = vadd.f32 %v5381, %v5392
      %v5402 = vadd.f32 %v5382, %v5392
      %v5403 = vadd.f32 %v5383, %v5392
      %v5404 = vadd.f32 %v5384, %v5392
      %v5405 = vadd.f32 %v5385, %v5392
      %v5406 = vadd.f32 %v5386, %v5392
      %v5407 = vadd.f32 %v5387, %v5392
      %v5408 = vadd.f32 %v5388, %v5392
      %vm5409 = vcmp.ge.f32.partialorder %v5393, 0.0
      %vm5410 = vcmp.ge.f32.partialorder %v5394, 0.0
      %vm5411 = vcmp.ge.f32.partialorder %v5395, 0.0
      %vm5412 = vcmp.ge.f32.partialorder %v5396, 0.0
      %vm5413 = vcmp.ge.f32.partialorder %v5397, 0.0
      %vm5414 = vcmp.ge.f32.partialorder %v5398, 0.0
      %vm5415 = vcmp.ge.f32.partialorder %v5399, 0.0
      %vm5416 = vcmp.ge.f32.partialorder %v5400, 0.0
      %vm5417 = vcmp.ge.f32.partialorder %v5401, 0.0
      %vm5418 = vcmp.ge.f32.partialorder %v5402, 0.0
      %vm5419 = vcmp.ge.f32.partialorder %v5403, 0.0
      %vm5420 = vcmp.ge.f32.partialorder %v5404, 0.0
      %vm5421 = vcmp.ge.f32.partialorder %v5405, 0.0
      %vm5422 = vcmp.ge.f32.partialorder %v5406, 0.0
      %vm5423 = vcmp.ge.f32.partialorder %v5407, 0.0
      %vm5424 = vcmp.ge.f32.partialorder %v5408, 0.0
      %v5425 = vmul.f32 %v5393, 0.01
      %v5426 = vmul.f32 %v5394, 0.01
      %v5427 = vmul.f32 %v5395, 0.01
      %v5428 = vmul.f32 %v5396, 0.01
      %v5429 = vmul.f32 %v5397, 0.01
      %v5430 = vmul.f32 %v5398, 0.01
      %v5431 = vmul.f32 %v5399, 0.01
      %v5432 = vmul.f32 %v5400, 0.01
      %v5433 = vmul.f32 %v5401, 0.01
      %v5434 = vmul.f32 %v5402, 0.01
      %v5435 = vmul.f32 %v5403, 0.01
      %v5436 = vmul.f32 %v5404, 0.01
      %v5437 = vmul.f32 %v5405, 0.01
      %v5438 = vmul.f32 %v5406, 0.01
      %v5439 = vmul.f32 %v5407, 0.01
      %v5440 = vmul.f32 %v5408, 0.01
      %v5441 = vsel %vm5409, %v5393, %v5425
      %v5442 = vsel %vm5410, %v5394, %v5426
      %v5443 = vsel %vm5411, %v5395, %v5427
      %v5444 = vsel %vm5412, %v5396, %v5428
      %v5445 = vsel %vm5413, %v5397, %v5429
      %v5446 = vsel %vm5414, %v5398, %v5430
      %v5447 = vsel %vm5415, %v5399, %v5431
      %v5448 = vsel %vm5416, %v5400, %v5432
      %v5449 = vsel %vm5417, %v5401, %v5433
      %v5450 = vsel %vm5418, %v5402, %v5434
      %v5451 = vsel %vm5419, %v5403, %v5435
      %v5452 = vsel %vm5420, %v5404, %v5436
      %v5453 = vsel %vm5421, %v5405, %v5437
      %v5454 = vsel %vm5422, %v5406, %v5438
      %v5455 = vsel %vm5423, %v5407, %v5439
      %v5456 = vsel %vm5424, %v5408, %v5440
      %v5457 = vld [vmem:[%s379] sm:$0xff]
      %v5458 = vld [vmem:[%s379 + $0x8] sm:$0xff]
      %v5459 = vld [vmem:[%s379 + $0x10] sm:$0xff]
      %v5460 = vld [vmem:[%s379 + $0x18] sm:$0xff]
      %v5461 = vld [vmem:[%s379 + $0x20] sm:$0xff]
      %v5462 = vld [vmem:[%s379 + $0x28] sm:$0xff]
      %v5463 = vld [vmem:[%s379 + $0x30] sm:$0xff]
      %v5464 = vld [vmem:[%s379 + $0x38] sm:$0xff]
      %v5465 = vld [vmem:[%s379 + $0x40] sm:$0xff]
      %v5466 = vld [vmem:[%s379 + $0x48] sm:$0xff]
      %v5467 = vld [vmem:[%s379 + $0x50] sm:$0xff]
      %v5468 = vld [vmem:[%s379 + $0x58] sm:$0xff]
      %v5469 = vld [vmem:[%s379 + $0x60] sm:$0xff]
      %v5470 = vld [vmem:[%s379 + $0x68] sm:$0xff]
      %v5471 = vld [vmem:[%s379 + $0x70] sm:$0xff]
      %v5472 = vld [vmem:[%s379 + $0x78] sm:$0xff]
      %v5473 = vadd.f32 %v5457, %v5441
      %v5474 = vadd.f32 %v5458, %v5442
      %v5475 = vadd.f32 %v5459, %v5443
      %v5476 = vadd.f32 %v5460, %v5444
      %v5477 = vadd.f32 %v5461, %v5445
      %v5478 = vadd.f32 %v5462, %v5446
      %v5479 = vadd.f32 %v5463, %v5447
      %v5480 = vadd.f32 %v5464, %v5448
      %v5481 = vadd.f32 %v5465, %v5449
      %v5482 = vadd.f32 %v5466, %v5450
      %v5483 = vadd.f32 %v5467, %v5451
      %v5484 = vadd.f32 %v5468, %v5452
      %v5485 = vadd.f32 %v5469, %v5453
      %v5486 = vadd.f32 %v5470, %v5454
      %v5487 = vadd.f32 %v5471, %v5455
      %v5488 = vadd.f32 %v5472, %v5456
      %5489 = vst.msk [vmem:[%s428] sm:$0xff] %vm1506, %v5473
      %5490 = vst.msk [vmem:[%s428 + $0x8] sm:$0xff] %vm1506, %v5474
      %5491 = vst.msk [vmem:[%s428 + $0x10] sm:$0xff] %vm1506, %v5475
      %5492 = vst.msk [vmem:[%s428 + $0x18] sm:$0xff] %vm1506, %v5476
      %5493 = vst.msk [vmem:[%s428 + $0x20] sm:$0xff] %vm1506, %v5477
      %5494 = vst.msk [vmem:[%s428 + $0x28] sm:$0xff] %vm1506, %v5478
      %5495 = vst.msk [vmem:[%s428 + $0x30] sm:$0xff] %vm1506, %v5479
      %5496 = vst.msk [vmem:[%s428 + $0x38] sm:$0xff] %vm1506, %v5480
      %5497 = vst.msk [vmem:[%s428 + $0x40] sm:$0xff] %vm1506, %v5481
      %5498 = vst.msk [vmem:[%s428 + $0x48] sm:$0xff] %vm1506, %v5482
      %5499 = vst.msk [vmem:[%s428 + $0x50] sm:$0xff] %vm1506, %v5483
      %5500 = vst.msk [vmem:[%s428 + $0x58] sm:$0xff] %vm1506, %v5484
      %5501 = vst.msk [vmem:[%s428 + $0x60] sm:$0xff] %vm1506, %v5485
      %5502 = vst.msk [vmem:[%s428 + $0x68] sm:$0xff] %vm1506, %v5486
      %5503 = vst.msk [vmem:[%s428 + $0x70] sm:$0xff] %vm1506, %v5487
      %5504 = vst.msk [vmem:[%s428 + $0x78] sm:$0xff] %vm1506, %v5488
      %s5505 = smul.u32 8, %s22
      %p5506 = scmp.lt.s32.totalorder %s21, 1
      %s5507 = scalar_select %p5506, %s21, 1
      %p5508 = scmp.lt.s32.totalorder %s5505, 15
      %s5509 = scalar_select %p5508, %s5505, 15
      %s5510 = smul.addr %s5509, 2
      %s5511 = smul.addr %s5507, 32
      %s5512 = sadd.s32 %s5510, %s5511
      %s5513 = smul.addr %s5512, 8
      %s5514 = scalar_lea.vmem %s6, %s5513
      // Predicated region
      $region69: #{tpu_custom_call.1} parent=43 // pred_check
        %p5515 = pneg %p212
      $region70: #{tpu_custom_call.1} parent=43 // pred_check_branch
        %5517 = sbr.rel (%p5515) target = $region72
      $region71: #{tpu_custom_call.1} parent=43 // pred_region
        %s5518 = smul.u32 8, %s22
      $region72: #{tpu_custom_call.1} parent=43 // pred_fallthru
        _
    $region44: #{tpu_custom_call.1} parent=5 // pred_fallthru
      _
    %p5519 = scmp.le.s32.totalorder 2, %s12
    // Predicated region
    $region73: #{tpu_custom_call.1} parent=5 // pred_check
      %p5520 = pneg %p5519
    $region74: #{tpu_custom_call.1} parent=5 // pred_check_branch
      %5522 = sbr.rel (%p5520) target = $region76
    $region75: #{tpu_custom_call.1} parent=5 // pred_region
      %s5523 = ssub.s32 %s12, 2
      // Predicated region
      $region77: #{tpu_custom_call.1} parent=75 // pred_check
        %p5524 = pneg %p218
      $region78: #{tpu_custom_call.1} parent=75 // pred_check_branch
        %5526 = sbr.rel (%p5524) target = $region80
      $region79: #{tpu_custom_call.1} parent=75 // pred_region
        %s5527 = smul.u32 8, %s24
        %p5528 = scmp.lt.s32.totalorder %s23, 1
        %s5529 = scalar_select %p5528, %s23, 1
        %p5530 = scmp.lt.s32.totalorder %s5527, 15
        %s5531 = scalar_select %p5530, %s5527, 15
        %s5532 = smul.addr %s5531, 2
        %s5533 = smul.addr %s5529, 32
        %s5534 = sadd.s32 %s5532, %s5533
        %s5535 = smul.addr %s5534, 8
        %s5536 = scalar_lea.vmem %s6, %s5535
      $region80: #{tpu_custom_call.1} parent=75 // pred_fallthru
        _
    $region76: #{tpu_custom_call.1} parent=5 // pred_fallthru
      _
  $region6: #{tpu_custom_call.1} parent=0 // loop_footer
    %s16 = sadd.s32 1, %s12
  $region7: #{tpu_custom_call.1} parent=0 // loop_footer_branch
    %11 = sbr.rel target = $region3
  $region8: #{tpu_custom_call.1} parent=0 // loop_exit
    _

</llo_original>
